<compile_context>
chip_gen: v7x
topology: tpu7x:2x2x1
jax: 0.10.0
libtpu: 0.0.40
codegen_flags: <defaults>
</compile_context>

<pallas_src>
import jax
import jax.numpy as jnp
from jax import lax
from jax.experimental import pallas as pl
from jax.experimental.pallas import tpu as pltpu


def _round_up(x, m):
    return ((x + m - 1) // m) * m


def _pick_tile(dim, cap, unit):
    """Largest tile <= cap that divides `dim` (dim must be a multiple of unit)."""
    assert dim % unit == 0, (dim, unit)
    t = min(cap, dim)
    while dim % t:
        t -= unit
    return t


def _choose_time_chunk(T, cap):
    """Pick a time-chunk length.  Prefer a divisor of T (no padded timesteps);
    otherwise pick a near-cap chunk that minimises time padding."""
    cap = max(1, min(cap, T))
    best = max(c for c in range(1, cap + 1) if T % c == 0)
    if 2 * best >= cap:
        return best, T
    n_chunks = -(-T // cap)
    tc = -(-T // n_chunks)
    return tc, tc * n_chunks


def _default_act_dtype():
    """tanh dtype: bf16 on v6e/v7x (bf16 EUP), f32 elsewhere (v5e has no bf16 EUP)."""
    try:
        kind = jax.devices()[0].device_kind.lower()
    except Exception:  # pragma: no cover - defensive
        return jnp.float32
    if ("v6" in kind) or ("v7" in kind) or ("7x" in kind):
        return jnp.bfloat16
    return jnp.float32


# ----------------------------------------------------------------------------
# Tiled matmul + bias:  O = X @ W + b   (f32 MXU accumulation, K-tiled).
# Used for (a) the layer-0 input projection and (b) the final FC.
# ----------------------------------------------------------------------------
def matmul_bias_kernel(x_ref, w_ref, b_ref, o_ref, acc_ref):
    kk = pl.program_id(2)

    @pl.when(kk == 0)
    def _():
        acc_ref[...] = jnp.zeros_like(acc_ref)

    acc_ref[...] += jnp.dot(x_ref[...], w_ref[...],
                            preferred_element_type=jnp.float32)

    @pl.when(kk == pl.num_programs(2) - 1)
    def _():
        o_ref[...] = (acc_ref[...] + b_ref[...]).astype(o_ref.dtype)


def matmul_bias(x2d, wT, b, out_dtype, tm_cap=256, tn_cap=512, tk_cap=512):
    """x2d: (M, K), wT: (K, N), b: (1, N) f32 -> (M, N) in out_dtype.

    tm/tn caps kept at 256/512 so the double-buffered blocks + f32 accumulator
    fit the scoped-VMEM default on every generation (incl. v7x's 64 MiB);
    the K grid axis keeps resident block size independent of Ep/Hp.
    """
    M, K = x2d.shape
    K2, N = wT.shape
    assert K == K2
    tm = _pick_tile(M, tm_cap, 16)      # sublane-friendly (bf16-safe) row tile
    tn = _pick_tile(N, tn_cap, 128)     # lane-dense output tile
    tk = _pick_tile(K, tk_cap, 128)
    return pl.pallas_call(
        matmul_bias_kernel,
        out_shape=jax.ShapeDtypeStruct((M, N), out_dtype),
        grid_spec=pltpu.PrefetchScalarGridSpec(
            num_scalar_prefetch=0,
            grid=(M // tm, N // tn, K // tk),
            in_specs=[
                pl.BlockSpec((tm, tk), lambda i, j, k: (i, k)),
                pl.BlockSpec((tk, tn), lambda i, j, k: (k, j)),
                pl.BlockSpec((1, tn), lambda i, j, k: (0, j)),
            ],
            out_specs=pl.BlockSpec((tm, tn), lambda i, j, k: (i, j)),
            scratch_shapes=[pltpu.VMEM((tm, tn), jnp.float32)],
        ),
        compiler_params=pltpu.CompilerParams(
            dimension_semantics=("parallel", "parallel", "arbitrary")),
    )(x2d, wT, b)


# ----------------------------------------------------------------------------
# Recurrence kernel: grid = (batch_blocks, time_chunks).
#   h_t = tanh(xp_t + h_{t-1} @ W_hh^T),  xp precomputed (input proj + bias).
# Hidden state lives in a per-batch-block slice of a persistent VMEM scratch.
# Optionally fuses the NEXT layer's input projection into the chunk epilogue
# so the raw hidden slab never leaves VMEM between layers.
# ----------------------------------------------------------------------------
def _make_rnn_kernel(fuse_next, act_dtype, unroll):
    def kernel(xp_ref, whhT_ref, h0_ref, *rest):
        if fuse_next:
            wnext_ref, bnext_ref, out_ref, h_scr = rest
        else:
            out_ref, h_scr = rest

        bblk = pl.program_id(0)

        @pl.when(pl.program_id(1) == 0)
        def _():
            h_scr[bblk] = h0_ref[...]          # (sb, Hp) bf16

        whhT = whhT_ref[...]                    # recurrent weights, once/chunk
        tc = xp_ref.shape[0]                    # static chunk length

        def step(t, h_prev):                    # h_prev: bf16 (sb, Hp)
            pre = xp_ref[t].astype(jnp.float32) + jnp.dot(
                h_prev, whhT, preferred_element_type=jnp.float32)
            h_new = jnp.tanh(pre.astype(act_dtype)).astype(jnp.bfloat16)
            out_ref[t] = h_new                  # raw h; maybe overwritten below
            return h_new                        # bf16 carry (no extra cast)

        h_last = lax.fori_loop(0, tc, step, h_scr[bblk],
                               unroll=min(unroll, tc))
        h_scr[bblk] = h_last                    # carry into the next chunk

        if fuse_next:
            # Next layer's input projection on the VMEM-resident chunk:
            #   xp_next = h_chunk @ W_ih_next^T + (b_ih + b_hh)_next
            tc_, sb, kn = out_ref.shape
            hp = whhT_ref.shape[0]              # == kn for stacked nn.RNN
            h2 = out_ref[...].reshape(tc_ * sb, hp)
            proj = jnp.dot(h2, wnext_ref[...],
                           preferred_element_type=jnp.float32)
            proj = proj + bnext_ref[...]
            out_ref[...] = proj.astype(out_ref.dtype).reshape(tc_, sb, kn)

    return kernel


def rnn_layer(xp, whhT, h0, wnext, bnext, *, time_chunk, act_dtype,
              unroll=8, batch_blocks=1):
    """xp: (Tpad, Bp, Hp) bf16, whhT: (Hp, Hp) bf16, h0: (Bp, Hp) bf16.

    Returns (Tpad, Bp, Hp): raw hidden states if wnext is None, else the
    next layer's pre-computed input projection (fused epilogue).
    """
    Tpad, Bp, Hp = xp.shape
    nb = batch_blocks
    assert Bp % nb == 0
    sb = Bp // nb
    assert Tpad % time_chunk == 0
    nchunks = Tpad // time_chunk
    fuse = wnext is not None

    in_specs = [
        pl.BlockSpec((time_chunk, sb, Hp), lambda b, c: (c, b, 0)),   # xp
        pl.BlockSpec((Hp, Hp), lambda b, c: (0, 0)),                  # W_hh^T
        pl.BlockSpec((sb, Hp), lambda b, c: (b, 0)),                  # h0
    ]
    args = [xp, whhT, h0]
    out_n = Hp
    if fuse:
        kn = wnext.shape[1]
        assert kn == Hp, "stacked nn.RNN layers share hidden_size"
        in_specs += [
            pl.BlockSpec((Hp, kn), lambda b, c: (0, 0)),              # W_ih^T (next)
            pl.BlockSpec((1, kn), lambda b, c: (0, 0)),               # bias   (next)
        ]
        args += [wnext, bnext]
        out_n = kn

    # TODO(synk): grid-invariant whhT/h0/wnext could use pipeline_mode=
    # pl.Buffered(1) to halve their VMEM residency on v7x for large Hp.
    return pl.pallas_call(
        _make_rnn_kernel(fuse, act_dtype, unroll),
        out_shape=jax.ShapeDtypeStruct((Tpad, Bp, out_n), xp.dtype),
        grid_spec=pltpu.PrefetchScalarGridSpec(
            num_scalar_prefetch=0,
            grid=(nb, nchunks),
            in_specs=in_specs,
            out_specs=pl.BlockSpec((time_chunk, sb, out_n),
                                   lambda b, c: (c, b, 0)),
            scratch_shapes=[pltpu.VMEM((nb, sb, Hp), jnp.bfloat16)],
        ),
        compiler_params=pltpu.CompilerParams(
            dimension_semantics=("parallel", "arbitrary")),
    )(*args)


# ----------------------------------------------------------------------------
# One-time parameter prep: transpose, zero-pad to (x16, x128), cast to bf16.
# Padded rows/cols and biases are zero, so padded channels stay exactly 0.
# ----------------------------------------------------------------------------
def prepare_params(params, compute_dtype=jnp.bfloat16, act_dtype=None):
    E = params["embedding"].shape[1]
    H = params["rnn"][0]["w_hh"].shape[0]
    V = params["fc_w"].shape[0]
    Ep, Hp, Vp = _round_up(E, 128), _round_up(H, 128), _round_up(V, 128)

    prepared = {
        "compute_dtype": compute_dtype,
        "act_dtype": act_dtype if act_dtype is not None else _default_act_dtype(),
        "dims": dict(E=E, H=H, V=V, Ep=Ep, Hp=Hp, Vp=Vp),
        "embedding": params["embedding"],
        "rnn": [],
    }
    for li, layer in enumerate(params["rnn"]):
        in_dim = layer["w_ih"].shape[1]
        in_p = Ep if li == 0 else Hp
        w_ihT = jnp.zeros((in_p, Hp), compute_dtype)
        w_ihT = w_ihT.at[:in_dim, :H].set(layer["w_ih"].T.astype(compute_dtype))
        w_hhT = jnp.zeros((Hp, Hp), compute_dtype)
        w_hhT = w_hhT.at[:H, :H].set(layer["w_hh"].T.astype(compute_dtype))
        b = jnp.zeros((1, Hp), jnp.float32)
        b = b.at[0, :H].set(layer["b_ih"] + layer["b_hh"])   # combined bias
        prepared["rnn"].append(dict(w_ihT=w_ihT, w_hhT=w_hhT, b=b))

    fc_wT = jnp.zeros((Hp, Vp), compute_dtype)
    fc_wT = fc_wT.at[:H, :V].set(params["fc_w"].T.astype(compute_dtype))
    fc_b = jnp.zeros((1, Vp), jnp.float32).at[0, :V].set(params["fc_b"])
    prepared["fc_wT"] = fc_wT
    prepared["fc_b"] = fc_b
    return prepared


# ----------------------------------------------------------------------------
# Full model forward (embedding gather is glue; all matmuls + the recurrence
# run in Pallas kernels).
# ----------------------------------------------------------------------------
def rnn_model_forward(prepared, tokens, hidden=None, *, time_chunk=64):
    B, T = tokens.shape
    d = prepared["dims"]
    cdt = prepared["compute_dtype"]
    act_dtype = prepared["act_dtype"]
    Bp = _round_up(B, 16)
    Tc, Tpad = _choose_time_chunk(T, time_chunk)
    nb = 2 if Bp >= 32 else 1           # batch split across TCs (v7x) only if >=16 rows/block

    # Embedding gather, time-major layout, zero-pad to TPU-friendly shapes.
    emb = jnp.take(prepared["embedding"], tokens, axis=0)       # (B, T, E)
    x = jnp.transpose(emb, (1, 0, 2))                           # (T, B, E)
    x = jnp.pad(x, ((0, Tpad - T), (0, Bp - B), (0, d["Ep"] - d["E"])))
    x = x.astype(cdt)                                           # (Tpad, Bp, Ep)

    # Layer-0 input projection, hoisted out of the recurrence (one big GEMM).
    layer0 = prepared["rnn"][0]
    xp = matmul_bias(x.reshape(Tpad * Bp, d["Ep"]), layer0["w_ihT"], layer0["b"],
                     out_dtype=cdt).reshape(Tpad, Bp, d["Hp"])

    nlayers = len(prepared["rnn"])
    h_seq = None
    for li in range(nlayers):
        layer = prepared["rnn"][li]
        h0 = jnp.zeros((Bp, d["Hp"]), jnp.bfloat16)
        if hidden is not None:
            h0 = h0.at[:B, :d["H"]].set(hidden[li].astype(jnp.bfloat16))
        if li + 1 < nlayers:
            nxt = prepared["rnn"][li + 1]
            # Fused: this layer's recurrence emits the NEXT layer's xp directly.
            xp = rnn_layer(xp, layer["w_hhT"], h0, nxt["w_ihT"], nxt["b"],
                           time_chunk=Tc, act_dtype=act_dtype, batch_blocks=nb)
        else:
            h_seq = rnn_layer(xp, layer["w_hhT"], h0, None, None,
                              time_chunk=Tc, act_dtype=act_dtype,
                              batch_blocks=nb)                  # (Tpad, Bp, Hp)

    # Final FC on the dense padded slab (f32 logits for the downstream loss),
    # then slice back to the logical shape.
    logits = matmul_bias(h_seq.reshape(Tpad * Bp, d["Hp"]),
                         prepared["fc_wT"], prepared["fc_b"],
                         out_dtype=jnp.float32)                 # (Tpad*Bp, Vp)
    logits = logits.reshape(Tpad, Bp, d["Vp"])[:T, :B, :d["V"]]
    return jnp.transpose(logits, (1, 0, 2))                     # (B, T, V)


# ----------------------------------------------------------------------------
# Pure-JAX f32 reference (mirrors torch semantics) for a correctness check.
# ----------------------------------------------------------------------------
def rnn_model_reference(params, tokens):
    B, T = tokens.shape
    emb = jnp.take(params["embedding"], tokens, axis=0)         # (B, T, E)
    x = emb.astype(jnp.float32)
    for layer in params["rnn"]:
        H = layer["w_hh"].shape[0]
        h = jnp.zeros((B, H), jnp.float32)
        outs = []
        for t in range(T):
            h = jnp.tanh(x[:, t, :] @ layer["w_ih"].T + layer["b_ih"]
                         + h @ layer["w_hh"].T + layer["b_hh"])
            outs.append(h)
        x = jnp.stack(outs, axis=1)                             # (B, T, H)
    return x @ params["fc_w"].T + params["fc_b"]                # (B, T, V)


def init_params(key, vocab_size, hidden_size, embed_size, num_layers):
    keys = jax.random.split(key, 3 + 4 * num_layers)
    scale = 1.0 / jnp.sqrt(hidden_size)
    params = {
        "embedding": jax.random.normal(keys[0], (vocab_size, embed_size),
                                       jnp.float32),
        "fc_w": jax.random.uniform(keys[1], (vocab_size, hidden_size),
                                   jnp.float32, -scale, scale),
        "fc_b": jax.random.uniform(keys[2], (vocab_size,), jnp.float32,
                                   -scale, scale),
        "rnn": [],
    }
    for l in range(num_layers):
        in_size = embed_size if l == 0 else hidden_size
        k0, k1, k2, k3 = keys[3 + 4 * l: 3 + 4 * (l + 1)]
        params["rnn"].append({
            "w_ih": jax.random.uniform(k0, (hidden_size, in_size),
                                       jnp.float32, -scale, scale),
            "w_hh": jax.random.uniform(k1, (hidden_size, hidden_size),
                                       jnp.float32, -scale, scale),
            "b_ih": jax.random.uniform(k2, (hidden_size,), jnp.float32,
                                       -scale, scale),
            "b_hh": jax.random.uniform(k3, (hidden_size,), jnp.float32,
                                       -scale, scale),
        })
    return params


if __name__ == "__main__":
    vocab_size, hidden_size, embed_size, num_layers = 32, 32, 16, 2
    batch, seq = 2, 8

    key = jax.random.PRNGKey(0)
    pkey, tkey = jax.random.split(key)
    params = init_params(pkey, vocab_size, hidden_size, embed_size, num_layers)
    tokens = jax.random.randint(tkey, (batch, seq), 0, vocab_size, jnp.int32)

    prepared = prepare_params(params)     # pre-transposed / padded / bf16, once
    fwd = jax.jit(lambda toks: rnn_model_forward(prepared, toks))

    logits = jax.block_until_ready(fwd(tokens))
    assert logits.shape == (batch, seq, vocab_size)

    ref = rnn_model_reference(params, tokens)
    # bf16 MXU path with f32 accumulation => loose-but-safe tolerance.
    assert jnp.allclose(logits, ref, atol=5e-2, rtol=5e-2), "mismatch vs reference"

    print("KERNEL_OK")
</pallas_src>

<mosaic_0001>
module attributes {stable_mosaic.version = 11 : i64} {
  func.func @matmul_bias_kernel(%arg0: i32, %arg1: i32, %arg2: i32, %arg3: memref<128x128xbf16, #tpu.memory_space<vmem>>, %arg4: memref<128x128xbf16, #tpu.memory_space<vmem>>, %arg5: memref<1x128xf32, #tpu.memory_space<vmem>>, %arg6: memref<128x128xbf16, #tpu.memory_space<vmem>>, %arg7: memref<128x128xf32, #tpu.memory_space<vmem>>) attributes {dimension_semantics = [#tpu.dimension_semantics<parallel>, #tpu.dimension_semantics<parallel>, #tpu.dimension_semantics<arbitrary>], iteration_bounds = array<i64: 1, 1, 1>, scalar_prefetch = 0 : i64, scratch_operands = 1 : i64, tpu.core_type = #tpu.core_type<tc>, window_params = [{transform_indices = @transform_0, window_bounds = array<i64: 128, 128>}, {transform_indices = @transform_1, window_bounds = array<i64: 128, 128>}, {transform_indices = @transform_2, window_bounds = array<i64: 1, 128>}, {transform_indices = @transform_3, window_bounds = array<i64: 128, 128>}]} {
    %c0_i32 = arith.constant 0 : i32
    %0 = arith.cmpi eq, %arg2, %c0_i32 : i32
    %1 = arith.extui %0 : i1 to i32
    %c0_i32_0 = arith.constant 0 : i32
    %2 = arith.cmpi ne, %1, %c0_i32_0 : i32
    scf.if %2 {
      %cst_10 = arith.constant 0.000000e+00 : f32
      %12 = vector.broadcast %cst_10 : f32 to vector<128x128xf32>
      %c0_11 = arith.constant 0 : index
      %c0_12 = arith.constant 0 : index
      %13 = vector.load %arg7[%c0_11, %c0_12] : memref<128x128xf32, #tpu.memory_space<vmem>>, vector<128x128xf32>
      tpu.vector_store %arg7[%c0_11, %c0_12], %12 {strides = array<i32>} : memref<128x128xf32, #tpu.memory_space<vmem>>, vector<128x128xf32>,
    } else {
    }
    %c0 = arith.constant 0 : index
    %c0_1 = arith.constant 0 : index
    %3 = vector.load %arg7[%c0, %c0_1] : memref<128x128xf32, #tpu.memory_space<vmem>>, vector<128x128xf32>
    %c0_2 = arith.constant 0 : index
    %c0_3 = arith.constant 0 : index
    %4 = vector.load %arg3[%c0_2, %c0_3] : memref<128x128xbf16, #tpu.memory_space<vmem>>, vector<128x128xbf16>
    %c0_4 = arith.constant 0 : index
    %c0_5 = arith.constant 0 : index
    %5 = vector.load %arg4[%c0_4, %c0_5] : memref<128x128xbf16, #tpu.memory_space<vmem>>, vector<128x128xbf16>
    %cst = arith.constant dense<0.000000e+00> : vector<128x128xf32>
    %6 = tpu.matmul %4, %5, %cst {dimension_numbers = #tpu.dot_dimension_numbers<[1], [0], [0], [1], [0, 0, 1, 1], [], []>} : vector<128x128xbf16>, vector<128x128xbf16>, vector<128x128xf32> -> vector<128x128xf32>
    %7 = arith.addf %3, %6 : vector<128x128xf32>
    %c0_6 = arith.constant 0 : index
    %c0_7 = arith.constant 0 : index
    %8 = vector.load %arg7[%c0_6, %c0_7] : memref<128x128xf32, #tpu.memory_space<vmem>>, vector<128x128xf32>
    tpu.vector_store %arg7[%c0_6, %c0_7], %7 {strides = array<i32>} : memref<128x128xf32, #tpu.memory_space<vmem>>, vector<128x128xf32>,
    %c0_i32_8 = arith.constant 0 : i32
    %9 = arith.cmpi eq, %arg2, %c0_i32_8 : i32
    %10 = arith.extui %9 : i1 to i32
    %c0_i32_9 = arith.constant 0 : i32
    %11 = arith.cmpi ne, %10, %c0_i32_9 : i32
    scf.if %11 {
      %c0_10 = arith.constant 0 : index
      %c0_11 = arith.constant 0 : index
      %12 = vector.load %arg7[%c0_10, %c0_11] : memref<128x128xf32, #tpu.memory_space<vmem>>, vector<128x128xf32>
      %c0_12 = arith.constant 0 : index
      %c0_13 = arith.constant 0 : index
      %13 = vector.load %arg5[%c0_12, %c0_13] : memref<1x128xf32, #tpu.memory_space<vmem>>, vector<1x128xf32>
      %14 = vector.broadcast %13 : vector<1x128xf32> to vector<128x128xf32>
      %15 = arith.addf %12, %14 : vector<128x128xf32>
      %16 = arith.truncf %15 : vector<128x128xf32> to vector<128x128xbf16>
      %c0_14 = arith.constant 0 : index
      %c0_15 = arith.constant 0 : index
      %17 = vector.load %arg6[%c0_14, %c0_15] : memref<128x128xbf16, #tpu.memory_space<vmem>>, vector<128x128xbf16>
      tpu.vector_store %arg6[%c0_14, %c0_15], %16 {strides = array<i32>} : memref<128x128xbf16, #tpu.memory_space<vmem>>, vector<128x128xbf16>,
    } else {
    }
    return
  }
  func.func @transform_0(%arg0: i32, %arg1: i32, %arg2: i32) -> (i32, i32) {
    %c0_i32 = arith.constant 0 : i32
    return %arg0, %arg2 : i32, i32
  }
  func.func @transform_1(%arg0: i32, %arg1: i32, %arg2: i32) -> (i32, i32) {
    %c0_i32 = arith.constant 0 : i32
    return %arg2, %arg1 : i32, i32
  }
  func.func @transform_2(%arg0: i32, %arg1: i32, %arg2: i32) -> (i32, i32) {
    %c0_i32 = arith.constant 0 : i32
    %c0_i32_0 = arith.constant 0 : i32
    return %c0_i32, %arg1 : i32, i32
  }
  func.func @transform_3(%arg0: i32, %arg1: i32, %arg2: i32) -> (i32, i32) {
    %c0_i32 = arith.constant 0 : i32
    return %arg0, %arg1 : i32, i32
  }
}

module attributes {stable_mosaic.version = 11 : i64} {
  func.func @kernel(%arg0: i32, %arg1: i32, %arg2: memref<8x16x128xbf16, #tpu.memory_space<vmem>>, %arg3: memref<128x128xbf16, #tpu.memory_space<vmem>>, %arg4: memref<16x128xbf16, #tpu.memory_space<vmem>>, %arg5: memref<8x16x128xbf16, #tpu.memory_space<vmem>>, %arg6: memref<1x16x128xbf16, #tpu.memory_space<vmem>>) attributes {dimension_semantics = [#tpu.dimension_semantics<parallel>, #tpu.dimension_semantics<arbitrary>], iteration_bounds = array<i64: 1, 1>, scalar_prefetch = 0 : i64, scratch_operands = 1 : i64, tpu.core_type = #tpu.core_type<tc>, window_params = [{transform_indices = @transform_0, window_bounds = array<i64: 8, 16, 128>}, {pipeline_mode = #tpu.pipeline_mode<synchronous>, transform_indices = @transform_1, window_bounds = array<i64: 128, 128>}, {transform_indices = @transform_2, window_bounds = array<i64: 16, 128>}, {transform_indices = @transform_3, window_bounds = array<i64: 8, 16, 128>}]} {
    %c0_i32 = arith.constant 0 : i32
    %0 = arith.cmpi eq, %arg1, %c0_i32 : i32
    %1 = arith.extui %0 : i1 to i32
    %c0_i32_0 = arith.constant 0 : i32
    %2 = arith.cmpi ne, %1, %c0_i32_0 : i32
    scf.if %2 {
      %c0_46 = arith.constant 0 : index
      %c0_47 = arith.constant 0 : index
      %107 = vector.load %arg4[%c0_46, %c0_47] : memref<16x128xbf16, #tpu.memory_space<vmem>>, vector<16x128xbf16>
      %108 = arith.index_cast %arg0 : i32 to index
      %c0_48 = arith.constant 0 : index
      %c0_49 = arith.constant 0 : index
      %109 = vector.load %arg6[%108, %c0_48, %c0_49] : memref<1x16x128xbf16, #tpu.memory_space<vmem>>, vector<1x16x128xbf16>
      %110 = vector.shape_cast %109 : vector<1x16x128xbf16> to vector<16x128xbf16>
      %111 = vector.shape_cast %107 : vector<16x128xbf16> to vector<1x16x128xbf16>
      tpu.vector_store %arg6[%108, %c0_48, %c0_49], %111 {strides = array<i32>} : memref<1x16x128xbf16, #tpu.memory_space<vmem>>, vector<1x16x128xbf16>,
    } else {
    }
    %c0 = arith.constant 0 : index
    %c0_1 = arith.constant 0 : index
    %3 = vector.load %arg3[%c0, %c0_1] : memref<128x128xbf16, #tpu.memory_space<vmem>>, vector<128x128xbf16>
    %4 = arith.index_cast %arg0 : i32 to index
    %c0_2 = arith.constant 0 : index
    %c0_3 = arith.constant 0 : index
    %5 = vector.load %arg6[%4, %c0_2, %c0_3] : memref<1x16x128xbf16, #tpu.memory_space<vmem>>, vector<1x16x128xbf16>
    %6 = vector.shape_cast %5 : vector<1x16x128xbf16> to vector<16x128xbf16>
    %c0_i32_4 = arith.constant 0 : i32
    %7 = arith.index_cast %c0_i32_4 : i32 to index
    %c0_5 = arith.constant 0 : index
    %c0_6 = arith.constant 0 : index
    %8 = vector.load %arg2[%7, %c0_5, %c0_6] : memref<8x16x128xbf16, #tpu.memory_space<vmem>>, vector<1x16x128xbf16>
    %9 = vector.shape_cast %8 : vector<1x16x128xbf16> to vector<16x128xbf16>
    %10 = arith.extf %9 : vector<16x128xbf16> to vector<16x128xf32>
    %cst = arith.constant dense<0.000000e+00> : vector<16x128xf32>
    %11 = tpu.matmul %6, %3, %cst {dimension_numbers = #tpu.dot_dimension_numbers<[1], [0], [0], [1], [0, 0, 1, 1], [], []>} : vector<16x128xbf16>, vector<128x128xbf16>, vector<16x128xf32> -> vector<16x128xf32>
    %12 = arith.addf %10, %11 : vector<16x128xf32>
    %13 = math.tanh %12 : vector<16x128xf32>
    %14 = arith.truncf %13 : vector<16x128xf32> to vector<16x128xbf16>
    %15 = arith.index_cast %c0_i32_4 : i32 to index
    %c0_7 = arith.constant 0 : index
    %c0_8 = arith.constant 0 : index
    %16 = vector.load %arg5[%15, %c0_7, %c0_8] : memref<8x16x128xbf16, #tpu.memory_space<vmem>>, vector<1x16x128xbf16>
    %17 = vector.shape_cast %16 : vector<1x16x128xbf16> to vector<16x128xbf16>
    %18 = vector.shape_cast %14 : vector<16x128xbf16> to vector<1x16x128xbf16>
    tpu.vector_store %arg5[%15, %c0_7, %c0_8], %18 {strides = array<i32>} : memref<8x16x128xbf16, #tpu.memory_space<vmem>>, vector<1x16x128xbf16>,
    %c1_i32 = arith.constant 1 : i32
    %19 = arith.index_cast %c1_i32 : i32 to index
    %c0_9 = arith.constant 0 : index
    %c0_10 = arith.constant 0 : index
    %20 = vector.load %arg2[%19, %c0_9, %c0_10] : memref<8x16x128xbf16, #tpu.memory_space<vmem>>, vector<1x16x128xbf16>
    %21 = vector.shape_cast %20 : vector<1x16x128xbf16> to vector<16x128xbf16>
    %22 = arith.extf %21 : vector<16x128xbf16> to vector<16x128xf32>
    %cst_11 = arith.constant dense<0.000000e+00> : vector<16x128xf32>
    %23 = tpu.matmul %14, %3, %cst_11 {dimension_numbers = #tpu.dot_dimension_numbers<[1], [0], [0], [1], [0, 0, 1, 1], [], []>} : vector<16x128xbf16>, vector<128x128xbf16>, vector<16x128xf32> -> vector<16x128xf32>
    %24 = arith.addf %22, %23 : vector<16x128xf32>
    %25 = math.tanh %24 : vector<16x128xf32>
    %26 = arith.truncf %25 : vector<16x128xf32> to vector<16x128xbf16>
    %27 = arith.index_cast %c1_i32 : i32 to index
    %c0_12 = arith.constant 0 : index
    %c0_13 = arith.constant 0 : index
    %28 = vector.load %arg5[%27, %c0_12, %c0_13] : memref<8x16x128xbf16, #tpu.memory_space<vmem>>, vector<1x16x128xbf16>
    %29 = vector.shape_cast %28 : vector<1x16x128xbf16> to vector<16x128xbf16>
    %30 = vector.shape_cast %26 : vector<16x128xbf16> to vector<1x16x128xbf16>
    tpu.vector_store %arg5[%27, %c0_12, %c0_13], %30 {strides = array<i32>} : memref<8x16x128xbf16, #tpu.memory_space<vmem>>, vector<1x16x128xbf16>,
    %c2_i32 = arith.constant 2 : i32
    %31 = arith.index_cast %c2_i32 : i32 to index
    %c0_14 = arith.constant 0 : index
    %c0_15 = arith.constant 0 : index
    %32 = vector.load %arg2[%31, %c0_14, %c0_15] : memref<8x16x128xbf16, #tpu.memory_space<vmem>>, vector<1x16x128xbf16>
    %33 = vector.shape_cast %32 : vector<1x16x128xbf16> to vector<16x128xbf16>
    %34 = arith.extf %33 : vector<16x128xbf16> to vector<16x128xf32>
    %cst_16 = arith.constant dense<0.000000e+00> : vector<16x128xf32>
    %35 = tpu.matmul %26, %3, %cst_16 {dimension_numbers = #tpu.dot_dimension_numbers<[1], [0], [0], [1], [0, 0, 1, 1], [], []>} : vector<16x128xbf16>, vector<128x128xbf16>, vector<16x128xf32> -> vector<16x128xf32>
    %36 = arith.addf %34, %35 : vector<16x128xf32>
    %37 = math.tanh %36 : vector<16x128xf32>
    %38 = arith.truncf %37 : vector<16x128xf32> to vector<16x128xbf16>
    %39 = arith.index_cast %c2_i32 : i32 to index
    %c0_17 = arith.constant 0 : index
    %c0_18 = arith.constant 0 : index
    %40 = vector.load %arg5[%39, %c0_17, %c0_18] : memref<8x16x128xbf16, #tpu.memory_space<vmem>>, vector<1x16x128xbf16>
    %41 = vector.shape_cast %40 : vector<1x16x128xbf16> to vector<16x128xbf16>
    %42 = vector.shape_cast %38 : vector<16x128xbf16> to vector<1x16x128xbf16>
    tpu.vector_store %arg5[%39, %c0_17, %c0_18], %42 {strides = array<i32>} : memref<8x16x128xbf16, #tpu.memory_space<vmem>>, vector<1x16x128xbf16>,
    %c3_i32 = arith.constant 3 : i32
    %43 = arith.index_cast %c3_i32 : i32 to index
    %c0_19 = arith.constant 0 : index
    %c0_20 = arith.constant 0 : index
    %44 = vector.load %arg2[%43, %c0_19, %c0_20] : memref<8x16x128xbf16, #tpu.memory_space<vmem>>, vector<1x16x128xbf16>
    %45 = vector.shape_cast %44 : vector<1x16x128xbf16> to vector<16x128xbf16>
    %46 = arith.extf %45 : vector<16x128xbf16> to vector<16x128xf32>
    %cst_21 = arith.constant dense<0.000000e+00> : vector<16x128xf32>
    %47 = tpu.matmul %38, %3, %cst_21 {dimension_numbers = #tpu.dot_dimension_numbers<[1], [0], [0], [1], [0, 0, 1, 1], [], []>} : vector<16x128xbf16>, vector<128x128xbf16>, vector<16x128xf32> -> vector<16x128xf32>
    %48 = arith.addf %46, %47 : vector<16x128xf32>
    %49 = math.tanh %48 : vector<16x128xf32>
    %50 = arith.truncf %49 : vector<16x128xf32> to vector<16x128xbf16>
    %51 = arith.index_cast %c3_i32 : i32 to index
    %c0_22 = arith.constant 0 : index
    %c0_23 = arith.constant 0 : index
    %52 = vector.load %arg5[%51, %c0_22, %c0_23] : memref<8x16x128xbf16, #tpu.memory_space<vmem>>, vector<1x16x128xbf16>
    %53 = vector.shape_cast %52 : vector<1x16x128xbf16> to vector<16x128xbf16>
    %54 = vector.shape_cast %50 : vector<16x128xbf16> to vector<1x16x128xbf16>
    tpu.vector_store %arg5[%51, %c0_22, %c0_23], %54 {strides = array<i32>} : memref<8x16x128xbf16, #tpu.memory_space<vmem>>, vector<1x16x128xbf16>,
    %c4_i32 = arith.constant 4 : i32
    %55 = arith.index_cast %c4_i32 : i32 to index
    %c0_24 = arith.constant 0 : index
    %c0_25 = arith.constant 0 : index
    %56 = vector.load %arg2[%55, %c0_24, %c0_25] : memref<8x16x128xbf16, #tpu.memory_space<vmem>>, vector<1x16x128xbf16>
    %57 = vector.shape_cast %56 : vector<1x16x128xbf16> to vector<16x128xbf16>
    %58 = arith.extf %57 : vector<16x128xbf16> to vector<16x128xf32>
    %cst_26 = arith.constant dense<0.000000e+00> : vector<16x128xf32>
    %59 = tpu.matmul %50, %3, %cst_26 {dimension_numbers = #tpu.dot_dimension_numbers<[1], [0], [0], [1], [0, 0, 1, 1], [], []>} : vector<16x128xbf16>, vector<128x128xbf16>, vector<16x128xf32> -> vector<16x128xf32>
    %60 = arith.addf %58, %59 : vector<16x128xf32>
    %61 = math.tanh %60 : vector<16x128xf32>
    %62 = arith.truncf %61 : vector<16x128xf32> to vector<16x128xbf16>
    %63 = arith.index_cast %c4_i32 : i32 to index
    %c0_27 = arith.constant 0 : index
    %c0_28 = arith.constant 0 : index
    %64 = vector.load %arg5[%63, %c0_27, %c0_28] : memref<8x16x128xbf16, #tpu.memory_space<vmem>>, vector<1x16x128xbf16>
    %65 = vector.shape_cast %64 : vector<1x16x128xbf16> to vector<16x128xbf16>
    %66 = vector.shape_cast %62 : vector<16x128xbf16> to vector<1x16x128xbf16>
    tpu.vector_store %arg5[%63, %c0_27, %c0_28], %66 {strides = array<i32>} : memref<8x16x128xbf16, #tpu.memory_space<vmem>>, vector<1x16x128xbf16>,
    %c5_i32 = arith.constant 5 : i32
    %67 = arith.index_cast %c5_i32 : i32 to index
    %c0_29 = arith.constant 0 : index
    %c0_30 = arith.constant 0 : index
    %68 = vector.load %arg2[%67, %c0_29, %c0_30] : memref<8x16x128xbf16, #tpu.memory_space<vmem>>, vector<1x16x128xbf16>
    %69 = vector.shape_cast %68 : vector<1x16x128xbf16> to vector<16x128xbf16>
    %70 = arith.extf %69 : vector<16x128xbf16> to vector<16x128xf32>
    %cst_31 = arith.constant dense<0.000000e+00> : vector<16x128xf32>
    %71 = tpu.matmul %62, %3, %cst_31 {dimension_numbers = #tpu.dot_dimension_numbers<[1], [0], [0], [1], [0, 0, 1, 1], [], []>} : vector<16x128xbf16>, vector<128x128xbf16>, vector<16x128xf32> -> vector<16x128xf32>
    %72 = arith.addf %70, %71 : vector<16x128xf32>
    %73 = math.tanh %72 : vector<16x128xf32>
    %74 = arith.truncf %73 : vector<16x128xf32> to vector<16x128xbf16>
    %75 = arith.index_cast %c5_i32 : i32 to index
    %c0_32 = arith.constant 0 : index
    %c0_33 = arith.constant 0 : index
    %76 = vector.load %arg5[%75, %c0_32, %c0_33] : memref<8x16x128xbf16, #tpu.memory_space<vmem>>, vector<1x16x128xbf16>
    %77 = vector.shape_cast %76 : vector<1x16x128xbf16> to vector<16x128xbf16>
    %78 = vector.shape_cast %74 : vector<16x128xbf16> to vector<1x16x128xbf16>
    tpu.vector_store %arg5[%75, %c0_32, %c0_33], %78 {strides = array<i32>} : memref<8x16x128xbf16, #tpu.memory_space<vmem>>, vector<1x16x128xbf16>,
    %c6_i32 = arith.constant 6 : i32
    %79 = arith.index_cast %c6_i32 : i32 to index
    %c0_34 = arith.constant 0 : index
    %c0_35 = arith.constant 0 : index
    %80 = vector.load %arg2[%79, %c0_34, %c0_35] : memref<8x16x128xbf16, #tpu.memory_space<vmem>>, vector<1x16x128xbf16>
    %81 = vector.shape_cast %80 : vector<1x16x128xbf16> to vector<16x128xbf16>
    %82 = arith.extf %81 : vector<16x128xbf16> to vector<16x128xf32>
    %cst_36 = arith.constant dense<0.000000e+00> : vector<16x128xf32>
    %83 = tpu.matmul %74, %3, %cst_36 {dimension_numbers = #tpu.dot_dimension_numbers<[1], [0], [0], [1], [0, 0, 1, 1], [], []>} : vector<16x128xbf16>, vector<128x128xbf16>, vector<16x128xf32> -> vector<16x128xf32>
    %84 = arith.addf %82, %83 : vector<16x128xf32>
    %85 = math.tanh %84 : vector<16x128xf32>
    %86 = arith.truncf %85 : vector<16x128xf32> to vector<16x128xbf16>
    %87 = arith.index_cast %c6_i32 : i32 to index
    %c0_37 = arith.constant 0 : index
    %c0_38 = arith.constant 0 : index
    %88 = vector.load %arg5[%87, %c0_37, %c0_38] : memref<8x16x128xbf16, #tpu.memory_space<vmem>>, vector<1x16x128xbf16>
    %89 = vector.shape_cast %88 : vector<1x16x128xbf16> to vector<16x128xbf16>
    %90 = vector.shape_cast %86 : vector<16x128xbf16> to vector<1x16x128xbf16>
    tpu.vector_store %arg5[%87, %c0_37, %c0_38], %90 {strides = array<i32>} : memref<8x16x128xbf16, #tpu.memory_space<vmem>>, vector<1x16x128xbf16>,
    %c7_i32 = arith.constant 7 : i32
    %91 = arith.index_cast %c7_i32 : i32 to index
    %c0_39 = arith.constant 0 : index
    %c0_40 = arith.constant 0 : index
    %92 = vector.load %arg2[%91, %c0_39, %c0_40] : memref<8x16x128xbf16, #tpu.memory_space<vmem>>, vector<1x16x128xbf16>
    %93 = vector.shape_cast %92 : vector<1x16x128xbf16> to vector<16x128xbf16>
    %94 = arith.extf %93 : vector<16x128xbf16> to vector<16x128xf32>
    %cst_41 = arith.constant dense<0.000000e+00> : vector<16x128xf32>
    %95 = tpu.matmul %86, %3, %cst_41 {dimension_numbers = #tpu.dot_dimension_numbers<[1], [0], [0], [1], [0, 0, 1, 1], [], []>} : vector<16x128xbf16>, vector<128x128xbf16>, vector<16x128xf32> -> vector<16x128xf32>
    %96 = arith.addf %94, %95 : vector<16x128xf32>
    %97 = math.tanh %96 : vector<16x128xf32>
    %98 = arith.truncf %97 : vector<16x128xf32> to vector<16x128xbf16>
    %99 = arith.index_cast %c7_i32 : i32 to index
    %c0_42 = arith.constant 0 : index
    %c0_43 = arith.constant 0 : index
    %100 = vector.load %arg5[%99, %c0_42, %c0_43] : memref<8x16x128xbf16, #tpu.memory_space<vmem>>, vector<1x16x128xbf16>
    %101 = vector.shape_cast %100 : vector<1x16x128xbf16> to vector<16x128xbf16>
    %102 = vector.shape_cast %98 : vector<16x128xbf16> to vector<1x16x128xbf16>
    tpu.vector_store %arg5[%99, %c0_42, %c0_43], %102 {strides = array<i32>} : memref<8x16x128xbf16, #tpu.memory_space<vmem>>, vector<1x16x128xbf16>,
    %c8_i32 = arith.constant 8 : i32
    %103 = arith.index_cast %arg0 : i32 to index
    %c0_44 = arith.constant 0 : index
    %c0_45 = arith.constant 0 : index
    %104 = vector.load %arg6[%103, %c0_44, %c0_45] : memref<1x16x128xbf16, #tpu.memory_space<vmem>>, vector<1x16x128xbf16>
    %105 = vector.shape_cast %104 : vector<1x16x128xbf16> to vector<16x128xbf16>
    %106 = vector.shape_cast %98 : vector<16x128xbf16> to vector<1x16x128xbf16>
    tpu.vector_store %arg6[%103, %c0_44, %c0_45], %106 {strides = array<i32>} : memref<1x16x128xbf16, #tpu.memory_space<vmem>>, vector<1x16x128xbf16>,
    return
  }
  func.func @transform_0(%arg0: i32, %arg1: i32) -> (i32, i32, i32) {
    %c0_i32 = arith.constant 0 : i32
    %c0_i32_0 = arith.constant 0 : i32
    return %arg1, %arg0, %c0_i32 : i32, i32, i32
  }
  func.func @transform_1(%arg0: i32, %arg1: i32) -> (i32, i32) {
    %c0_i32 = arith.constant 0 : i32
    %c0_i32_0 = arith.constant 0 : i32
    %c0_i32_1 = arith.constant 0 : i32
    return %c0_i32, %c0_i32_0 : i32, i32
  }
  func.func @transform_2(%arg0: i32, %arg1: i32) -> (i32, i32) {
    %c0_i32 = arith.constant 0 : i32
    %c0_i32_0 = arith.constant 0 : i32
    return %arg0, %c0_i32 : i32, i32
  }
  func.func @transform_3(%arg0: i32, %arg1: i32) -> (i32, i32, i32) {
    %c0_i32 = arith.constant 0 : i32
    %c0_i32_0 = arith.constant 0 : i32
    return %arg1, %arg0, %c0_i32 : i32, i32, i32
  }
}

module attributes {stable_mosaic.version = 11 : i64} {
  func.func @matmul_bias_kernel(%arg0: i32, %arg1: i32, %arg2: i32, %arg3: memref<128x128xbf16, #tpu.memory_space<vmem>>, %arg4: memref<128x128xbf16, #tpu.memory_space<vmem>>, %arg5: memref<1x128xf32, #tpu.memory_space<vmem>>, %arg6: memref<128x128xf32, #tpu.memory_space<vmem>>, %arg7: memref<128x128xf32, #tpu.memory_space<vmem>>) attributes {dimension_semantics = [#tpu.dimension_semantics<parallel>, #tpu.dimension_semantics<parallel>, #tpu.dimension_semantics<arbitrary>], iteration_bounds = array<i64: 1, 1, 1>, scalar_prefetch = 0 : i64, scratch_operands = 1 : i64, tpu.core_type = #tpu.core_type<tc>, window_params = [{transform_indices = @transform_0, window_bounds = array<i64: 128, 128>}, {transform_indices = @transform_1, window_bounds = array<i64: 128, 128>}, {transform_indices = @transform_2, window_bounds = array<i64: 1, 128>}, {transform_indices = @transform_3, window_bounds = array<i64: 128, 128>}]} {
    %c0_i32 = arith.constant 0 : i32
    %0 = arith.cmpi eq, %arg2, %c0_i32 : i32
    %1 = arith.extui %0 : i1 to i32
    %c0_i32_0 = arith.constant 0 : i32
    %2 = arith.cmpi ne, %1, %c0_i32_0 : i32
    scf.if %2 {
      %cst_10 = arith.constant 0.000000e+00 : f32
      %12 = vector.broadcast %cst_10 : f32 to vector<128x128xf32>
      %c0_11 = arith.constant 0 : index
      %c0_12 = arith.constant 0 : index
      %13 = vector.load %arg7[%c0_11, %c0_12] : memref<128x128xf32, #tpu.memory_space<vmem>>, vector<128x128xf32>
      tpu.vector_store %arg7[%c0_11, %c0_12], %12 {strides = array<i32>} : memref<128x128xf32, #tpu.memory_space<vmem>>, vector<128x128xf32>,
    } else {
    }
    %c0 = arith.constant 0 : index
    %c0_1 = arith.constant 0 : index
    %3 = vector.load %arg7[%c0, %c0_1] : memref<128x128xf32, #tpu.memory_space<vmem>>, vector<128x128xf32>
    %c0_2 = arith.constant 0 : index
    %c0_3 = arith.constant 0 : index
    %4 = vector.load %arg3[%c0_2, %c0_3] : memref<128x128xbf16, #tpu.memory_space<vmem>>, vector<128x128xbf16>
    %c0_4 = arith.constant 0 : index
    %c0_5 = arith.constant 0 : index
    %5 = vector.load %arg4[%c0_4, %c0_5] : memref<128x128xbf16, #tpu.memory_space<vmem>>, vector<128x128xbf16>
    %cst = arith.constant dense<0.000000e+00> : vector<128x128xf32>
    %6 = tpu.matmul %4, %5, %cst {dimension_numbers = #tpu.dot_dimension_numbers<[1], [0], [0], [1], [0, 0, 1, 1], [], []>} : vector<128x128xbf16>, vector<128x128xbf16>, vector<128x128xf32> -> vector<128x128xf32>
    %7 = arith.addf %3, %6 : vector<128x128xf32>
    %c0_6 = arith.constant 0 : index
    %c0_7 = arith.constant 0 : index
    %8 = vector.load %arg7[%c0_6, %c0_7] : memref<128x128xf32, #tpu.memory_space<vmem>>, vector<128x128xf32>
    tpu.vector_store %arg7[%c0_6, %c0_7], %7 {strides = array<i32>} : memref<128x128xf32, #tpu.memory_space<vmem>>, vector<128x128xf32>,
    %c0_i32_8 = arith.constant 0 : i32
    %9 = arith.cmpi eq, %arg2, %c0_i32_8 : i32
    %10 = arith.extui %9 : i1 to i32
    %c0_i32_9 = arith.constant 0 : i32
    %11 = arith.cmpi ne, %10, %c0_i32_9 : i32
    scf.if %11 {
      %c0_10 = arith.constant 0 : index
      %c0_11 = arith.constant 0 : index
      %12 = vector.load %arg7[%c0_10, %c0_11] : memref<128x128xf32, #tpu.memory_space<vmem>>, vector<128x128xf32>
      %c0_12 = arith.constant 0 : index
      %c0_13 = arith.constant 0 : index
      %13 = vector.load %arg5[%c0_12, %c0_13] : memref<1x128xf32, #tpu.memory_space<vmem>>, vector<1x128xf32>
      %14 = vector.broadcast %13 : vector<1x128xf32> to vector<128x128xf32>
      %15 = arith.addf %12, %14 : vector<128x128xf32>
      %c0_14 = arith.constant 0 : index
      %c0_15 = arith.constant 0 : index
      %16 = vector.load %arg6[%c0_14, %c0_15] : memref<128x128xf32, #tpu.memory_space<vmem>>, vector<128x128xf32>
      tpu.vector_store %arg6[%c0_14, %c0_15], %15 {strides = array<i32>} : memref<128x128xf32, #tpu.memory_space<vmem>>, vector<128x128xf32>,
    } else {
    }
    return
  }
  func.func @transform_0(%arg0: i32, %arg1: i32, %arg2: i32) -> (i32, i32) {
    %c0_i32 = arith.constant 0 : i32
    return %arg0, %arg2 : i32, i32
  }
  func.func @transform_1(%arg0: i32, %arg1: i32, %arg2: i32) -> (i32, i32) {
    %c0_i32 = arith.constant 0 : i32
    return %arg2, %arg1 : i32, i32
  }
  func.func @transform_2(%arg0: i32, %arg1: i32, %arg2: i32) -> (i32, i32) {
    %c0_i32 = arith.constant 0 : i32
    %c0_i32_0 = arith.constant 0 : i32
    return %c0_i32, %arg1 : i32, i32
  }
  func.func @transform_3(%arg0: i32, %arg1: i32, %arg2: i32) -> (i32, i32) {
    %c0_i32 = arith.constant 0 : i32
    return %arg0, %arg1 : i32, i32
  }
}

module attributes {stable_mosaic.version = 11 : i64} {
  func.func @kernel(%arg0: i32, %arg1: i32, %arg2: memref<8x16x128xbf16, #tpu.memory_space<vmem>>, %arg3: memref<128x128xbf16, #tpu.memory_space<vmem>>, %arg4: memref<16x128xbf16, #tpu.memory_space<vmem>>, %arg5: memref<128x128xbf16, #tpu.memory_space<vmem>>, %arg6: memref<1x128xf32, #tpu.memory_space<vmem>>, %arg7: memref<8x16x128xbf16, #tpu.memory_space<vmem>>, %arg8: memref<1x16x128xbf16, #tpu.memory_space<vmem>>) attributes {dimension_semantics = [#tpu.dimension_semantics<parallel>, #tpu.dimension_semantics<arbitrary>], iteration_bounds = array<i64: 1, 1>, scalar_prefetch = 0 : i64, scratch_operands = 1 : i64, tpu.core_type = #tpu.core_type<tc>, window_params = [{transform_indices = @transform_0, window_bounds = array<i64: 8, 16, 128>}, {pipeline_mode = #tpu.pipeline_mode<synchronous>, transform_indices = @transform_1, window_bounds = array<i64: 128, 128>}, {transform_indices = @transform_2, window_bounds = array<i64: 16, 128>}, {pipeline_mode = #tpu.pipeline_mode<synchronous>, transform_indices = @transform_3, window_bounds = array<i64: 128, 128>}, {pipeline_mode = #tpu.pipeline_mode<synchronous>, transform_indices = @transform_4, window_bounds = array<i64: 1, 128>}, {transform_indices = @transform_5, window_bounds = array<i64: 8, 16, 128>}]} {
    %c0_i32 = arith.constant 0 : i32
    %0 = arith.cmpi eq, %arg1, %c0_i32 : i32
    %1 = arith.extui %0 : i1 to i32
    %c0_i32_0 = arith.constant 0 : i32
    %2 = arith.cmpi ne, %1, %c0_i32_0 : i32
    scf.if %2 {
      %c0_57 = arith.constant 0 : index
      %c0_58 = arith.constant 0 : index
      %117 = vector.load %arg4[%c0_57, %c0_58] : memref<16x128xbf16, #tpu.memory_space<vmem>>, vector<16x128xbf16>
      %118 = arith.index_cast %arg0 : i32 to index
      %c0_59 = arith.constant 0 : index
      %c0_60 = arith.constant 0 : index
      %119 = vector.load %arg8[%118, %c0_59, %c0_60] : memref<1x16x128xbf16, #tpu.memory_space<vmem>>, vector<1x16x128xbf16>
      %120 = vector.shape_cast %119 : vector<1x16x128xbf16> to vector<16x128xbf16>
      %121 = vector.shape_cast %117 : vector<16x128xbf16> to vector<1x16x128xbf16>
      tpu.vector_store %arg8[%118, %c0_59, %c0_60], %121 {strides = array<i32>} : memref<1x16x128xbf16, #tpu.memory_space<vmem>>, vector<1x16x128xbf16>,
    } else {
    }
    %c0 = arith.constant 0 : index
    %c0_1 = arith.constant 0 : index
    %3 = vector.load %arg3[%c0, %c0_1] : memref<128x128xbf16, #tpu.memory_space<vmem>>, vector<128x128xbf16>
    %4 = arith.index_cast %arg0 : i32 to index
    %c0_2 = arith.constant 0 : index
    %c0_3 = arith.constant 0 : index
    %5 = vector.load %arg8[%4, %c0_2, %c0_3] : memref<1x16x128xbf16, #tpu.memory_space<vmem>>, vector<1x16x128xbf16>
    %6 = vector.shape_cast %5 : vector<1x16x128xbf16> to vector<16x128xbf16>
    %c0_i32_4 = arith.constant 0 : i32
    %7 = arith.index_cast %c0_i32_4 : i32 to index
    %c0_5 = arith.constant 0 : index
    %c0_6 = arith.constant 0 : index
    %8 = vector.load %arg2[%7, %c0_5, %c0_6] : memref<8x16x128xbf16, #tpu.memory_space<vmem>>, vector<1x16x128xbf16>
    %9 = vector.shape_cast %8 : vector<1x16x128xbf16> to vector<16x128xbf16>
    %10 = arith.extf %9 : vector<16x128xbf16> to vector<16x128xf32>
    %cst = arith.constant dense<0.000000e+00> : vector<16x128xf32>
    %11 = tpu.matmul %6, %3, %cst {dimension_numbers = #tpu.dot_dimension_numbers<[1], [0], [0], [1], [0, 0, 1, 1], [], []>} : vector<16x128xbf16>, vector<128x128xbf16>, vector<16x128xf32> -> vector<16x128xf32>
    %12 = arith.addf %10, %11 : vector<16x128xf32>
    %13 = math.tanh %12 : vector<16x128xf32>
    %14 = arith.truncf %13 : vector<16x128xf32> to vector<16x128xbf16>
    %15 = arith.index_cast %c0_i32_4 : i32 to index
    %c0_7 = arith.constant 0 : index
    %c0_8 = arith.constant 0 : index
    %16 = vector.load %arg7[%15, %c0_7, %c0_8] : memref<8x16x128xbf16, #tpu.memory_space<vmem>>, vector<1x16x128xbf16>
    %17 = vector.shape_cast %16 : vector<1x16x128xbf16> to vector<16x128xbf16>
    %18 = vector.shape_cast %14 : vector<16x128xbf16> to vector<1x16x128xbf16>
    tpu.vector_store %arg7[%15, %c0_7, %c0_8], %18 {strides = array<i32>} : memref<8x16x128xbf16, #tpu.memory_space<vmem>>, vector<1x16x128xbf16>,
    %c1_i32 = arith.constant 1 : i32
    %19 = arith.index_cast %c1_i32 : i32 to index
    %c0_9 = arith.constant 0 : index
    %c0_10 = arith.constant 0 : index
    %20 = vector.load %arg2[%19, %c0_9, %c0_10] : memref<8x16x128xbf16, #tpu.memory_space<vmem>>, vector<1x16x128xbf16>
    %21 = vector.shape_cast %20 : vector<1x16x128xbf16> to vector<16x128xbf16>
    %22 = arith.extf %21 : vector<16x128xbf16> to vector<16x128xf32>
    %cst_11 = arith.constant dense<0.000000e+00> : vector<16x128xf32>
    %23 = tpu.matmul %14, %3, %cst_11 {dimension_numbers = #tpu.dot_dimension_numbers<[1], [0], [0], [1], [0, 0, 1, 1], [], []>} : vector<16x128xbf16>, vector<128x128xbf16>, vector<16x128xf32> -> vector<16x128xf32>
    %24 = arith.addf %22, %23 : vector<16x128xf32>
    %25 = math.tanh %24 : vector<16x128xf32>
    %26 = arith.truncf %25 : vector<16x128xf32> to vector<16x128xbf16>
    %27 = arith.index_cast %c1_i32 : i32 to index
    %c0_12 = arith.constant 0 : index
    %c0_13 = arith.constant 0 : index
    %28 = vector.load %arg7[%27, %c0_12, %c0_13] : memref<8x16x128xbf16, #tpu.memory_space<vmem>>, vector<1x16x128xbf16>
    %29 = vector.shape_cast %28 : vector<1x16x128xbf16> to vector<16x128xbf16>
    %30 = vector.shape_cast %26 : vector<16x128xbf16> to vector<1x16x128xbf16>
    tpu.vector_store %arg7[%27, %c0_12, %c0_13], %30 {strides = array<i32>} : memref<8x16x128xbf16, #tpu.memory_space<vmem>>, vector<1x16x128xbf16>,
    %c2_i32 = arith.constant 2 : i32
    %31 = arith.index_cast %c2_i32 : i32 to index
    %c0_14 = arith.constant 0 : index
    %c0_15 = arith.constant 0 : index
    %32 = vector.load %arg2[%31, %c0_14, %c0_15] : memref<8x16x128xbf16, #tpu.memory_space<vmem>>, vector<1x16x128xbf16>
    %33 = vector.shape_cast %32 : vector<1x16x128xbf16> to vector<16x128xbf16>
    %34 = arith.extf %33 : vector<16x128xbf16> to vector<16x128xf32>
    %cst_16 = arith.constant dense<0.000000e+00> : vector<16x128xf32>
    %35 = tpu.matmul %26, %3, %cst_16 {dimension_numbers = #tpu.dot_dimension_numbers<[1], [0], [0], [1], [0, 0, 1, 1], [], []>} : vector<16x128xbf16>, vector<128x128xbf16>, vector<16x128xf32> -> vector<16x128xf32>
    %36 = arith.addf %34, %35 : vector<16x128xf32>
    %37 = math.tanh %36 : vector<16x128xf32>
    %38 = arith.truncf %37 : vector<16x128xf32> to vector<16x128xbf16>
    %39 = arith.index_cast %c2_i32 : i32 to index
    %c0_17 = arith.constant 0 : index
    %c0_18 = arith.constant 0 : index
    %40 = vector.load %arg7[%39, %c0_17, %c0_18] : memref<8x16x128xbf16, #tpu.memory_space<vmem>>, vector<1x16x128xbf16>
    %41 = vector.shape_cast %40 : vector<1x16x128xbf16> to vector<16x128xbf16>
    %42 = vector.shape_cast %38 : vector<16x128xbf16> to vector<1x16x128xbf16>
    tpu.vector_store %arg7[%39, %c0_17, %c0_18], %42 {strides = array<i32>} : memref<8x16x128xbf16, #tpu.memory_space<vmem>>, vector<1x16x128xbf16>,
    %c3_i32 = arith.constant 3 : i32
    %43 = arith.index_cast %c3_i32 : i32 to index
    %c0_19 = arith.constant 0 : index
    %c0_20 = arith.constant 0 : index
    %44 = vector.load %arg2[%43, %c0_19, %c0_20] : memref<8x16x128xbf16, #tpu.memory_space<vmem>>, vector<1x16x128xbf16>
    %45 = vector.shape_cast %44 : vector<1x16x128xbf16> to vector<16x128xbf16>
    %46 = arith.extf %45 : vector<16x128xbf16> to vector<16x128xf32>
    %cst_21 = arith.constant dense<0.000000e+00> : vector<16x128xf32>
    %47 = tpu.matmul %38, %3, %cst_21 {dimension_numbers = #tpu.dot_dimension_numbers<[1], [0], [0], [1], [0, 0, 1, 1], [], []>} : vector<16x128xbf16>, vector<128x128xbf16>, vector<16x128xf32> -> vector<16x128xf32>
    %48 = arith.addf %46, %47 : vector<16x128xf32>
    %49 = math.tanh %48 : vector<16x128xf32>
    %50 = arith.truncf %49 : vector<16x128xf32> to vector<16x128xbf16>
    %51 = arith.index_cast %c3_i32 : i32 to index
    %c0_22 = arith.constant 0 : index
    %c0_23 = arith.constant 0 : index
    %52 = vector.load %arg7[%51, %c0_22, %c0_23] : memref<8x16x128xbf16, #tpu.memory_space<vmem>>, vector<1x16x128xbf16>
    %53 = vector.shape_cast %52 : vector<1x16x128xbf16> to vector<16x128xbf16>
    %54 = vector.shape_cast %50 : vector<16x128xbf16> to vector<1x16x128xbf16>
    tpu.vector_store %arg7[%51, %c0_22, %c0_23], %54 {strides = array<i32>} : memref<8x16x128xbf16, #tpu.memory_space<vmem>>, vector<1x16x128xbf16>,
    %c4_i32 = arith.constant 4 : i32
    %55 = arith.index_cast %c4_i32 : i32 to index
    %c0_24 = arith.constant 0 : index
    %c0_25 = arith.constant 0 : index
    %56 = vector.load %arg2[%55, %c0_24, %c0_25] : memref<8x16x128xbf16, #tpu.memory_space<vmem>>, vector<1x16x128xbf16>
    %57 = vector.shape_cast %56 : vector<1x16x128xbf16> to vector<16x128xbf16>
    %58 = arith.extf %57 : vector<16x128xbf16> to vector<16x128xf32>
    %cst_26 = arith.constant dense<0.000000e+00> : vector<16x128xf32>
    %59 = tpu.matmul %50, %3, %cst_26 {dimension_numbers = #tpu.dot_dimension_numbers<[1], [0], [0], [1], [0, 0, 1, 1], [], []>} : vector<16x128xbf16>, vector<128x128xbf16>, vector<16x128xf32> -> vector<16x128xf32>
    %60 = arith.addf %58, %59 : vector<16x128xf32>
    %61 = math.tanh %60 : vector<16x128xf32>
    %62 = arith.truncf %61 : vector<16x128xf32> to vector<16x128xbf16>
    %63 = arith.index_cast %c4_i32 : i32 to index
    %c0_27 = arith.constant 0 : index
    %c0_28 = arith.constant 0 : index
    %64 = vector.load %arg7[%63, %c0_27, %c0_28] : memref<8x16x128xbf16, #tpu.memory_space<vmem>>, vector<1x16x128xbf16>
    %65 = vector.shape_cast %64 : vector<1x16x128xbf16> to vector<16x128xbf16>
    %66 = vector.shape_cast %62 : vector<16x128xbf16> to vector<1x16x128xbf16>
    tpu.vector_store %arg7[%63, %c0_27, %c0_28], %66 {strides = array<i32>} : memref<8x16x128xbf16, #tpu.memory_space<vmem>>, vector<1x16x128xbf16>,
    %c5_i32 = arith.constant 5 : i32
    %67 = arith.index_cast %c5_i32 : i32 to index
    %c0_29 = arith.constant 0 : index
    %c0_30 = arith.constant 0 : index
    %68 = vector.load %arg2[%67, %c0_29, %c0_30] : memref<8x16x128xbf16, #tpu.memory_space<vmem>>, vector<1x16x128xbf16>
    %69 = vector.shape_cast %68 : vector<1x16x128xbf16> to vector<16x128xbf16>
    %70 = arith.extf %69 : vector<16x128xbf16> to vector<16x128xf32>
    %cst_31 = arith.constant dense<0.000000e+00> : vector<16x128xf32>
    %71 = tpu.matmul %62, %3, %cst_31 {dimension_numbers = #tpu.dot_dimension_numbers<[1], [0], [0], [1], [0, 0, 1, 1], [], []>} : vector<16x128xbf16>, vector<128x128xbf16>, vector<16x128xf32> -> vector<16x128xf32>
    %72 = arith.addf %70, %71 : vector<16x128xf32>
    %73 = math.tanh %72 : vector<16x128xf32>
    %74 = arith.truncf %73 : vector<16x128xf32> to vector<16x128xbf16>
    %75 = arith.index_cast %c5_i32 : i32 to index
    %c0_32 = arith.constant 0 : index
    %c0_33 = arith.constant 0 : index
    %76 = vector.load %arg7[%75, %c0_32, %c0_33] : memref<8x16x128xbf16, #tpu.memory_space<vmem>>, vector<1x16x128xbf16>
    %77 = vector.shape_cast %76 : vector<1x16x128xbf16> to vector<16x128xbf16>
    %78 = vector.shape_cast %74 : vector<16x128xbf16> to vector<1x16x128xbf16>
    tpu.vector_store %arg7[%75, %c0_32, %c0_33], %78 {strides = array<i32>} : memref<8x16x128xbf16, #tpu.memory_space<vmem>>, vector<1x16x128xbf16>,
    %c6_i32 = arith.constant 6 : i32
    %79 = arith.index_cast %c6_i32 : i32 to index
    %c0_34 = arith.constant 0 : index
    %c0_35 = arith.constant 0 : index
    %80 = vector.load %arg2[%79, %c0_34, %c0_35] : memref<8x16x128xbf16, #tpu.memory_space<vmem>>, vector<1x16x128xbf16>
    %81 = vector.shape_cast %80 : vector<1x16x128xbf16> to vector<16x128xbf16>
    %82 = arith.extf %81 : vector<16x128xbf16> to vector<16x128xf32>
    %cst_36 = arith.constant dense<0.000000e+00> : vector<16x128xf32>
    %83 = tpu.matmul %74, %3, %cst_36 {dimension_numbers = #tpu.dot_dimension_numbers<[1], [0], [0], [1], [0, 0, 1, 1], [], []>} : vector<16x128xbf16>, vector<128x128xbf16>, vector<16x128xf32> -> vector<16x128xf32>
    %84 = arith.addf %82, %83 : vector<16x128xf32>
    %85 = math.tanh %84 : vector<16x128xf32>
    %86 = arith.truncf %85 : vector<16x128xf32> to vector<16x128xbf16>
    %87 = arith.index_cast %c6_i32 : i32 to index
    %c0_37 = arith.constant 0 : index
    %c0_38 = arith.constant 0 : index
    %88 = vector.load %arg7[%87, %c0_37, %c0_38] : memref<8x16x128xbf16, #tpu.memory_space<vmem>>, vector<1x16x128xbf16>
    %89 = vector.shape_cast %88 : vector<1x16x128xbf16> to vector<16x128xbf16>
    %90 = vector.shape_cast %86 : vector<16x128xbf16> to vector<1x16x128xbf16>
    tpu.vector_store %arg7[%87, %c0_37, %c0_38], %90 {strides = array<i32>} : memref<8x16x128xbf16, #tpu.memory_space<vmem>>, vector<1x16x128xbf16>,
    %c7_i32 = arith.constant 7 : i32
    %91 = arith.index_cast %c7_i32 : i32 to index
    %c0_39 = arith.constant 0 : index
    %c0_40 = arith.constant 0 : index
    %92 = vector.load %arg2[%91, %c0_39, %c0_40] : memref<8x16x128xbf16, #tpu.memory_space<vmem>>, vector<1x16x128xbf16>
    %93 = vector.shape_cast %92 : vector<1x16x128xbf16> to vector<16x128xbf16>
    %94 = arith.extf %93 : vector<16x128xbf16> to vector<16x128xf32>
    %cst_41 = arith.constant dense<0.000000e+00> : vector<16x128xf32>
    %95 = tpu.matmul %86, %3, %cst_41 {dimension_numbers = #tpu.dot_dimension_numbers<[1], [0], [0], [1], [0, 0, 1, 1], [], []>} : vector<16x128xbf16>, vector<128x128xbf16>, vector<16x128xf32> -> vector<16x128xf32>
    %96 = arith.addf %94, %95 : vector<16x128xf32>
    %97 = math.tanh %96 : vector<16x128xf32>
    %98 = arith.truncf %97 : vector<16x128xf32> to vector<16x128xbf16>
    %99 = arith.index_cast %c7_i32 : i32 to index
    %c0_42 = arith.constant 0 : index
    %c0_43 = arith.constant 0 : index
    %100 = vector.load %arg7[%99, %c0_42, %c0_43] : memref<8x16x128xbf16, #tpu.memory_space<vmem>>, vector<1x16x128xbf16>
    %101 = vector.shape_cast %100 : vector<1x16x128xbf16> to vector<16x128xbf16>
    %102 = vector.shape_cast %98 : vector<16x128xbf16> to vector<1x16x128xbf16>
    tpu.vector_store %arg7[%99, %c0_42, %c0_43], %102 {strides = array<i32>} : memref<8x16x128xbf16, #tpu.memory_space<vmem>>, vector<1x16x128xbf16>,
    %c8_i32 = arith.constant 8 : i32
    %103 = arith.index_cast %arg0 : i32 to index
    %c0_44 = arith.constant 0 : index
    %c0_45 = arith.constant 0 : index
    %104 = vector.load %arg8[%103, %c0_44, %c0_45] : memref<1x16x128xbf16, #tpu.memory_space<vmem>>, vector<1x16x128xbf16>
    %105 = vector.shape_cast %104 : vector<1x16x128xbf16> to vector<16x128xbf16>
    %106 = vector.shape_cast %98 : vector<16x128xbf16> to vector<1x16x128xbf16>
    tpu.vector_store %arg8[%103, %c0_44, %c0_45], %106 {strides = array<i32>} : memref<1x16x128xbf16, #tpu.memory_space<vmem>>, vector<1x16x128xbf16>,
    %c0_46 = arith.constant 0 : index
    %c0_47 = arith.constant 0 : index
    %c0_48 = arith.constant 0 : index
    %107 = vector.load %arg7[%c0_46, %c0_47, %c0_48] : memref<8x16x128xbf16, #tpu.memory_space<vmem>>, vector<8x16x128xbf16>
    %108 = vector.shape_cast %107 : vector<8x16x128xbf16> to vector<128x128xbf16>
    %c0_49 = arith.constant 0 : index
    %c0_50 = arith.constant 0 : index
    %109 = vector.load %arg5[%c0_49, %c0_50] : memref<128x128xbf16, #tpu.memory_space<vmem>>, vector<128x128xbf16>
    %cst_51 = arith.constant dense<0.000000e+00> : vector<128x128xf32>
    %110 = tpu.matmul %108, %109, %cst_51 {dimension_numbers = #tpu.dot_dimension_numbers<[1], [0], [0], [1], [0, 0, 1, 1], [], []>} : vector<128x128xbf16>, vector<128x128xbf16>, vector<128x128xf32> -> vector<128x128xf32>
    %c0_52 = arith.constant 0 : index
    %c0_53 = arith.constant 0 : index
    %111 = vector.load %arg6[%c0_52, %c0_53] : memref<1x128xf32, #tpu.memory_space<vmem>>, vector<1x128xf32>
    %112 = vector.broadcast %111 : vector<1x128xf32> to vector<128x128xf32>
    %113 = arith.addf %110, %112 : vector<128x128xf32>
    %114 = arith.truncf %113 : vector<128x128xf32> to vector<128x128xbf16>
    %115 = vector.shape_cast %114 : vector<128x128xbf16> to vector<8x16x128xbf16>
    %c0_54 = arith.constant 0 : index
    %c0_55 = arith.constant 0 : index
    %c0_56 = arith.constant 0 : index
    %116 = vector.load %arg7[%c0_54, %c0_55, %c0_56] : memref<8x16x128xbf16, #tpu.memory_space<vmem>>, vector<8x16x128xbf16>
    tpu.vector_store %arg7[%c0_54, %c0_55, %c0_56], %115 {strides = array<i32>} : memref<8x16x128xbf16, #tpu.memory_space<vmem>>, vector<8x16x128xbf16>,
    return
  }
  func.func @transform_0(%arg0: i32, %arg1: i32) -> (i32, i32, i32) {
    %c0_i32 = arith.constant 0 : i32
    %c0_i32_0 = arith.constant 0 : i32
    return %arg1, %arg0, %c0_i32 : i32, i32, i32
  }
  func.func @transform_1(%arg0: i32, %arg1: i32) -> (i32, i32) {
    %c0_i32 = arith.constant 0 : i32
    %c0_i32_0 = arith.constant 0 : i32
    %c0_i32_1 = arith.constant 0 : i32
    return %c0_i32, %c0_i32_0 : i32, i32
  }
  func.func @transform_2(%arg0: i32, %arg1: i32) -> (i32, i32) {
    %c0_i32 = arith.constant 0 : i32
    %c0_i32_0 = arith.constant 0 : i32
    return %arg0, %c0_i32 : i32, i32
  }
  func.func @transform_3(%arg0: i32, %arg1: i32) -> (i32, i32) {
    %c0_i32 = arith.constant 0 : i32
    %c0_i32_0 = arith.constant 0 : i32
    %c0_i32_1 = arith.constant 0 : i32
    return %c0_i32, %c0_i32_0 : i32, i32
  }
  func.func @transform_4(%arg0: i32, %arg1: i32) -> (i32, i32) {
    %c0_i32 = arith.constant 0 : i32
    %c0_i32_0 = arith.constant 0 : i32
    %c0_i32_1 = arith.constant 0 : i32
    return %c0_i32, %c0_i32_0 : i32, i32
  }
  func.func @transform_5(%arg0: i32, %arg1: i32) -> (i32, i32, i32) {
    %c0_i32 = arith.constant 0 : i32
    %c0_i32_0 = arith.constant 0 : i32
    return %arg1, %arg0, %c0_i32 : i32, i32, i32
  }
}

</mosaic_0001>

<llo_original>
// kernel: _lambda_.7
$region0: #{_lambda_.7}
  #allocation0 [shape = 'u32[]', space=smem, size = 0x4, offset = 0x4, fixed_abs, tag = 'smem constant byte address 0x4 - core index']
  #allocation1 [shape = 'u32[144,128]{1,0:T(1,128)}', space=vmem, size = 0x12000, scoped, tag = 'internal scratch']
  #allocation2 [shape = 'f32[128,128]{1,0:T(8,128)}', space=vmem, size = 0x10000, scoped, tag = 'scratch operand']
  %s0 = inlined_call_operand.vmem [shape: bf16[128,128], index: 0, kind: input, shape index: {}]
  %s1 = inlined_call_operand.vmem [shape: bf16[128,128], index: 1, kind: input, shape index: {}]
  %s2 = inlined_call_operand.vmem [shape: f32[1,128], index: 2, kind: input, shape index: {}]
  %s3 = inlined_call_operand.vmem [shape: f32[128,128], index: 3, kind: output, shape index: {}]
  %s4 = sld [smem:[#allocation0]]
  $region30: #{_lambda_.7} parent=0
    _
  %s6 = ssub.s32 1, %s4
  %s7 = scalar_select 0, %s6, %s4
  // Predicated region
  $region2: #{_lambda_.7} parent=0 // pred_check
    _
  $region3: #{_lambda_.7} parent=0 // pred_check_branch
    %9 = sbr.rel (0) target = $region5
  $region4: #{_lambda_.7} parent=0 // pred_region
    _
  $region5: #{_lambda_.7} parent=0 // pred_fallthru
    _
  // Predicated region
  $region6: #{_lambda_.7} parent=0 // pred_check
    _
  $region7: #{_lambda_.7} parent=0 // pred_check_branch
    %11 = sbr.rel (0) target = $region9
  $region8: #{_lambda_.7} parent=0 // pred_region
    _
  $region9: #{_lambda_.7} parent=0 // pred_fallthru
    _
  // Predicated region
  $region10: #{_lambda_.7} parent=0 // pred_check
    _
  $region11: #{_lambda_.7} parent=0 // pred_check_branch
    %13 = sbr.rel (0) target = $region13
  $region12: #{_lambda_.7} parent=0 // pred_region
    _
  $region13: #{_lambda_.7} parent=0 // pred_fallthru
    _
  %p15 = scmp.eq.s32.totalorder 0, 0
  // Predicated region
  $region14: #{_lambda_.7} parent=0 // pred_check
    %p16 = pneg %p15
  $region15: #{_lambda_.7} parent=0 // pred_check_branch
    %18 = sbr.rel (%p16) target = $region17
  $region16: #{_lambda_.7} parent=0 // pred_region
    %19 = vst [vmem:[#allocation2] sm:$0xff] 0.0
    %20 = vst [vmem:[#allocation2 + $0x8] sm:$0xff] 0.0
    %21 = vst [vmem:[#allocation2 + $0x10] sm:$0xff] 0.0
    %22 = vst [vmem:[#allocation2 + $0x18] sm:$0xff] 0.0
    %23 = vst [vmem:[#allocation2 + $0x20] sm:$0xff] 0.0
    %24 = vst [vmem:[#allocation2 + $0x28] sm:$0xff] 0.0
    %25 = vst [vmem:[#allocation2 + $0x30] sm:$0xff] 0.0
    %26 = vst [vmem:[#allocation2 + $0x38] sm:$0xff] 0.0
    %27 = vst [vmem:[#allocation2 + $0x40] sm:$0xff] 0.0
    %28 = vst [vmem:[#allocation2 + $0x48] sm:$0xff] 0.0
    %29 = vst [vmem:[#allocation2 + $0x50] sm:$0xff] 0.0
    %30 = vst [vmem:[#allocation2 + $0x58] sm:$0xff] 0.0
    %31 = vst [vmem:[#allocation2 + $0x60] sm:$0xff] 0.0
    %32 = vst [vmem:[#allocation2 + $0x68] sm:$0xff] 0.0
    %33 = vst [vmem:[#allocation2 + $0x70] sm:$0xff] 0.0
    %34 = vst [vmem:[#allocation2 + $0x78] sm:$0xff] 0.0
  $region17: #{_lambda_.7} parent=0 // pred_fallthru
    _
  %v35 = vld [vmem:[#allocation2] sm:$0xff]
  %v36 = vld [vmem:[#allocation2 + $0x8] sm:$0xff]
  %v37 = vld [vmem:[#allocation2 + $0x10] sm:$0xff]
  %v38 = vld [vmem:[#allocation2 + $0x18] sm:$0xff]
  %v39 = vld [vmem:[#allocation2 + $0x20] sm:$0xff]
  %v40 = vld [vmem:[#allocation2 + $0x28] sm:$0xff]
  %v41 = vld [vmem:[#allocation2 + $0x30] sm:$0xff]
  %v42 = vld [vmem:[#allocation2 + $0x38] sm:$0xff]
  %v43 = vld [vmem:[#allocation2 + $0x40] sm:$0xff]
  %v44 = vld [vmem:[#allocation2 + $0x48] sm:$0xff]
  %v45 = vld [vmem:[#allocation2 + $0x50] sm:$0xff]
  %v46 = vld [vmem:[#allocation2 + $0x58] sm:$0xff]
  %v47 = vld [vmem:[#allocation2 + $0x60] sm:$0xff]
  %v48 = vld [vmem:[#allocation2 + $0x68] sm:$0xff]
  %v49 = vld [vmem:[#allocation2 + $0x70] sm:$0xff]
  %v50 = vld [vmem:[#allocation2 + $0x78] sm:$0xff]
  %v51 = vld [vmem:[%s0] sm:$0xf]
  %v52 = vld [vmem:[%s0 + $0x4] sm:$0xf]
  %v53 = vld [vmem:[%s0 + $0x8] sm:$0xf]
  %v54 = vld [vmem:[%s0 + $0xc] sm:$0xf]
  %v55 = vld [vmem:[%s0 + $0x10] sm:$0xf]
  %v56 = vld [vmem:[%s0 + $0x14] sm:$0xf]
  %v57 = vld [vmem:[%s0 + $0x18] sm:$0xf]
  %v58 = vld [vmem:[%s0 + $0x1c] sm:$0xf]
  %v59 = vld [vmem:[%s0 + $0x20] sm:$0xf]
  %v60 = vld [vmem:[%s0 + $0x24] sm:$0xf]
  %v61 = vld [vmem:[%s0 + $0x28] sm:$0xf]
  %v62 = vld [vmem:[%s0 + $0x2c] sm:$0xf]
  %v63 = vld [vmem:[%s0 + $0x30] sm:$0xf]
  %v64 = vld [vmem:[%s0 + $0x34] sm:$0xf]
  %v65 = vld [vmem:[%s0 + $0x38] sm:$0xf]
  %v66 = vld [vmem:[%s0 + $0x3c] sm:$0xf]
  %v67 = vld [vmem:[%s1] sm:$0xf]
  %v68 = vld [vmem:[%s1 + $0x4] sm:$0xf]
  %v69 = vld [vmem:[%s1 + $0x8] sm:$0xf]
  %v70 = vld [vmem:[%s1 + $0xc] sm:$0xf]
  %v71 = vld [vmem:[%s1 + $0x10] sm:$0xf]
  %v72 = vld [vmem:[%s1 + $0x14] sm:$0xf]
  %v73 = vld [vmem:[%s1 + $0x18] sm:$0xf]
  %v74 = vld [vmem:[%s1 + $0x1c] sm:$0xf]
  %v75 = vld [vmem:[%s1 + $0x20] sm:$0xf]
  %v76 = vld [vmem:[%s1 + $0x24] sm:$0xf]
  %v77 = vld [vmem:[%s1 + $0x28] sm:$0xf]
  %v78 = vld [vmem:[%s1 + $0x2c] sm:$0xf]
  %v79 = vld [vmem:[%s1 + $0x30] sm:$0xf]
  %v80 = vld [vmem:[%s1 + $0x34] sm:$0xf]
  %v81 = vld [vmem:[%s1 + $0x38] sm:$0xf]
  %v82 = vld [vmem:[%s1 + $0x3c] sm:$0xf]
  %v99 = vunpack.c.l.b16 %v51
  %v100 = vunpack.c.l.b16 %v52
  %v101 = vunpack.c.l.b16 %v53
  %v102 = vunpack.c.l.b16 %v54
  %v103 = vunpack.c.l.b16 %v55
  %v104 = vunpack.c.l.b16 %v56
  %v105 = vunpack.c.l.b16 %v57
  %v106 = vunpack.c.l.b16 %v58
  %v107 = vunpack.c.l.b16 %v59
  %v108 = vunpack.c.l.b16 %v60
  %v109 = vunpack.c.l.b16 %v61
  %v110 = vunpack.c.l.b16 %v62
  %v111 = vunpack.c.l.b16 %v63
  %v112 = vunpack.c.l.b16 %v64
  %v113 = vunpack.c.l.b16 %v65
  %v114 = vunpack.c.l.b16 %v66
  %v115 = vpack.c.b16 %v100, %v99
  %v116 = vpack.c.b16 %v102, %v101
  %v117 = vpack.c.b16 %v104, %v103
  %v118 = vpack.c.b16 %v106, %v105
  %v119 = vpack.c.b16 %v108, %v107
  %v120 = vpack.c.b16 %v110, %v109
  %v121 = vpack.c.b16 %v112, %v111
  %v122 = vpack.c.b16 %v114, %v113
  %v147 = vunpack.c.l.b16 %v67
  %v148 = vunpack.c.l.b16 %v68
  %v149 = vunpack.c.l.b16 %v69
  %v150 = vunpack.c.l.b16 %v70
  %v151 = vunpack.c.l.b16 %v71
  %v152 = vunpack.c.l.b16 %v72
  %v153 = vunpack.c.l.b16 %v73
  %v154 = vunpack.c.l.b16 %v74
  %v155 = vunpack.c.l.b16 %v75
  %v156 = vunpack.c.l.b16 %v76
  %v157 = vunpack.c.l.b16 %v77
  %v158 = vunpack.c.l.b16 %v78
  %v159 = vunpack.c.l.b16 %v79
  %v160 = vunpack.c.l.b16 %v80
  %v161 = vunpack.c.l.b16 %v81
  %v162 = vunpack.c.l.b16 %v82
  %v163 = vpack.c.b16 %v148, %v147
  %v164 = vpack.c.b16 %v150, %v149
  %v165 = vpack.c.b16 %v152, %v151
  %v166 = vpack.c.b16 %v154, %v153
  %v167 = vpack.c.b16 %v156, %v155
  %v168 = vpack.c.b16 %v158, %v157
  %v169 = vpack.c.b16 %v160, %v159
  %v170 = vpack.c.b16 %v162, %v161
  %179 = vmatprep.subr.bf16.mxu0 0
  %180 = vmatpush1.bf16.msra.mxu0 %v163
  %181 = vmatprep.subr.bf16.mxu0 0
  %182 = vmatpush1.bf16.msra.mxu0 %v164
  %183 = vmatprep.subr.bf16.mxu0 0
  %184 = vmatpush1.bf16.msra.mxu0 %v165
  %185 = vmatprep.subr.bf16.mxu0 0
  %186 = vmatpush1.bf16.msra.mxu0 %v166
  %187 = vmatprep.subr.bf16.mxu0 0
  %188 = vmatpush1.bf16.msra.mxu0 %v167
  %189 = vmatprep.subr.bf16.mxu0 0
  %190 = vmatpush1.bf16.msra.mxu0 %v168
  %191 = vmatprep.subr.bf16.mxu0 0
  %192 = vmatpush1.bf16.msra.mxu0 %v169
  %193 = vmatprep.subr.bf16.mxu0 0
  %194 = vmatpush1.bf16.msra.mxu0 %v170
  %195 = vmatprep.subr.bf16.mxu0 0
  %196 = vmatpush1.bf16.msra.mxu0 0
  %197 = vmatprep.subr.bf16.mxu0 0
  %198 = vmatpush1.bf16.msra.mxu0 0
  %199 = vmatprep.subr.bf16.mxu0 0
  %200 = vmatpush1.bf16.msra.mxu0 0
  %201 = vmatprep.subr.bf16.mxu0 0
  %202 = vmatpush1.bf16.msra.mxu0 0
  %203 = vmatprep.subr.bf16.mxu0 0
  %204 = vmatpush1.bf16.msra.mxu0 0
  %205 = vmatprep.subr.bf16.mxu0 0
  %206 = vmatpush1.bf16.msra.mxu0 0
  %207 = vmatprep.subr.bf16.mxu0 0
  %208 = vmatpush1.bf16.msra.mxu0 0
  %209 = vmatprep.subr.bf16.mxu0 0
  %210 = vmatpush1.bf16.msra.mxu0 0
  %211 = vmatprep.mubr.bf16.mxu0 0
  %212 = vmatmul.mubr.bf16.gmra.mrb[0].mxu0 %v115
  %v213 = vpop.f32.mrb[0].mxu0
  %v214 = vadd.f32 0.0, %v213
  %v215 = vpop.f32.mrb[0].mxu0
  %v216 = vpop.f32.mrb[0].mxu0
  %v217 = vadd.f32 0.0, %v216
  %v218 = vpop.f32.mrb[0].mxu0
  %219 = vmatprep.mubr.bf16.mxu0 0
  %220 = vmatmul.mubr.bf16.gmra.mrb[0].mxu0 %v116
  %v221 = vpop.f32.mrb[0].mxu0
  %v222 = vadd.f32 0.0, %v221
  %v223 = vpop.f32.mrb[0].mxu0
  %v224 = vpop.f32.mrb[0].mxu0
  %v225 = vadd.f32 0.0, %v224
  %v226 = vpop.f32.mrb[0].mxu0
  %227 = vmatprep.mubr.bf16.mxu0 0
  %228 = vmatmul.mubr.bf16.gmra.mrb[0].mxu0 %v117
  %v229 = vpop.f32.mrb[0].mxu0
  %v230 = vadd.f32 0.0, %v229
  %v231 = vpop.f32.mrb[0].mxu0
  %v232 = vpop.f32.mrb[0].mxu0
  %v233 = vadd.f32 0.0, %v232
  %v234 = vpop.f32.mrb[0].mxu0
  %235 = vmatprep.mubr.bf16.mxu0 0
  %236 = vmatmul.mubr.bf16.gmra.mrb[0].mxu0 %v118
  %v237 = vpop.f32.mrb[0].mxu0
  %v238 = vadd.f32 0.0, %v237
  %v239 = vpop.f32.mrb[0].mxu0
  %v240 = vpop.f32.mrb[0].mxu0
  %v241 = vadd.f32 0.0, %v240
  %v242 = vpop.f32.mrb[0].mxu0
  %243 = vmatprep.mubr.bf16.mxu0 0
  %244 = vmatmul.mubr.bf16.gmra.mrb[0].mxu0 %v119
  %v245 = vpop.f32.mrb[0].mxu0
  %v246 = vadd.f32 0.0, %v245
  %v247 = vpop.f32.mrb[0].mxu0
  %v248 = vpop.f32.mrb[0].mxu0
  %v249 = vadd.f32 0.0, %v248
  %v250 = vpop.f32.mrb[0].mxu0
  %251 = vmatprep.mubr.bf16.mxu0 0
  %252 = vmatmul.mubr.bf16.gmra.mrb[0].mxu0 %v120
  %v253 = vpop.f32.mrb[0].mxu0
  %v254 = vadd.f32 0.0, %v253
  %v255 = vpop.f32.mrb[0].mxu0
  %v256 = vpop.f32.mrb[0].mxu0
  %v257 = vadd.f32 0.0, %v256
  %v258 = vpop.f32.mrb[0].mxu0
  %259 = vmatprep.mubr.bf16.mxu0 0
  %260 = vmatmul.mubr.bf16.gmra.mrb[0].mxu0 %v121
  %v261 = vpop.f32.mrb[0].mxu0
  %v262 = vadd.f32 0.0, %v261
  %v263 = vpop.f32.mrb[0].mxu0
  %v264 = vpop.f32.mrb[0].mxu0
  %v265 = vadd.f32 0.0, %v264
  %v266 = vpop.f32.mrb[0].mxu0
  %267 = vmatprep.mubr.bf16.mxu0 0
  %268 = vmatmul.mubr.bf16.gmra.mrb[0].mxu0 %v122
  %v269 = vpop.f32.mrb[0].mxu0
  %v270 = vadd.f32 0.0, %v269
  %v271 = vpop.f32.mrb[0].mxu0
  %v272 = vpop.f32.mrb[0].mxu0
  %v273 = vadd.f32 0.0, %v272
  %v274 = vpop.f32.mrb[0].mxu0
  %275 = vdwg.mxu0
  %v276 = vadd.f32 %v35, %v214
  %v277 = vadd.f32 %v36, %v217
  %v278 = vadd.f32 %v37, %v222
  %v279 = vadd.f32 %v38, %v225
  %v280 = vadd.f32 %v39, %v230
  %v281 = vadd.f32 %v40, %v233
  %v282 = vadd.f32 %v41, %v238
  %v283 = vadd.f32 %v42, %v241
  %v284 = vadd.f32 %v43, %v246
  %v285 = vadd.f32 %v44, %v249
  %v286 = vadd.f32 %v45, %v254
  %v287 = vadd.f32 %v46, %v257
  %v288 = vadd.f32 %v47, %v262
  %v289 = vadd.f32 %v48, %v265
  %v290 = vadd.f32 %v49, %v270
  %v291 = vadd.f32 %v50, %v273
  %292 = vst [vmem:[#allocation2] sm:$0xff] %v276
  %293 = vst [vmem:[#allocation2 + $0x8] sm:$0xff] %v277
  %294 = vst [vmem:[#allocation2 + $0x10] sm:$0xff] %v278
  %295 = vst [vmem:[#allocation2 + $0x18] sm:$0xff] %v279
  %296 = vst [vmem:[#allocation2 + $0x20] sm:$0xff] %v280
  %297 = vst [vmem:[#allocation2 + $0x28] sm:$0xff] %v281
  %298 = vst [vmem:[#allocation2 + $0x30] sm:$0xff] %v282
  %299 = vst [vmem:[#allocation2 + $0x38] sm:$0xff] %v283
  %300 = vst [vmem:[#allocation2 + $0x40] sm:$0xff] %v284
  %301 = vst [vmem:[#allocation2 + $0x48] sm:$0xff] %v285
  %302 = vst [vmem:[#allocation2 + $0x50] sm:$0xff] %v286
  %303 = vst [vmem:[#allocation2 + $0x58] sm:$0xff] %v287
  %304 = vst [vmem:[#allocation2 + $0x60] sm:$0xff] %v288
  %305 = vst [vmem:[#allocation2 + $0x68] sm:$0xff] %v289
  %306 = vst [vmem:[#allocation2 + $0x70] sm:$0xff] %v290
  %307 = vst [vmem:[#allocation2 + $0x78] sm:$0xff] %v291
  // Predicated region
  $region18: #{_lambda_.7} parent=0 // pred_check
    %p308 = pneg %p15
  $region19: #{_lambda_.7} parent=0 // pred_check_branch
    %310 = sbr.rel (%p308) target = $region21
  $region20: #{_lambda_.7} parent=0 // pred_region
    %v311 = vld [vmem:[#allocation2] sm:$0xff]
    %v312 = vld [vmem:[#allocation2 + $0x8] sm:$0xff]
    %v313 = vld [vmem:[#allocation2 + $0x10] sm:$0xff]
    %v314 = vld [vmem:[#allocation2 + $0x18] sm:$0xff]
    %v315 = vld [vmem:[#allocation2 + $0x20] sm:$0xff]
    %v316 = vld [vmem:[#allocation2 + $0x28] sm:$0xff]
    %v317 = vld [vmem:[#allocation2 + $0x30] sm:$0xff]
    %v318 = vld [vmem:[#allocation2 + $0x38] sm:$0xff]
    %v319 = vld [vmem:[#allocation2 + $0x40] sm:$0xff]
    %v320 = vld [vmem:[#allocation2 + $0x48] sm:$0xff]
    %v321 = vld [vmem:[#allocation2 + $0x50] sm:$0xff]
    %v322 = vld [vmem:[#allocation2 + $0x58] sm:$0xff]
    %v323 = vld [vmem:[#allocation2 + $0x60] sm:$0xff]
    %v324 = vld [vmem:[#allocation2 + $0x68] sm:$0xff]
    %v325 = vld [vmem:[#allocation2 + $0x70] sm:$0xff]
    %v326 = vld [vmem:[#allocation2 + $0x78] sm:$0xff]
    %v327 = vld [vmem:[%s2] sm:$0x1]
    %v329 = vlaneseq
    %v330 = vshrl.u32 %v329, 7
    %v331 = vsub.s32 0, %v330
    %v332 = vrot.slane %v327, %v331
    %v334 = vadd.f32 %v311, %v332
    %v335 = vadd.f32 %v312, %v332
    %v336 = vadd.f32 %v313, %v332
    %v337 = vadd.f32 %v314, %v332
    %v338 = vadd.f32 %v315, %v332
    %v339 = vadd.f32 %v316, %v332
    %v340 = vadd.f32 %v317, %v332
    %v341 = vadd.f32 %v318, %v332
    %v342 = vadd.f32 %v319, %v332
    %v343 = vadd.f32 %v320, %v332
    %v344 = vadd.f32 %v321, %v332
    %v345 = vadd.f32 %v322, %v332
    %v346 = vadd.f32 %v323, %v332
    %v347 = vadd.f32 %v324, %v332
    %v348 = vadd.f32 %v325, %v332
    %v349 = vadd.f32 %v326, %v332
    %350 = vst [vmem:[%s3] sm:$0xff] %v334
    %351 = vst [vmem:[%s3 + $0x8] sm:$0xff] %v335
    %352 = vst [vmem:[%s3 + $0x10] sm:$0xff] %v336
    %353 = vst [vmem:[%s3 + $0x18] sm:$0xff] %v337
    %354 = vst [vmem:[%s3 + $0x20] sm:$0xff] %v338
    %355 = vst [vmem:[%s3 + $0x28] sm:$0xff] %v339
    %356 = vst [vmem:[%s3 + $0x30] sm:$0xff] %v340
    %357 = vst [vmem:[%s3 + $0x38] sm:$0xff] %v341
    %358 = vst [vmem:[%s3 + $0x40] sm:$0xff] %v342
    %359 = vst [vmem:[%s3 + $0x48] sm:$0xff] %v343
    %360 = vst [vmem:[%s3 + $0x50] sm:$0xff] %v344
    %361 = vst [vmem:[%s3 + $0x58] sm:$0xff] %v345
    %362 = vst [vmem:[%s3 + $0x60] sm:$0xff] %v346
    %363 = vst [vmem:[%s3 + $0x68] sm:$0xff] %v347
    %364 = vst [vmem:[%s3 + $0x70] sm:$0xff] %v348
    %365 = vst [vmem:[%s3 + $0x78] sm:$0xff] %v349
  $region21: #{_lambda_.7} parent=0 // pred_fallthru
    _
  // Predicated region
  $region22: #{_lambda_.7} parent=0 // pred_check
    _
  $region23: #{_lambda_.7} parent=0 // pred_check_branch
    %367 = sbr.rel (0) target = $region25
  $region24: #{_lambda_.7} parent=0 // pred_region
    _
  $region25: #{_lambda_.7} parent=0 // pred_fallthru
    _
  // Predicated region
  $region26: #{_lambda_.7} parent=0 // pred_check
    _
  $region27: #{_lambda_.7} parent=0 // pred_check_branch
    %369 = sbr.rel (0) target = $region29
  $region28: #{_lambda_.7} parent=0 // pred_region
    _
  $region29: #{_lambda_.7} parent=0 // pred_fallthru
    _

// kernel: _lambda_.4
$region0: #{_lambda_.4}
  #allocation0 [shape = 'u32[]', space=smem, size = 0x4, offset = 0x4, fixed_abs, tag = 'smem constant byte address 0x4 - core index']
  #allocation1 [shape = 'u32[144,128]{1,0:T(1,128)}', space=vmem, size = 0x12000, scoped, tag = 'internal scratch']
  #allocation2 [shape = 'f32[128,128]{1,0:T(8,128)}', space=vmem, size = 0x10000, scoped, tag = 'scratch operand']
  %s0 = inlined_call_operand.vmem [shape: bf16[128,128], index: 0, kind: input, shape index: {}]
  %s1 = inlined_call_operand.vmem [shape: bf16[128,128], index: 1, kind: input, shape index: {}]
  %s2 = inlined_call_operand.vmem [shape: f32[1,128], index: 2, kind: input, shape index: {}]
  %s3 = inlined_call_operand.vmem [shape: bf16[128,128], index: 3, kind: output, shape index: {}]
  %s4 = sld [smem:[#allocation0]]
  $region30: #{_lambda_.4} parent=0
    _
  %s6 = ssub.s32 1, %s4
  %s7 = scalar_select 0, %s6, %s4
  // Predicated region
  $region2: #{_lambda_.4} parent=0 // pred_check
    _
  $region3: #{_lambda_.4} parent=0 // pred_check_branch
    %9 = sbr.rel (0) target = $region5
  $region4: #{_lambda_.4} parent=0 // pred_region
    _
  $region5: #{_lambda_.4} parent=0 // pred_fallthru
    _
  // Predicated region
  $region6: #{_lambda_.4} parent=0 // pred_check
    _
  $region7: #{_lambda_.4} parent=0 // pred_check_branch
    %11 = sbr.rel (0) target = $region9
  $region8: #{_lambda_.4} parent=0 // pred_region
    _
  $region9: #{_lambda_.4} parent=0 // pred_fallthru
    _
  // Predicated region
  $region10: #{_lambda_.4} parent=0 // pred_check
    _
  $region11: #{_lambda_.4} parent=0 // pred_check_branch
    %13 = sbr.rel (0) target = $region13
  $region12: #{_lambda_.4} parent=0 // pred_region
    _
  $region13: #{_lambda_.4} parent=0 // pred_fallthru
    _
  %p15 = scmp.eq.s32.totalorder 0, 0
  // Predicated region
  $region14: #{_lambda_.4} parent=0 // pred_check
    %p16 = pneg %p15
  $region15: #{_lambda_.4} parent=0 // pred_check_branch
    %18 = sbr.rel (%p16) target = $region17
  $region16: #{_lambda_.4} parent=0 // pred_region
    %19 = vst [vmem:[#allocation2] sm:$0xff] 0.0
    %20 = vst [vmem:[#allocation2 + $0x8] sm:$0xff] 0.0
    %21 = vst [vmem:[#allocation2 + $0x10] sm:$0xff] 0.0
    %22 = vst [vmem:[#allocation2 + $0x18] sm:$0xff] 0.0
    %23 = vst [vmem:[#allocation2 + $0x20] sm:$0xff] 0.0
    %24 = vst [vmem:[#allocation2 + $0x28] sm:$0xff] 0.0
    %25 = vst [vmem:[#allocation2 + $0x30] sm:$0xff] 0.0
    %26 = vst [vmem:[#allocation2 + $0x38] sm:$0xff] 0.0
    %27 = vst [vmem:[#allocation2 + $0x40] sm:$0xff] 0.0
    %28 = vst [vmem:[#allocation2 + $0x48] sm:$0xff] 0.0
    %29 = vst [vmem:[#allocation2 + $0x50] sm:$0xff] 0.0
    %30 = vst [vmem:[#allocation2 + $0x58] sm:$0xff] 0.0
    %31 = vst [vmem:[#allocation2 + $0x60] sm:$0xff] 0.0
    %32 = vst [vmem:[#allocation2 + $0x68] sm:$0xff] 0.0
    %33 = vst [vmem:[#allocation2 + $0x70] sm:$0xff] 0.0
    %34 = vst [vmem:[#allocation2 + $0x78] sm:$0xff] 0.0
  $region17: #{_lambda_.4} parent=0 // pred_fallthru
    _
  %v35 = vld [vmem:[#allocation2] sm:$0xff]
  %v36 = vld [vmem:[#allocation2 + $0x8] sm:$0xff]
  %v37 = vld [vmem:[#allocation2 + $0x10] sm:$0xff]
  %v38 = vld [vmem:[#allocation2 + $0x18] sm:$0xff]
  %v39 = vld [vmem:[#allocation2 + $0x20] sm:$0xff]
  %v40 = vld [vmem:[#allocation2 + $0x28] sm:$0xff]
  %v41 = vld [vmem:[#allocation2 + $0x30] sm:$0xff]
  %v42 = vld [vmem:[#allocation2 + $0x38] sm:$0xff]
  %v43 = vld [vmem:[#allocation2 + $0x40] sm:$0xff]
  %v44 = vld [vmem:[#allocation2 + $0x48] sm:$0xff]
  %v45 = vld [vmem:[#allocation2 + $0x50] sm:$0xff]
  %v46 = vld [vmem:[#allocation2 + $0x58] sm:$0xff]
  %v47 = vld [vmem:[#allocation2 + $0x60] sm:$0xff]
  %v48 = vld [vmem:[#allocation2 + $0x68] sm:$0xff]
  %v49 = vld [vmem:[#allocation2 + $0x70] sm:$0xff]
  %v50 = vld [vmem:[#allocation2 + $0x78] sm:$0xff]
  %v51 = vld [vmem:[%s0] sm:$0xf]
  %v52 = vld [vmem:[%s0 + $0x4] sm:$0xf]
  %v53 = vld [vmem:[%s0 + $0x8] sm:$0xf]
  %v54 = vld [vmem:[%s0 + $0xc] sm:$0xf]
  %v55 = vld [vmem:[%s0 + $0x10] sm:$0xf]
  %v56 = vld [vmem:[%s0 + $0x14] sm:$0xf]
  %v57 = vld [vmem:[%s0 + $0x18] sm:$0xf]
  %v58 = vld [vmem:[%s0 + $0x1c] sm:$0xf]
  %v59 = vld [vmem:[%s0 + $0x20] sm:$0xf]
  %v60 = vld [vmem:[%s0 + $0x24] sm:$0xf]
  %v61 = vld [vmem:[%s0 + $0x28] sm:$0xf]
  %v62 = vld [vmem:[%s0 + $0x2c] sm:$0xf]
  %v63 = vld [vmem:[%s0 + $0x30] sm:$0xf]
  %v64 = vld [vmem:[%s0 + $0x34] sm:$0xf]
  %v65 = vld [vmem:[%s0 + $0x38] sm:$0xf]
  %v66 = vld [vmem:[%s0 + $0x3c] sm:$0xf]
  %v67 = vld [vmem:[%s1] sm:$0xf]
  %v68 = vld [vmem:[%s1 + $0x4] sm:$0xf]
  %v69 = vld [vmem:[%s1 + $0x8] sm:$0xf]
  %v70 = vld [vmem:[%s1 + $0xc] sm:$0xf]
  %v71 = vld [vmem:[%s1 + $0x10] sm:$0xf]
  %v72 = vld [vmem:[%s1 + $0x14] sm:$0xf]
  %v73 = vld [vmem:[%s1 + $0x18] sm:$0xf]
  %v74 = vld [vmem:[%s1 + $0x1c] sm:$0xf]
  %v75 = vld [vmem:[%s1 + $0x20] sm:$0xf]
  %v76 = vld [vmem:[%s1 + $0x24] sm:$0xf]
  %v77 = vld [vmem:[%s1 + $0x28] sm:$0xf]
  %v78 = vld [vmem:[%s1 + $0x2c] sm:$0xf]
  %v79 = vld [vmem:[%s1 + $0x30] sm:$0xf]
  %v80 = vld [vmem:[%s1 + $0x34] sm:$0xf]
  %v81 = vld [vmem:[%s1 + $0x38] sm:$0xf]
  %v82 = vld [vmem:[%s1 + $0x3c] sm:$0xf]
  %v99 = vunpack.c.l.b16 %v51
  %v100 = vunpack.c.l.b16 %v52
  %v101 = vunpack.c.l.b16 %v53
  %v102 = vunpack.c.l.b16 %v54
  %v103 = vunpack.c.l.b16 %v55
  %v104 = vunpack.c.l.b16 %v56
  %v105 = vunpack.c.l.b16 %v57
  %v106 = vunpack.c.l.b16 %v58
  %v107 = vunpack.c.l.b16 %v59
  %v108 = vunpack.c.l.b16 %v60
  %v109 = vunpack.c.l.b16 %v61
  %v110 = vunpack.c.l.b16 %v62
  %v111 = vunpack.c.l.b16 %v63
  %v112 = vunpack.c.l.b16 %v64
  %v113 = vunpack.c.l.b16 %v65
  %v114 = vunpack.c.l.b16 %v66
  %v115 = vpack.c.b16 %v100, %v99
  %v116 = vpack.c.b16 %v102, %v101
  %v117 = vpack.c.b16 %v104, %v103
  %v118 = vpack.c.b16 %v106, %v105
  %v119 = vpack.c.b16 %v108, %v107
  %v120 = vpack.c.b16 %v110, %v109
  %v121 = vpack.c.b16 %v112, %v111
  %v122 = vpack.c.b16 %v114, %v113
  %v147 = vunpack.c.l.b16 %v67
  %v148 = vunpack.c.l.b16 %v68
  %v149 = vunpack.c.l.b16 %v69
  %v150 = vunpack.c.l.b16 %v70
  %v151 = vunpack.c.l.b16 %v71
  %v152 = vunpack.c.l.b16 %v72
  %v153 = vunpack.c.l.b16 %v73
  %v154 = vunpack.c.l.b16 %v74
  %v155 = vunpack.c.l.b16 %v75
  %v156 = vunpack.c.l.b16 %v76
  %v157 = vunpack.c.l.b16 %v77
  %v158 = vunpack.c.l.b16 %v78
  %v159 = vunpack.c.l.b16 %v79
  %v160 = vunpack.c.l.b16 %v80
  %v161 = vunpack.c.l.b16 %v81
  %v162 = vunpack.c.l.b16 %v82
  %v163 = vpack.c.b16 %v148, %v147
  %v164 = vpack.c.b16 %v150, %v149
  %v165 = vpack.c.b16 %v152, %v151
  %v166 = vpack.c.b16 %v154, %v153
  %v167 = vpack.c.b16 %v156, %v155
  %v168 = vpack.c.b16 %v158, %v157
  %v169 = vpack.c.b16 %v160, %v159
  %v170 = vpack.c.b16 %v162, %v161
  %179 = vmatprep.subr.bf16.mxu0 0
  %180 = vmatpush1.bf16.msra.mxu0 %v163
  %181 = vmatprep.subr.bf16.mxu0 0
  %182 = vmatpush1.bf16.msra.mxu0 %v164
  %183 = vmatprep.subr.bf16.mxu0 0
  %184 = vmatpush1.bf16.msra.mxu0 %v165
  %185 = vmatprep.subr.bf16.mxu0 0
  %186 = vmatpush1.bf16.msra.mxu0 %v166
  %187 = vmatprep.subr.bf16.mxu0 0
  %188 = vmatpush1.bf16.msra.mxu0 %v167
  %189 = vmatprep.subr.bf16.mxu0 0
  %190 = vmatpush1.bf16.msra.mxu0 %v168
  %191 = vmatprep.subr.bf16.mxu0 0
  %192 = vmatpush1.bf16.msra.mxu0 %v169
  %193 = vmatprep.subr.bf16.mxu0 0
  %194 = vmatpush1.bf16.msra.mxu0 %v170
  %195 = vmatprep.subr.bf16.mxu0 0
  %196 = vmatpush1.bf16.msra.mxu0 0
  %197 = vmatprep.subr.bf16.mxu0 0
  %198 = vmatpush1.bf16.msra.mxu0 0
  %199 = vmatprep.subr.bf16.mxu0 0
  %200 = vmatpush1.bf16.msra.mxu0 0
  %201 = vmatprep.subr.bf16.mxu0 0
  %202 = vmatpush1.bf16.msra.mxu0 0
  %203 = vmatprep.subr.bf16.mxu0 0
  %204 = vmatpush1.bf16.msra.mxu0 0
  %205 = vmatprep.subr.bf16.mxu0 0
  %206 = vmatpush1.bf16.msra.mxu0 0
  %207 = vmatprep.subr.bf16.mxu0 0
  %208 = vmatpush1.bf16.msra.mxu0 0
  %209 = vmatprep.subr.bf16.mxu0 0
  %210 = vmatpush1.bf16.msra.mxu0 0
  %211 = vmatprep.mubr.bf16.mxu0 0
  %212 = vmatmul.mubr.bf16.gmra.mrb[0].mxu0 %v115
  %v213 = vpop.f32.mrb[0].mxu0
  %v214 = vadd.f32 0.0, %v213
  %v215 = vpop.f32.mrb[0].mxu0
  %v216 = vpop.f32.mrb[0].mxu0
  %v217 = vadd.f32 0.0, %v216
  %v218 = vpop.f32.mrb[0].mxu0
  %219 = vmatprep.mubr.bf16.mxu0 0
  %220 = vmatmul.mubr.bf16.gmra.mrb[0].mxu0 %v116
  %v221 = vpop.f32.mrb[0].mxu0
  %v222 = vadd.f32 0.0, %v221
  %v223 = vpop.f32.mrb[0].mxu0
  %v224 = vpop.f32.mrb[0].mxu0
  %v225 = vadd.f32 0.0, %v224
  %v226 = vpop.f32.mrb[0].mxu0
  %227 = vmatprep.mubr.bf16.mxu0 0
  %228 = vmatmul.mubr.bf16.gmra.mrb[0].mxu0 %v117
  %v229 = vpop.f32.mrb[0].mxu0
  %v230 = vadd.f32 0.0, %v229
  %v231 = vpop.f32.mrb[0].mxu0
  %v232 = vpop.f32.mrb[0].mxu0
  %v233 = vadd.f32 0.0, %v232
  %v234 = vpop.f32.mrb[0].mxu0
  %235 = vmatprep.mubr.bf16.mxu0 0
  %236 = vmatmul.mubr.bf16.gmra.mrb[0].mxu0 %v118
  %v237 = vpop.f32.mrb[0].mxu0
  %v238 = vadd.f32 0.0, %v237
  %v239 = vpop.f32.mrb[0].mxu0
  %v240 = vpop.f32.mrb[0].mxu0
  %v241 = vadd.f32 0.0, %v240
  %v242 = vpop.f32.mrb[0].mxu0
  %243 = vmatprep.mubr.bf16.mxu0 0
  %244 = vmatmul.mubr.bf16.gmra.mrb[0].mxu0 %v119
  %v245 = vpop.f32.mrb[0].mxu0
  %v246 = vadd.f32 0.0, %v245
  %v247 = vpop.f32.mrb[0].mxu0
  %v248 = vpop.f32.mrb[0].mxu0
  %v249 = vadd.f32 0.0, %v248
  %v250 = vpop.f32.mrb[0].mxu0
  %251 = vmatprep.mubr.bf16.mxu0 0
  %252 = vmatmul.mubr.bf16.gmra.mrb[0].mxu0 %v120
  %v253 = vpop.f32.mrb[0].mxu0
  %v254 = vadd.f32 0.0, %v253
  %v255 = vpop.f32.mrb[0].mxu0
  %v256 = vpop.f32.mrb[0].mxu0
  %v257 = vadd.f32 0.0, %v256
  %v258 = vpop.f32.mrb[0].mxu0
  %259 = vmatprep.mubr.bf16.mxu0 0
  %260 = vmatmul.mubr.bf16.gmra.mrb[0].mxu0 %v121
  %v261 = vpop.f32.mrb[0].mxu0
  %v262 = vadd.f32 0.0, %v261
  %v263 = vpop.f32.mrb[0].mxu0
  %v264 = vpop.f32.mrb[0].mxu0
  %v265 = vadd.f32 0.0, %v264
  %v266 = vpop.f32.mrb[0].mxu0
  %267 = vmatprep.mubr.bf16.mxu0 0
  %268 = vmatmul.mubr.bf16.gmra.mrb[0].mxu0 %v122
  %v269 = vpop.f32.mrb[0].mxu0
  %v270 = vadd.f32 0.0, %v269
  %v271 = vpop.f32.mrb[0].mxu0
  %v272 = vpop.f32.mrb[0].mxu0
  %v273 = vadd.f32 0.0, %v272
  %v274 = vpop.f32.mrb[0].mxu0
  %275 = vdwg.mxu0
  %v276 = vadd.f32 %v35, %v214
  %v277 = vadd.f32 %v36, %v217
  %v278 = vadd.f32 %v37, %v222
  %v279 = vadd.f32 %v38, %v225
  %v280 = vadd.f32 %v39, %v230
  %v281 = vadd.f32 %v40, %v233
  %v282 = vadd.f32 %v41, %v238
  %v283 = vadd.f32 %v42, %v241
  %v284 = vadd.f32 %v43, %v246
  %v285 = vadd.f32 %v44, %v249
  %v286 = vadd.f32 %v45, %v254
  %v287 = vadd.f32 %v46, %v257
  %v288 = vadd.f32 %v47, %v262
  %v289 = vadd.f32 %v48, %v265
  %v290 = vadd.f32 %v49, %v270
  %v291 = vadd.f32 %v50, %v273
  %292 = vst [vmem:[#allocation2] sm:$0xff] %v276
  %293 = vst [vmem:[#allocation2 + $0x8] sm:$0xff] %v277
  %294 = vst [vmem:[#allocation2 + $0x10] sm:$0xff] %v278
  %295 = vst [vmem:[#allocation2 + $0x18] sm:$0xff] %v279
  %296 = vst [vmem:[#allocation2 + $0x20] sm:$0xff] %v280
  %297 = vst [vmem:[#allocation2 + $0x28] sm:$0xff] %v281
  %298 = vst [vmem:[#allocation2 + $0x30] sm:$0xff] %v282
  %299 = vst [vmem:[#allocation2 + $0x38] sm:$0xff] %v283
  %300 = vst [vmem:[#allocation2 + $0x40] sm:$0xff] %v284
  %301 = vst [vmem:[#allocation2 + $0x48] sm:$0xff] %v285
  %302 = vst [vmem:[#allocation2 + $0x50] sm:$0xff] %v286
  %303 = vst [vmem:[#allocation2 + $0x58] sm:$0xff] %v287
  %304 = vst [vmem:[#allocation2 + $0x60] sm:$0xff] %v288
  %305 = vst [vmem:[#allocation2 + $0x68] sm:$0xff] %v289
  %306 = vst [vmem:[#allocation2 + $0x70] sm:$0xff] %v290
  %307 = vst [vmem:[#allocation2 + $0x78] sm:$0xff] %v291
  // Predicated region
  $region18: #{_lambda_.4} parent=0 // pred_check
    %p308 = pneg %p15
  $region19: #{_lambda_.4} parent=0 // pred_check_branch
    %310 = sbr.rel (%p308) target = $region21
  $region20: #{_lambda_.4} parent=0 // pred_region
    %v311 = vld [vmem:[#allocation2] sm:$0xff]
    %v312 = vld [vmem:[#allocation2 + $0x8] sm:$0xff]
    %v313 = vld [vmem:[#allocation2 + $0x10] sm:$0xff]
    %v314 = vld [vmem:[#allocation2 + $0x18] sm:$0xff]
    %v315 = vld [vmem:[#allocation2 + $0x20] sm:$0xff]
    %v316 = vld [vmem:[#allocation2 + $0x28] sm:$0xff]
    %v317 = vld [vmem:[#allocation2 + $0x30] sm:$0xff]
    %v318 = vld [vmem:[#allocation2 + $0x38] sm:$0xff]
    %v319 = vld [vmem:[#allocation2 + $0x40] sm:$0xff]
    %v320 = vld [vmem:[#allocation2 + $0x48] sm:$0xff]
    %v321 = vld [vmem:[#allocation2 + $0x50] sm:$0xff]
    %v322 = vld [vmem:[#allocation2 + $0x58] sm:$0xff]
    %v323 = vld [vmem:[#allocation2 + $0x60] sm:$0xff]
    %v324 = vld [vmem:[#allocation2 + $0x68] sm:$0xff]
    %v325 = vld [vmem:[#allocation2 + $0x70] sm:$0xff]
    %v326 = vld [vmem:[#allocation2 + $0x78] sm:$0xff]
    %v327 = vld [vmem:[%s2] sm:$0x1]
    %v329 = vlaneseq
    %v330 = vshrl.u32 %v329, 7
    %v331 = vsub.s32 0, %v330
    %v332 = vrot.slane %v327, %v331
    %v334 = vadd.f32 %v311, %v332
    %v335 = vadd.f32 %v312, %v332
    %v336 = vadd.f32 %v313, %v332
    %v337 = vadd.f32 %v314, %v332
    %v338 = vadd.f32 %v315, %v332
    %v339 = vadd.f32 %v316, %v332
    %v340 = vadd.f32 %v317, %v332
    %v341 = vadd.f32 %v318, %v332
    %v342 = vadd.f32 %v319, %v332
    %v343 = vadd.f32 %v320, %v332
    %v344 = vadd.f32 %v321, %v332
    %v345 = vadd.f32 %v322, %v332
    %v346 = vadd.f32 %v323, %v332
    %v347 = vadd.f32 %v324, %v332
    %v348 = vadd.f32 %v325, %v332
    %v349 = vadd.f32 %v326, %v332
    %v350 = vpack.c.bf16 %v335, %v334
    %v351 = vpack.c.bf16 %v337, %v336
    %v352 = vpack.c.bf16 %v339, %v338
    %v353 = vpack.c.bf16 %v341, %v340
    %v354 = vpack.c.bf16 %v343, %v342
    %v355 = vpack.c.bf16 %v345, %v344
    %v356 = vpack.c.bf16 %v347, %v346
    %v357 = vpack.c.bf16 %v349, %v348
    %v366 = vunpack.c.l.b16 %v350
    %v367 = vunpack.c.h.b16 %v350
    %v368 = vunpack.c.l.b16 %v351
    %v369 = vunpack.c.h.b16 %v351
    %v370 = vunpack.c.l.b16 %v352
    %v371 = vunpack.c.h.b16 %v352
    %v372 = vunpack.c.l.b16 %v353
    %v373 = vunpack.c.h.b16 %v353
    %v374 = vunpack.c.l.b16 %v354
    %v375 = vunpack.c.h.b16 %v354
    %v376 = vunpack.c.l.b16 %v355
    %v377 = vunpack.c.h.b16 %v355
    %v378 = vunpack.c.l.b16 %v356
    %v379 = vunpack.c.h.b16 %v356
    %v380 = vunpack.c.l.b16 %v357
    %v381 = vunpack.c.h.b16 %v357
    %v382 = vpack.c.b16 %v366, %v366
    %v383 = vpack.c.b16 %v367, %v367
    %v384 = vpack.c.b16 %v368, %v368
    %v385 = vpack.c.b16 %v369, %v369
    %v386 = vpack.c.b16 %v370, %v370
    %v387 = vpack.c.b16 %v371, %v371
    %v388 = vpack.c.b16 %v372, %v372
    %v389 = vpack.c.b16 %v373, %v373
    %v390 = vpack.c.b16 %v374, %v374
    %v391 = vpack.c.b16 %v375, %v375
    %v392 = vpack.c.b16 %v376, %v376
    %v393 = vpack.c.b16 %v377, %v377
    %v394 = vpack.c.b16 %v378, %v378
    %v395 = vpack.c.b16 %v379, %v379
    %v396 = vpack.c.b16 %v380, %v380
    %v397 = vpack.c.b16 %v381, %v381
    %414 = vst [vmem:[%s3] sm:$0xf] %v382
    %415 = vst [vmem:[%s3 + $0x4] sm:$0xf] %v383
    %416 = vst [vmem:[%s3 + $0x8] sm:$0xf] %v384
    %417 = vst [vmem:[%s3 + $0xc] sm:$0xf] %v385
    %418 = vst [vmem:[%s3 + $0x10] sm:$0xf] %v386
    %419 = vst [vmem:[%s3 + $0x14] sm:$0xf] %v387
    %420 = vst [vmem:[%s3 + $0x18] sm:$0xf] %v388
    %421 = vst [vmem:[%s3 + $0x1c] sm:$0xf] %v389
    %422 = vst [vmem:[%s3 + $0x20] sm:$0xf] %v390
    %423 = vst [vmem:[%s3 + $0x24] sm:$0xf] %v391
    %424 = vst [vmem:[%s3 + $0x28] sm:$0xf] %v392
    %425 = vst [vmem:[%s3 + $0x2c] sm:$0xf] %v393
    %426 = vst [vmem:[%s3 + $0x30] sm:$0xf] %v394
    %427 = vst [vmem:[%s3 + $0x34] sm:$0xf] %v395
    %428 = vst [vmem:[%s3 + $0x38] sm:$0xf] %v396
    %429 = vst [vmem:[%s3 + $0x3c] sm:$0xf] %v397
  $region21: #{_lambda_.4} parent=0 // pred_fallthru
    _
  // Predicated region
  $region22: #{_lambda_.4} parent=0 // pred_check
    _
  $region23: #{_lambda_.4} parent=0 // pred_check_branch
    %431 = sbr.rel (0) target = $region25
  $region24: #{_lambda_.4} parent=0 // pred_region
    _
  $region25: #{_lambda_.4} parent=0 // pred_fallthru
    _
  // Predicated region
  $region26: #{_lambda_.4} parent=0 // pred_check
    _
  $region27: #{_lambda_.4} parent=0 // pred_check_branch
    %433 = sbr.rel (0) target = $region29
  $region28: #{_lambda_.4} parent=0 // pred_region
    _
  $region29: #{_lambda_.4} parent=0 // pred_fallthru
    _

// kernel: _lambda_.6
$region0: #{_lambda_.6}
  #allocation0 [shape = 'u32[]', space=smem, size = 0x4, offset = 0x4, fixed_abs, tag = 'smem constant byte address 0x4 - core index']
  #allocation1 [shape = 'u32[144,128]{1,0:T(1,128)}', space=vmem, size = 0x12000, scoped, tag = 'internal scratch']
  #allocation2 [shape = 'bf16[1,16,128]{2,1,0:T(16,128)(2,1)}', space=vmem, size = 0x1000, scoped, tag = 'scratch operand']
  %s0 = inlined_call_operand.vmem [shape: bf16[8,16,128], index: 0, kind: input, shape index: {}]
  %s1 = inlined_call_operand.vmem [shape: bf16[128,128], index: 1, kind: input, shape index: {}]
  %s2 = inlined_call_operand.vmem [shape: bf16[16,128], index: 2, kind: input, shape index: {}]
  %s3 = inlined_call_operand.vmem [shape: bf16[8,16,128], index: 3, kind: output, shape index: {}]
  %s4 = sld [smem:[#allocation0]]
  $region26: #{_lambda_.6} parent=0
    _
  %s6 = ssub.s32 1, %s4
  %s7 = scalar_select 0, %s6, %s4
  // Predicated region
  $region2: #{_lambda_.6} parent=0 // pred_check
    _
  $region3: #{_lambda_.6} parent=0 // pred_check_branch
    %9 = sbr.rel (0) target = $region5
  $region4: #{_lambda_.6} parent=0 // pred_region
    _
  $region5: #{_lambda_.6} parent=0 // pred_fallthru
    _
  // Predicated region
  $region6: #{_lambda_.6} parent=0 // pred_check
    _
  $region7: #{_lambda_.6} parent=0 // pred_check_branch
    %11 = sbr.rel (0) target = $region9
  $region8: #{_lambda_.6} parent=0 // pred_region
    _
  $region9: #{_lambda_.6} parent=0 // pred_fallthru
    _
  // Predicated region
  $region10: #{_lambda_.6} parent=0 // pred_check
    _
  $region11: #{_lambda_.6} parent=0 // pred_check_branch
    %13 = sbr.rel (0) target = $region13
  $region12: #{_lambda_.6} parent=0 // pred_region
    _
  $region13: #{_lambda_.6} parent=0 // pred_fallthru
    _
  %p15 = scmp.eq.s32.totalorder 0, 0
  // Predicated region
  $region14: #{_lambda_.6} parent=0 // pred_check
    %p16 = pneg %p15
  $region15: #{_lambda_.6} parent=0 // pred_check_branch
    %18 = sbr.rel (%p16) target = $region17
  $region16: #{_lambda_.6} parent=0 // pred_region
    %v19 = vld [vmem:[%s2] sm:$0xf]
    %v20 = vld [vmem:[%s2 + $0x4] sm:$0xf]
    %v23 = vunpack.c.l.b16 %v19
    %v24 = vunpack.c.l.b16 %v20
    %v25 = vpack.c.b16 %v24, %v23
    %27 = vst [vmem:[#allocation2] sm:$0xff] %v25
  $region17: #{_lambda_.6} parent=0 // pred_fallthru
    _
  %v28 = vld [vmem:[%s1] sm:$0xf]
  %v29 = vld [vmem:[%s1 + $0x4] sm:$0xf]
  %v30 = vld [vmem:[%s1 + $0x8] sm:$0xf]
  %v31 = vld [vmem:[%s1 + $0xc] sm:$0xf]
  %v32 = vld [vmem:[%s1 + $0x10] sm:$0xf]
  %v33 = vld [vmem:[%s1 + $0x14] sm:$0xf]
  %v34 = vld [vmem:[%s1 + $0x18] sm:$0xf]
  %v35 = vld [vmem:[%s1 + $0x1c] sm:$0xf]
  %v36 = vld [vmem:[%s1 + $0x20] sm:$0xf]
  %v37 = vld [vmem:[%s1 + $0x24] sm:$0xf]
  %v38 = vld [vmem:[%s1 + $0x28] sm:$0xf]
  %v39 = vld [vmem:[%s1 + $0x2c] sm:$0xf]
  %v40 = vld [vmem:[%s1 + $0x30] sm:$0xf]
  %v41 = vld [vmem:[%s1 + $0x34] sm:$0xf]
  %v42 = vld [vmem:[%s1 + $0x38] sm:$0xf]
  %v43 = vld [vmem:[%s1 + $0x3c] sm:$0xf]
  %v44 = vld [vmem:[#allocation2] sm:$0xff]
  %v45 = vld [vmem:[%s0] sm:$0xf]
  %v46 = vld [vmem:[%s0 + $0x4] sm:$0xf]
  %v47 = vunpack.c.l.bf16 %v45
  %v48 = vunpack.c.l.bf16 %v46
  %v65 = vunpack.c.l.b16 %v28
  %v66 = vunpack.c.l.b16 %v29
  %v67 = vunpack.c.l.b16 %v30
  %v68 = vunpack.c.l.b16 %v31
  %v69 = vunpack.c.l.b16 %v32
  %v70 = vunpack.c.l.b16 %v33
  %v71 = vunpack.c.l.b16 %v34
  %v72 = vunpack.c.l.b16 %v35
  %v73 = vunpack.c.l.b16 %v36
  %v74 = vunpack.c.l.b16 %v37
  %v75 = vunpack.c.l.b16 %v38
  %v76 = vunpack.c.l.b16 %v39
  %v77 = vunpack.c.l.b16 %v40
  %v78 = vunpack.c.l.b16 %v41
  %v79 = vunpack.c.l.b16 %v42
  %v80 = vunpack.c.l.b16 %v43
  %v81 = vpack.c.b16 %v66, %v65
  %v82 = vpack.c.b16 %v68, %v67
  %v83 = vpack.c.b16 %v70, %v69
  %v84 = vpack.c.b16 %v72, %v71
  %v85 = vpack.c.b16 %v74, %v73
  %v86 = vpack.c.b16 %v76, %v75
  %v87 = vpack.c.b16 %v78, %v77
  %v88 = vpack.c.b16 %v80, %v79
  %97 = vmatprep.subr.bf16.mxu0 0
  %98 = vmatpush1.bf16.msra.mxu0 %v81
  %99 = vmatprep.subr.bf16.mxu0 0
  %100 = vmatpush1.bf16.msra.mxu0 %v82
  %101 = vmatprep.subr.bf16.mxu0 0
  %102 = vmatpush1.bf16.msra.mxu0 %v83
  %103 = vmatprep.subr.bf16.mxu0 0
  %104 = vmatpush1.bf16.msra.mxu0 %v84
  %105 = vmatprep.subr.bf16.mxu0 0
  %106 = vmatpush1.bf16.msra.mxu0 %v85
  %107 = vmatprep.subr.bf16.mxu0 0
  %108 = vmatpush1.bf16.msra.mxu0 %v86
  %109 = vmatprep.subr.bf16.mxu0 0
  %110 = vmatpush1.bf16.msra.mxu0 %v87
  %111 = vmatprep.subr.bf16.mxu0 0
  %112 = vmatpush1.bf16.msra.mxu0 %v88
  %113 = vmatprep.subr.bf16.mxu0 0
  %114 = vmatpush1.bf16.msra.mxu0 0
  %115 = vmatprep.subr.bf16.mxu0 0
  %116 = vmatpush1.bf16.msra.mxu0 0
  %117 = vmatprep.subr.bf16.mxu0 0
  %118 = vmatpush1.bf16.msra.mxu0 0
  %119 = vmatprep.subr.bf16.mxu0 0
  %120 = vmatpush1.bf16.msra.mxu0 0
  %121 = vmatprep.subr.bf16.mxu0 0
  %122 = vmatpush1.bf16.msra.mxu0 0
  %123 = vmatprep.subr.bf16.mxu0 0
  %124 = vmatpush1.bf16.msra.mxu0 0
  %125 = vmatprep.subr.bf16.mxu0 0
  %126 = vmatpush1.bf16.msra.mxu0 0
  %127 = vmatprep.subr.bf16.mxu0 0
  %128 = vmatpush1.bf16.msra.mxu0 0
  %129 = vmatprep.mubr.bf16.mxu0 0
  %130 = vmatmul.mubr.bf16.gmra.mrb[0].mxu0 %v44
  %v131 = vpop.f32.mrb[0].mxu0
  %v132 = vadd.f32 0.0, %v131
  %v133 = vpop.f32.mrb[0].mxu0
  %v134 = vpop.f32.mrb[0].mxu0
  %v135 = vadd.f32 0.0, %v134
  %v136 = vpop.f32.mrb[0].mxu0
  %137 = vdwg.mxu0
  %v138 = vadd.f32 %v47, %v132
  %v139 = vadd.f32 %v48, %v135
  %v140 = vtanh.pop %v138
  %v141 = vtanh.pop %v139
  %v142 = vpack.c.bf16 %v141, %v140
  %v144 = vunpack.c.l.b16 %v142
  %v145 = vunpack.c.h.b16 %v142
  %v146 = vpack.c.b16 %v144, %v144
  %v147 = vpack.c.b16 %v145, %v145
  %150 = vst [vmem:[%s3] sm:$0xf] %v146
  %151 = vst [vmem:[%s3 + $0x4] sm:$0xf] %v147
  %s152 = scalar_lea.vmem %s0, 8
  %v153 = vld [vmem:[%s152] sm:$0xf]
  %v154 = vld [vmem:[%s152 + $0x4] sm:$0xf]
  %v155 = vunpack.c.l.bf16 %v153
  %v156 = vunpack.c.l.bf16 %v154
  %157 = vmatprep.subr.bf16.mxu0 0
  %158 = vmatpush1.bf16.msra.mxu0 %v81
  %159 = vmatprep.subr.bf16.mxu0 0
  %160 = vmatpush1.bf16.msra.mxu0 %v82
  %161 = vmatprep.subr.bf16.mxu0 0
  %162 = vmatpush1.bf16.msra.mxu0 %v83
  %163 = vmatprep.subr.bf16.mxu0 0
  %164 = vmatpush1.bf16.msra.mxu0 %v84
  %165 = vmatprep.subr.bf16.mxu0 0
  %166 = vmatpush1.bf16.msra.mxu0 %v85
  %167 = vmatprep.subr.bf16.mxu0 0
  %168 = vmatpush1.bf16.msra.mxu0 %v86
  %169 = vmatprep.subr.bf16.mxu0 0
  %170 = vmatpush1.bf16.msra.mxu0 %v87
  %171 = vmatprep.subr.bf16.mxu0 0
  %172 = vmatpush1.bf16.msra.mxu0 %v88
  %173 = vmatprep.subr.bf16.mxu0 0
  %174 = vmatpush1.bf16.msra.mxu0 0
  %175 = vmatprep.subr.bf16.mxu0 0
  %176 = vmatpush1.bf16.msra.mxu0 0
  %177 = vmatprep.subr.bf16.mxu0 0
  %178 = vmatpush1.bf16.msra.mxu0 0
  %179 = vmatprep.subr.bf16.mxu0 0
  %180 = vmatpush1.bf16.msra.mxu0 0
  %181 = vmatprep.subr.bf16.mxu0 0
  %182 = vmatpush1.bf16.msra.mxu0 0
  %183 = vmatprep.subr.bf16.mxu0 0
  %184 = vmatpush1.bf16.msra.mxu0 0
  %185 = vmatprep.subr.bf16.mxu0 0
  %186 = vmatpush1.bf16.msra.mxu0 0
  %187 = vmatprep.subr.bf16.mxu0 0
  %188 = vmatpush1.bf16.msra.mxu0 0
  %189 = vmatprep.mubr.bf16.mxu0 0
  %190 = vmatmul.mubr.bf16.gmra.mrb[0].mxu0 %v142
  %v191 = vpop.f32.mrb[0].mxu0
  %v192 = vadd.f32 0.0, %v191
  %v193 = vpop.f32.mrb[0].mxu0
  %v194 = vpop.f32.mrb[0].mxu0
  %v195 = vadd.f32 0.0, %v194
  %v196 = vpop.f32.mrb[0].mxu0
  %197 = vdwg.mxu0
  %v198 = vadd.f32 %v155, %v192
  %v199 = vadd.f32 %v156, %v195
  %v200 = vtanh.pop %v198
  %v201 = vtanh.pop %v199
  %v202 = vpack.c.bf16 %v201, %v200
  %v204 = vunpack.c.l.b16 %v202
  %v205 = vunpack.c.h.b16 %v202
  %v206 = vpack.c.b16 %v204, %v204
  %v207 = vpack.c.b16 %v205, %v205
  %s210 = scalar_lea.vmem %s3, 8
  %211 = vst [vmem:[%s210] sm:$0xf] %v206
  %212 = vst [vmem:[%s210 + $0x4] sm:$0xf] %v207
  %s213 = scalar_lea.vmem %s0, 16
  %v214 = vld [vmem:[%s213] sm:$0xf]
  %v215 = vld [vmem:[%s213 + $0x4] sm:$0xf]
  %v216 = vunpack.c.l.bf16 %v214
  %v217 = vunpack.c.l.bf16 %v215
  %218 = vmatprep.subr.bf16.mxu0 0
  %219 = vmatpush1.bf16.msra.mxu0 %v81
  %220 = vmatprep.subr.bf16.mxu0 0
  %221 = vmatpush1.bf16.msra.mxu0 %v82
  %222 = vmatprep.subr.bf16.mxu0 0
  %223 = vmatpush1.bf16.msra.mxu0 %v83
  %224 = vmatprep.subr.bf16.mxu0 0
  %225 = vmatpush1.bf16.msra.mxu0 %v84
  %226 = vmatprep.subr.bf16.mxu0 0
  %227 = vmatpush1.bf16.msra.mxu0 %v85
  %228 = vmatprep.subr.bf16.mxu0 0
  %229 = vmatpush1.bf16.msra.mxu0 %v86
  %230 = vmatprep.subr.bf16.mxu0 0
  %231 = vmatpush1.bf16.msra.mxu0 %v87
  %232 = vmatprep.subr.bf16.mxu0 0
  %233 = vmatpush1.bf16.msra.mxu0 %v88
  %234 = vmatprep.subr.bf16.mxu0 0
  %235 = vmatpush1.bf16.msra.mxu0 0
  %236 = vmatprep.subr.bf16.mxu0 0
  %237 = vmatpush1.bf16.msra.mxu0 0
  %238 = vmatprep.subr.bf16.mxu0 0
  %239 = vmatpush1.bf16.msra.mxu0 0
  %240 = vmatprep.subr.bf16.mxu0 0
  %241 = vmatpush1.bf16.msra.mxu0 0
  %242 = vmatprep.subr.bf16.mxu0 0
  %243 = vmatpush1.bf16.msra.mxu0 0
  %244 = vmatprep.subr.bf16.mxu0 0
  %245 = vmatpush1.bf16.msra.mxu0 0
  %246 = vmatprep.subr.bf16.mxu0 0
  %247 = vmatpush1.bf16.msra.mxu0 0
  %248 = vmatprep.subr.bf16.mxu0 0
  %249 = vmatpush1.bf16.msra.mxu0 0
  %250 = vmatprep.mubr.bf16.mxu0 0
  %251 = vmatmul.mubr.bf16.gmra.mrb[0].mxu0 %v202
  %v252 = vpop.f32.mrb[0].mxu0
  %v253 = vadd.f32 0.0, %v252
  %v254 = vpop.f32.mrb[0].mxu0
  %v255 = vpop.f32.mrb[0].mxu0
  %v256 = vadd.f32 0.0, %v255
  %v257 = vpop.f32.mrb[0].mxu0
  %258 = vdwg.mxu0
  %v259 = vadd.f32 %v216, %v253
  %v260 = vadd.f32 %v217, %v256
  %v261 = vtanh.pop %v259
  %v262 = vtanh.pop %v260
  %v263 = vpack.c.bf16 %v262, %v261
  %v265 = vunpack.c.l.b16 %v263
  %v266 = vunpack.c.h.b16 %v263
  %v267 = vpack.c.b16 %v265, %v265
  %v268 = vpack.c.b16 %v266, %v266
  %s271 = scalar_lea.vmem %s3, 16
  %272 = vst [vmem:[%s271] sm:$0xf] %v267
  %273 = vst [vmem:[%s271 + $0x4] sm:$0xf] %v268
  %s274 = scalar_lea.vmem %s0, 24
  %v275 = vld [vmem:[%s274] sm:$0xf]
  %v276 = vld [vmem:[%s274 + $0x4] sm:$0xf]
  %v277 = vunpack.c.l.bf16 %v275
  %v278 = vunpack.c.l.bf16 %v276
  %279 = vmatprep.subr.bf16.mxu0 0
  %280 = vmatpush1.bf16.msra.mxu0 %v81
  %281 = vmatprep.subr.bf16.mxu0 0
  %282 = vmatpush1.bf16.msra.mxu0 %v82
  %283 = vmatprep.subr.bf16.mxu0 0
  %284 = vmatpush1.bf16.msra.mxu0 %v83
  %285 = vmatprep.subr.bf16.mxu0 0
  %286 = vmatpush1.bf16.msra.mxu0 %v84
  %287 = vmatprep.subr.bf16.mxu0 0
  %288 = vmatpush1.bf16.msra.mxu0 %v85
  %289 = vmatprep.subr.bf16.mxu0 0
  %290 = vmatpush1.bf16.msra.mxu0 %v86
  %291 = vmatprep.subr.bf16.mxu0 0
  %292 = vmatpush1.bf16.msra.mxu0 %v87
  %293 = vmatprep.subr.bf16.mxu0 0
  %294 = vmatpush1.bf16.msra.mxu0 %v88
  %295 = vmatprep.subr.bf16.mxu0 0
  %296 = vmatpush1.bf16.msra.mxu0 0
  %297 = vmatprep.subr.bf16.mxu0 0
  %298 = vmatpush1.bf16.msra.mxu0 0
  %299 = vmatprep.subr.bf16.mxu0 0
  %300 = vmatpush1.bf16.msra.mxu0 0
  %301 = vmatprep.subr.bf16.mxu0 0
  %302 = vmatpush1.bf16.msra.mxu0 0
  %303 = vmatprep.subr.bf16.mxu0 0
  %304 = vmatpush1.bf16.msra.mxu0 0
  %305 = vmatprep.subr.bf16.mxu0 0
  %306 = vmatpush1.bf16.msra.mxu0 0
  %307 = vmatprep.subr.bf16.mxu0 0
  %308 = vmatpush1.bf16.msra.mxu0 0
  %309 = vmatprep.subr.bf16.mxu0 0
  %310 = vmatpush1.bf16.msra.mxu0 0
  %311 = vmatprep.mubr.bf16.mxu0 0
  %312 = vmatmul.mubr.bf16.gmra.mrb[0].mxu0 %v263
  %v313 = vpop.f32.mrb[0].mxu0
  %v314 = vadd.f32 0.0, %v313
  %v315 = vpop.f32.mrb[0].mxu0
  %v316 = vpop.f32.mrb[0].mxu0
  %v317 = vadd.f32 0.0, %v316
  %v318 = vpop.f32.mrb[0].mxu0
  %319 = vdwg.mxu0
  %v320 = vadd.f32 %v277, %v314
  %v321 = vadd.f32 %v278, %v317
  %v322 = vtanh.pop %v320
  %v323 = vtanh.pop %v321
  %v324 = vpack.c.bf16 %v323, %v322
  %v326 = vunpack.c.l.b16 %v324
  %v327 = vunpack.c.h.b16 %v324
  %v328 = vpack.c.b16 %v326, %v326
  %v329 = vpack.c.b16 %v327, %v327
  %s332 = scalar_lea.vmem %s3, 24
  %333 = vst [vmem:[%s332] sm:$0xf] %v328
  %334 = vst [vmem:[%s332 + $0x4] sm:$0xf] %v329
  %s335 = scalar_lea.vmem %s0, 32
  %v336 = vld [vmem:[%s335] sm:$0xf]
  %v337 = vld [vmem:[%s335 + $0x4] sm:$0xf]
  %v338 = vunpack.c.l.bf16 %v336
  %v339 = vunpack.c.l.bf16 %v337
  %340 = vmatprep.subr.bf16.mxu0 0
  %341 = vmatpush1.bf16.msra.mxu0 %v81
  %342 = vmatprep.subr.bf16.mxu0 0
  %343 = vmatpush1.bf16.msra.mxu0 %v82
  %344 = vmatprep.subr.bf16.mxu0 0
  %345 = vmatpush1.bf16.msra.mxu0 %v83
  %346 = vmatprep.subr.bf16.mxu0 0
  %347 = vmatpush1.bf16.msra.mxu0 %v84
  %348 = vmatprep.subr.bf16.mxu0 0
  %349 = vmatpush1.bf16.msra.mxu0 %v85
  %350 = vmatprep.subr.bf16.mxu0 0
  %351 = vmatpush1.bf16.msra.mxu0 %v86
  %352 = vmatprep.subr.bf16.mxu0 0
  %353 = vmatpush1.bf16.msra.mxu0 %v87
  %354 = vmatprep.subr.bf16.mxu0 0
  %355 = vmatpush1.bf16.msra.mxu0 %v88
  %356 = vmatprep.subr.bf16.mxu0 0
  %357 = vmatpush1.bf16.msra.mxu0 0
  %358 = vmatprep.subr.bf16.mxu0 0
  %359 = vmatpush1.bf16.msra.mxu0 0
  %360 = vmatprep.subr.bf16.mxu0 0
  %361 = vmatpush1.bf16.msra.mxu0 0
  %362 = vmatprep.subr.bf16.mxu0 0
  %363 = vmatpush1.bf16.msra.mxu0 0
  %364 = vmatprep.subr.bf16.mxu0 0
  %365 = vmatpush1.bf16.msra.mxu0 0
  %366 = vmatprep.subr.bf16.mxu0 0
  %367 = vmatpush1.bf16.msra.mxu0 0
  %368 = vmatprep.subr.bf16.mxu0 0
  %369 = vmatpush1.bf16.msra.mxu0 0
  %370 = vmatprep.subr.bf16.mxu0 0
  %371 = vmatpush1.bf16.msra.mxu0 0
  %372 = vmatprep.mubr.bf16.mxu0 0
  %373 = vmatmul.mubr.bf16.gmra.mrb[0].mxu0 %v324
  %v374 = vpop.f32.mrb[0].mxu0
  %v375 = vadd.f32 0.0, %v374
  %v376 = vpop.f32.mrb[0].mxu0
  %v377 = vpop.f32.mrb[0].mxu0
  %v378 = vadd.f32 0.0, %v377
  %v379 = vpop.f32.mrb[0].mxu0
  %380 = vdwg.mxu0
  %v381 = vadd.f32 %v338, %v375
  %v382 = vadd.f32 %v339, %v378
  %v383 = vtanh.pop %v381
  %v384 = vtanh.pop %v382
  %v385 = vpack.c.bf16 %v384, %v383
  %v387 = vunpack.c.l.b16 %v385
  %v388 = vunpack.c.h.b16 %v385
  %v389 = vpack.c.b16 %v387, %v387
  %v390 = vpack.c.b16 %v388, %v388
  %s393 = scalar_lea.vmem %s3, 32
  %394 = vst [vmem:[%s393] sm:$0xf] %v389
  %395 = vst [vmem:[%s393 + $0x4] sm:$0xf] %v390
  %s396 = scalar_lea.vmem %s0, 40
  %v397 = vld [vmem:[%s396] sm:$0xf]
  %v398 = vld [vmem:[%s396 + $0x4] sm:$0xf]
  %v399 = vunpack.c.l.bf16 %v397
  %v400 = vunpack.c.l.bf16 %v398
  %401 = vmatprep.subr.bf16.mxu0 0
  %402 = vmatpush1.bf16.msra.mxu0 %v81
  %403 = vmatprep.subr.bf16.mxu0 0
  %404 = vmatpush1.bf16.msra.mxu0 %v82
  %405 = vmatprep.subr.bf16.mxu0 0
  %406 = vmatpush1.bf16.msra.mxu0 %v83
  %407 = vmatprep.subr.bf16.mxu0 0
  %408 = vmatpush1.bf16.msra.mxu0 %v84
  %409 = vmatprep.subr.bf16.mxu0 0
  %410 = vmatpush1.bf16.msra.mxu0 %v85
  %411 = vmatprep.subr.bf16.mxu0 0
  %412 = vmatpush1.bf16.msra.mxu0 %v86
  %413 = vmatprep.subr.bf16.mxu0 0
  %414 = vmatpush1.bf16.msra.mxu0 %v87
  %415 = vmatprep.subr.bf16.mxu0 0
  %416 = vmatpush1.bf16.msra.mxu0 %v88
  %417 = vmatprep.subr.bf16.mxu0 0
  %418 = vmatpush1.bf16.msra.mxu0 0
  %419 = vmatprep.subr.bf16.mxu0 0
  %420 = vmatpush1.bf16.msra.mxu0 0
  %421 = vmatprep.subr.bf16.mxu0 0
  %422 = vmatpush1.bf16.msra.mxu0 0
  %423 = vmatprep.subr.bf16.mxu0 0
  %424 = vmatpush1.bf16.msra.mxu0 0
  %425 = vmatprep.subr.bf16.mxu0 0
  %426 = vmatpush1.bf16.msra.mxu0 0
  %427 = vmatprep.subr.bf16.mxu0 0
  %428 = vmatpush1.bf16.msra.mxu0 0
  %429 = vmatprep.subr.bf16.mxu0 0
  %430 = vmatpush1.bf16.msra.mxu0 0
  %431 = vmatprep.subr.bf16.mxu0 0
  %432 = vmatpush1.bf16.msra.mxu0 0
  %433 = vmatprep.mubr.bf16.mxu0 0
  %434 = vmatmul.mubr.bf16.gmra.mrb[0].mxu0 %v385
  %v435 = vpop.f32.mrb[0].mxu0
  %v436 = vadd.f32 0.0, %v435
  %v437 = vpop.f32.mrb[0].mxu0
  %v438 = vpop.f32.mrb[0].mxu0
  %v439 = vadd.f32 0.0, %v438
  %v440 = vpop.f32.mrb[0].mxu0
  %441 = vdwg.mxu0
  %v442 = vadd.f32 %v399, %v436
  %v443 = vadd.f32 %v400, %v439
  %v444 = vtanh.pop %v442
  %v445 = vtanh.pop %v443
  %v446 = vpack.c.bf16 %v445, %v444
  %v448 = vunpack.c.l.b16 %v446
  %v449 = vunpack.c.h.b16 %v446
  %v450 = vpack.c.b16 %v448, %v448
  %v451 = vpack.c.b16 %v449, %v449
  %s454 = scalar_lea.vmem %s3, 40
  %455 = vst [vmem:[%s454] sm:$0xf] %v450
  %456 = vst [vmem:[%s454 + $0x4] sm:$0xf] %v451
  %s457 = scalar_lea.vmem %s0, 48
  %v458 = vld [vmem:[%s457] sm:$0xf]
  %v459 = vld [vmem:[%s457 + $0x4] sm:$0xf]
  %v460 = vunpack.c.l.bf16 %v458
  %v461 = vunpack.c.l.bf16 %v459
  %462 = vmatprep.subr.bf16.mxu0 0
  %463 = vmatpush1.bf16.msra.mxu0 %v81
  %464 = vmatprep.subr.bf16.mxu0 0
  %465 = vmatpush1.bf16.msra.mxu0 %v82
  %466 = vmatprep.subr.bf16.mxu0 0
  %467 = vmatpush1.bf16.msra.mxu0 %v83
  %468 = vmatprep.subr.bf16.mxu0 0
  %469 = vmatpush1.bf16.msra.mxu0 %v84
  %470 = vmatprep.subr.bf16.mxu0 0
  %471 = vmatpush1.bf16.msra.mxu0 %v85
  %472 = vmatprep.subr.bf16.mxu0 0
  %473 = vmatpush1.bf16.msra.mxu0 %v86
  %474 = vmatprep.subr.bf16.mxu0 0
  %475 = vmatpush1.bf16.msra.mxu0 %v87
  %476 = vmatprep.subr.bf16.mxu0 0
  %477 = vmatpush1.bf16.msra.mxu0 %v88
  %478 = vmatprep.subr.bf16.mxu0 0
  %479 = vmatpush1.bf16.msra.mxu0 0
  %480 = vmatprep.subr.bf16.mxu0 0
  %481 = vmatpush1.bf16.msra.mxu0 0
  %482 = vmatprep.subr.bf16.mxu0 0
  %483 = vmatpush1.bf16.msra.mxu0 0
  %484 = vmatprep.subr.bf16.mxu0 0
  %485 = vmatpush1.bf16.msra.mxu0 0
  %486 = vmatprep.subr.bf16.mxu0 0
  %487 = vmatpush1.bf16.msra.mxu0 0
  %488 = vmatprep.subr.bf16.mxu0 0
  %489 = vmatpush1.bf16.msra.mxu0 0
  %490 = vmatprep.subr.bf16.mxu0 0
  %491 = vmatpush1.bf16.msra.mxu0 0
  %492 = vmatprep.subr.bf16.mxu0 0
  %493 = vmatpush1.bf16.msra.mxu0 0
  %494 = vmatprep.mubr.bf16.mxu0 0
  %495 = vmatmul.mubr.bf16.gmra.mrb[0].mxu0 %v446
  %v496 = vpop.f32.mrb[0].mxu0
  %v497 = vadd.f32 0.0, %v496
  %v498 = vpop.f32.mrb[0].mxu0
  %v499 = vpop.f32.mrb[0].mxu0
  %v500 = vadd.f32 0.0, %v499
  %v501 = vpop.f32.mrb[0].mxu0
  %502 = vdwg.mxu0
  %v503 = vadd.f32 %v460, %v497
  %v504 = vadd.f32 %v461, %v500
  %v505 = vtanh.pop %v503
  %v506 = vtanh.pop %v504
  %v507 = vpack.c.bf16 %v506, %v505
  %v509 = vunpack.c.l.b16 %v507
  %v510 = vunpack.c.h.b16 %v507
  %v511 = vpack.c.b16 %v509, %v509
  %v512 = vpack.c.b16 %v510, %v510
  %s515 = scalar_lea.vmem %s3, 48
  %516 = vst [vmem:[%s515] sm:$0xf] %v511
  %517 = vst [vmem:[%s515 + $0x4] sm:$0xf] %v512
  %s518 = scalar_lea.vmem %s0, 56
  %v519 = vld [vmem:[%s518] sm:$0xf]
  %v520 = vld [vmem:[%s518 + $0x4] sm:$0xf]
  %v521 = vunpack.c.l.bf16 %v519
  %v522 = vunpack.c.l.bf16 %v520
  %523 = vmatprep.subr.bf16.mxu0 0
  %524 = vmatpush1.bf16.msra.mxu0 %v81
  %525 = vmatprep.subr.bf16.mxu0 0
  %526 = vmatpush1.bf16.msra.mxu0 %v82
  %527 = vmatprep.subr.bf16.mxu0 0
  %528 = vmatpush1.bf16.msra.mxu0 %v83
  %529 = vmatprep.subr.bf16.mxu0 0
  %530 = vmatpush1.bf16.msra.mxu0 %v84
  %531 = vmatprep.subr.bf16.mxu0 0
  %532 = vmatpush1.bf16.msra.mxu0 %v85
  %533 = vmatprep.subr.bf16.mxu0 0
  %534 = vmatpush1.bf16.msra.mxu0 %v86
  %535 = vmatprep.subr.bf16.mxu0 0
  %536 = vmatpush1.bf16.msra.mxu0 %v87
  %537 = vmatprep.subr.bf16.mxu0 0
  %538 = vmatpush1.bf16.msra.mxu0 %v88
  %539 = vmatprep.subr.bf16.mxu0 0
  %540 = vmatpush1.bf16.msra.mxu0 0
  %541 = vmatprep.subr.bf16.mxu0 0
  %542 = vmatpush1.bf16.msra.mxu0 0
  %543 = vmatprep.subr.bf16.mxu0 0
  %544 = vmatpush1.bf16.msra.mxu0 0
  %545 = vmatprep.subr.bf16.mxu0 0
  %546 = vmatpush1.bf16.msra.mxu0 0
  %547 = vmatprep.subr.bf16.mxu0 0
  %548 = vmatpush1.bf16.msra.mxu0 0
  %549 = vmatprep.subr.bf16.mxu0 0
  %550 = vmatpush1.bf16.msra.mxu0 0
  %551 = vmatprep.subr.bf16.mxu0 0
  %552 = vmatpush1.bf16.msra.mxu0 0
  %553 = vmatprep.subr.bf16.mxu0 0
  %554 = vmatpush1.bf16.msra.mxu0 0
  %555 = vmatprep.mubr.bf16.mxu0 0
  %556 = vmatmul.mubr.bf16.gmra.mrb[0].mxu0 %v507
  %v557 = vpop.f32.mrb[0].mxu0
  %v558 = vadd.f32 0.0, %v557
  %v559 = vpop.f32.mrb[0].mxu0
  %v560 = vpop.f32.mrb[0].mxu0
  %v561 = vadd.f32 0.0, %v560
  %v562 = vpop.f32.mrb[0].mxu0
  %563 = vdwg.mxu0
  %v564 = vadd.f32 %v521, %v558
  %v565 = vadd.f32 %v522, %v561
  %v566 = vtanh.pop %v564
  %v567 = vtanh.pop %v565
  %v568 = vpack.c.bf16 %v567, %v566
  %v570 = vunpack.c.l.b16 %v568
  %v571 = vunpack.c.h.b16 %v568
  %v572 = vpack.c.b16 %v570, %v570
  %v573 = vpack.c.b16 %v571, %v571
  %s576 = scalar_lea.vmem %s3, 56
  %577 = vst [vmem:[%s576] sm:$0xf] %v572
  %578 = vst [vmem:[%s576 + $0x4] sm:$0xf] %v573
  %579 = vst [vmem:[#allocation2] sm:$0xff] %v568
  // Predicated region
  $region18: #{_lambda_.6} parent=0 // pred_check
    _
  $region19: #{_lambda_.6} parent=0 // pred_check_branch
    %581 = sbr.rel (0) target = $region21
  $region20: #{_lambda_.6} parent=0 // pred_region
    _
  $region21: #{_lambda_.6} parent=0 // pred_fallthru
    _
  // Predicated region
  $region22: #{_lambda_.6} parent=0 // pred_check
    _
  $region23: #{_lambda_.6} parent=0 // pred_check_branch
    %583 = sbr.rel (0) target = $region25
  $region24: #{_lambda_.6} parent=0 // pred_region
    _
  $region25: #{_lambda_.6} parent=0 // pred_fallthru
    _

// kernel: _lambda_.5
$region0: #{_lambda_.5}
  #allocation0 [shape = 'u32[]', space=smem, size = 0x4, offset = 0x4, fixed_abs, tag = 'smem constant byte address 0x4 - core index']
  #allocation1 [shape = 'u32[144,128]{1,0:T(1,128)}', space=vmem, size = 0x12000, scoped, tag = 'internal scratch']
  #allocation2 [shape = 'bf16[1,16,128]{2,1,0:T(16,128)(2,1)}', space=vmem, size = 0x1000, scoped, tag = 'scratch operand']
  %s0 = inlined_call_operand.vmem [shape: bf16[8,16,128], index: 0, kind: input, shape index: {}]
  %s1 = inlined_call_operand.vmem [shape: bf16[128,128], index: 1, kind: input, shape index: {}]
  %s2 = inlined_call_operand.vmem [shape: bf16[16,128], index: 2, kind: input, shape index: {}]
  %s3 = inlined_call_operand.vmem [shape: bf16[128,128], index: 3, kind: input, shape index: {}]
  %s4 = inlined_call_operand.vmem [shape: f32[1,128], index: 4, kind: input, shape index: {}]
  %s5 = inlined_call_operand.vmem [shape: bf16[8,16,128], index: 5, kind: output, shape index: {}]
  %s6 = sld [smem:[#allocation0]]
  $region34: #{_lambda_.5} parent=0
    _
  %s8 = ssub.s32 1, %s6
  %s9 = scalar_select 0, %s8, %s6
  // Predicated region
  $region2: #{_lambda_.5} parent=0 // pred_check
    _
  $region3: #{_lambda_.5} parent=0 // pred_check_branch
    %11 = sbr.rel (0) target = $region5
  $region4: #{_lambda_.5} parent=0 // pred_region
    _
  $region5: #{_lambda_.5} parent=0 // pred_fallthru
    _
  // Predicated region
  $region6: #{_lambda_.5} parent=0 // pred_check
    _
  $region7: #{_lambda_.5} parent=0 // pred_check_branch
    %13 = sbr.rel (0) target = $region9
  $region8: #{_lambda_.5} parent=0 // pred_region
    _
  $region9: #{_lambda_.5} parent=0 // pred_fallthru
    _
  // Predicated region
  $region10: #{_lambda_.5} parent=0 // pred_check
    _
  $region11: #{_lambda_.5} parent=0 // pred_check_branch
    %15 = sbr.rel (0) target = $region13
  $region12: #{_lambda_.5} parent=0 // pred_region
    _
  $region13: #{_lambda_.5} parent=0 // pred_fallthru
    _
  // Predicated region
  $region14: #{_lambda_.5} parent=0 // pred_check
    _
  $region15: #{_lambda_.5} parent=0 // pred_check_branch
    %17 = sbr.rel (0) target = $region17
  $region16: #{_lambda_.5} parent=0 // pred_region
    _
  $region17: #{_lambda_.5} parent=0 // pred_fallthru
    _
  // Predicated region
  $region18: #{_lambda_.5} parent=0 // pred_check
    _
  $region19: #{_lambda_.5} parent=0 // pred_check_branch
    %19 = sbr.rel (0) target = $region21
  $region20: #{_lambda_.5} parent=0 // pred_region
    _
  $region21: #{_lambda_.5} parent=0 // pred_fallthru
    _
  %p21 = scmp.eq.s32.totalorder 0, 0
  // Predicated region
  $region22: #{_lambda_.5} parent=0 // pred_check
    %p22 = pneg %p21
  $region23: #{_lambda_.5} parent=0 // pred_check_branch
    %24 = sbr.rel (%p22) target = $region25
  $region24: #{_lambda_.5} parent=0 // pred_region
    %v25 = vld [vmem:[%s2] sm:$0xf]
    %v26 = vld [vmem:[%s2 + $0x4] sm:$0xf]
    %v29 = vunpack.c.l.b16 %v25
    %v30 = vunpack.c.l.b16 %v26
    %v31 = vpack.c.b16 %v30, %v29
    %33 = vst [vmem:[#allocation2] sm:$0xff] %v31
  $region25: #{_lambda_.5} parent=0 // pred_fallthru
    _
  %v34 = vld [vmem:[%s1] sm:$0xf]
  %v35 = vld [vmem:[%s1 + $0x4] sm:$0xf]
  %v36 = vld [vmem:[%s1 + $0x8] sm:$0xf]
  %v37 = vld [vmem:[%s1 + $0xc] sm:$0xf]
  %v38 = vld [vmem:[%s1 + $0x10] sm:$0xf]
  %v39 = vld [vmem:[%s1 + $0x14] sm:$0xf]
  %v40 = vld [vmem:[%s1 + $0x18] sm:$0xf]
  %v41 = vld [vmem:[%s1 + $0x1c] sm:$0xf]
  %v42 = vld [vmem:[%s1 + $0x20] sm:$0xf]
  %v43 = vld [vmem:[%s1 + $0x24] sm:$0xf]
  %v44 = vld [vmem:[%s1 + $0x28] sm:$0xf]
  %v45 = vld [vmem:[%s1 + $0x2c] sm:$0xf]
  %v46 = vld [vmem:[%s1 + $0x30] sm:$0xf]
  %v47 = vld [vmem:[%s1 + $0x34] sm:$0xf]
  %v48 = vld [vmem:[%s1 + $0x38] sm:$0xf]
  %v49 = vld [vmem:[%s1 + $0x3c] sm:$0xf]
  %v50 = vld [vmem:[#allocation2] sm:$0xff]
  %v51 = vld [vmem:[%s0] sm:$0xf]
  %v52 = vld [vmem:[%s0 + $0x4] sm:$0xf]
  %v53 = vunpack.c.l.bf16 %v51
  %v54 = vunpack.c.l.bf16 %v52
  %v71 = vunpack.c.l.b16 %v34
  %v72 = vunpack.c.l.b16 %v35
  %v73 = vunpack.c.l.b16 %v36
  %v74 = vunpack.c.l.b16 %v37
  %v75 = vunpack.c.l.b16 %v38
  %v76 = vunpack.c.l.b16 %v39
  %v77 = vunpack.c.l.b16 %v40
  %v78 = vunpack.c.l.b16 %v41
  %v79 = vunpack.c.l.b16 %v42
  %v80 = vunpack.c.l.b16 %v43
  %v81 = vunpack.c.l.b16 %v44
  %v82 = vunpack.c.l.b16 %v45
  %v83 = vunpack.c.l.b16 %v46
  %v84 = vunpack.c.l.b16 %v47
  %v85 = vunpack.c.l.b16 %v48
  %v86 = vunpack.c.l.b16 %v49
  %v87 = vpack.c.b16 %v72, %v71
  %v88 = vpack.c.b16 %v74, %v73
  %v89 = vpack.c.b16 %v76, %v75
  %v90 = vpack.c.b16 %v78, %v77
  %v91 = vpack.c.b16 %v80, %v79
  %v92 = vpack.c.b16 %v82, %v81
  %v93 = vpack.c.b16 %v84, %v83
  %v94 = vpack.c.b16 %v86, %v85
  %103 = vmatprep.subr.bf16.mxu0 0
  %104 = vmatpush1.bf16.msra.mxu0 %v87
  %105 = vmatprep.subr.bf16.mxu0 0
  %106 = vmatpush1.bf16.msra.mxu0 %v88
  %107 = vmatprep.subr.bf16.mxu0 0
  %108 = vmatpush1.bf16.msra.mxu0 %v89
  %109 = vmatprep.subr.bf16.mxu0 0
  %110 = vmatpush1.bf16.msra.mxu0 %v90
  %111 = vmatprep.subr.bf16.mxu0 0
  %112 = vmatpush1.bf16.msra.mxu0 %v91
  %113 = vmatprep.subr.bf16.mxu0 0
  %114 = vmatpush1.bf16.msra.mxu0 %v92
  %115 = vmatprep.subr.bf16.mxu0 0
  %116 = vmatpush1.bf16.msra.mxu0 %v93
  %117 = vmatprep.subr.bf16.mxu0 0
  %118 = vmatpush1.bf16.msra.mxu0 %v94
  %119 = vmatprep.subr.bf16.mxu0 0
  %120 = vmatpush1.bf16.msra.mxu0 0
  %121 = vmatprep.subr.bf16.mxu0 0
  %122 = vmatpush1.bf16.msra.mxu0 0
  %123 = vmatprep.subr.bf16.mxu0 0
  %124 = vmatpush1.bf16.msra.mxu0 0
  %125 = vmatprep.subr.bf16.mxu0 0
  %126 = vmatpush1.bf16.msra.mxu0 0
  %127 = vmatprep.subr.bf16.mxu0 0
  %128 = vmatpush1.bf16.msra.mxu0 0
  %129 = vmatprep.subr.bf16.mxu0 0
  %130 = vmatpush1.bf16.msra.mxu0 0
  %131 = vmatprep.subr.bf16.mxu0 0
  %132 = vmatpush1.bf16.msra.mxu0 0
  %133 = vmatprep.subr.bf16.mxu0 0
  %134 = vmatpush1.bf16.msra.mxu0 0
  %135 = vmatprep.mubr.bf16.mxu0 0
  %136 = vmatmul.mubr.bf16.gmra.mrb[0].mxu0 %v50
  %v137 = vpop.f32.mrb[0].mxu0
  %v138 = vadd.f32 0.0, %v137
  %v139 = vpop.f32.mrb[0].mxu0
  %v140 = vpop.f32.mrb[0].mxu0
  %v141 = vadd.f32 0.0, %v140
  %v142 = vpop.f32.mrb[0].mxu0
  %143 = vdwg.mxu0
  %v144 = vadd.f32 %v53, %v138
  %v145 = vadd.f32 %v54, %v141
  %v146 = vtanh.pop %v144
  %v147 = vtanh.pop %v145
  %v148 = vpack.c.bf16 %v147, %v146
  %v150 = vunpack.c.l.b16 %v148
  %v151 = vunpack.c.h.b16 %v148
  %v152 = vpack.c.b16 %v150, %v150
  %v153 = vpack.c.b16 %v151, %v151
  %156 = vst [vmem:[%s5] sm:$0xf] %v152
  %157 = vst [vmem:[%s5 + $0x4] sm:$0xf] %v153
  %s158 = scalar_lea.vmem %s0, 8
  %v159 = vld [vmem:[%s158] sm:$0xf]
  %v160 = vld [vmem:[%s158 + $0x4] sm:$0xf]
  %v161 = vunpack.c.l.bf16 %v159
  %v162 = vunpack.c.l.bf16 %v160
  %163 = vmatprep.subr.bf16.mxu0 0
  %164 = vmatpush1.bf16.msra.mxu0 %v87
  %165 = vmatprep.subr.bf16.mxu0 0
  %166 = vmatpush1.bf16.msra.mxu0 %v88
  %167 = vmatprep.subr.bf16.mxu0 0
  %168 = vmatpush1.bf16.msra.mxu0 %v89
  %169 = vmatprep.subr.bf16.mxu0 0
  %170 = vmatpush1.bf16.msra.mxu0 %v90
  %171 = vmatprep.subr.bf16.mxu0 0
  %172 = vmatpush1.bf16.msra.mxu0 %v91
  %173 = vmatprep.subr.bf16.mxu0 0
  %174 = vmatpush1.bf16.msra.mxu0 %v92
  %175 = vmatprep.subr.bf16.mxu0 0
  %176 = vmatpush1.bf16.msra.mxu0 %v93
  %177 = vmatprep.subr.bf16.mxu0 0
  %178 = vmatpush1.bf16.msra.mxu0 %v94
  %179 = vmatprep.subr.bf16.mxu0 0
  %180 = vmatpush1.bf16.msra.mxu0 0
  %181 = vmatprep.subr.bf16.mxu0 0
  %182 = vmatpush1.bf16.msra.mxu0 0
  %183 = vmatprep.subr.bf16.mxu0 0
  %184 = vmatpush1.bf16.msra.mxu0 0
  %185 = vmatprep.subr.bf16.mxu0 0
  %186 = vmatpush1.bf16.msra.mxu0 0
  %187 = vmatprep.subr.bf16.mxu0 0
  %188 = vmatpush1.bf16.msra.mxu0 0
  %189 = vmatprep.subr.bf16.mxu0 0
  %190 = vmatpush1.bf16.msra.mxu0 0
  %191 = vmatprep.subr.bf16.mxu0 0
  %192 = vmatpush1.bf16.msra.mxu0 0
  %193 = vmatprep.subr.bf16.mxu0 0
  %194 = vmatpush1.bf16.msra.mxu0 0
  %195 = vmatprep.mubr.bf16.mxu0 0
  %196 = vmatmul.mubr.bf16.gmra.mrb[0].mxu0 %v148
  %v197 = vpop.f32.mrb[0].mxu0
  %v198 = vadd.f32 0.0, %v197
  %v199 = vpop.f32.mrb[0].mxu0
  %v200 = vpop.f32.mrb[0].mxu0
  %v201 = vadd.f32 0.0, %v200
  %v202 = vpop.f32.mrb[0].mxu0
  %203 = vdwg.mxu0
  %v204 = vadd.f32 %v161, %v198
  %v205 = vadd.f32 %v162, %v201
  %v206 = vtanh.pop %v204
  %v207 = vtanh.pop %v205
  %v208 = vpack.c.bf16 %v207, %v206
  %v210 = vunpack.c.l.b16 %v208
  %v211 = vunpack.c.h.b16 %v208
  %v212 = vpack.c.b16 %v210, %v210
  %v213 = vpack.c.b16 %v211, %v211
  %s216 = scalar_lea.vmem %s5, 8
  %217 = vst [vmem:[%s216] sm:$0xf] %v212
  %218 = vst [vmem:[%s216 + $0x4] sm:$0xf] %v213
  %s219 = scalar_lea.vmem %s0, 16
  %v220 = vld [vmem:[%s219] sm:$0xf]
  %v221 = vld [vmem:[%s219 + $0x4] sm:$0xf]
  %v222 = vunpack.c.l.bf16 %v220
  %v223 = vunpack.c.l.bf16 %v221
  %224 = vmatprep.subr.bf16.mxu0 0
  %225 = vmatpush1.bf16.msra.mxu0 %v87
  %226 = vmatprep.subr.bf16.mxu0 0
  %227 = vmatpush1.bf16.msra.mxu0 %v88
  %228 = vmatprep.subr.bf16.mxu0 0
  %229 = vmatpush1.bf16.msra.mxu0 %v89
  %230 = vmatprep.subr.bf16.mxu0 0
  %231 = vmatpush1.bf16.msra.mxu0 %v90
  %232 = vmatprep.subr.bf16.mxu0 0
  %233 = vmatpush1.bf16.msra.mxu0 %v91
  %234 = vmatprep.subr.bf16.mxu0 0
  %235 = vmatpush1.bf16.msra.mxu0 %v92
  %236 = vmatprep.subr.bf16.mxu0 0
  %237 = vmatpush1.bf16.msra.mxu0 %v93
  %238 = vmatprep.subr.bf16.mxu0 0
  %239 = vmatpush1.bf16.msra.mxu0 %v94
  %240 = vmatprep.subr.bf16.mxu0 0
  %241 = vmatpush1.bf16.msra.mxu0 0
  %242 = vmatprep.subr.bf16.mxu0 0
  %243 = vmatpush1.bf16.msra.mxu0 0
  %244 = vmatprep.subr.bf16.mxu0 0
  %245 = vmatpush1.bf16.msra.mxu0 0
  %246 = vmatprep.subr.bf16.mxu0 0
  %247 = vmatpush1.bf16.msra.mxu0 0
  %248 = vmatprep.subr.bf16.mxu0 0
  %249 = vmatpush1.bf16.msra.mxu0 0
  %250 = vmatprep.subr.bf16.mxu0 0
  %251 = vmatpush1.bf16.msra.mxu0 0
  %252 = vmatprep.subr.bf16.mxu0 0
  %253 = vmatpush1.bf16.msra.mxu0 0
  %254 = vmatprep.subr.bf16.mxu0 0
  %255 = vmatpush1.bf16.msra.mxu0 0
  %256 = vmatprep.mubr.bf16.mxu0 0
  %257 = vmatmul.mubr.bf16.gmra.mrb[0].mxu0 %v208
  %v258 = vpop.f32.mrb[0].mxu0
  %v259 = vadd.f32 0.0, %v258
  %v260 = vpop.f32.mrb[0].mxu0
  %v261 = vpop.f32.mrb[0].mxu0
  %v262 = vadd.f32 0.0, %v261
  %v263 = vpop.f32.mrb[0].mxu0
  %264 = vdwg.mxu0
  %v265 = vadd.f32 %v222, %v259
  %v266 = vadd.f32 %v223, %v262
  %v267 = vtanh.pop %v265
  %v268 = vtanh.pop %v266
  %v269 = vpack.c.bf16 %v268, %v267
  %v271 = vunpack.c.l.b16 %v269
  %v272 = vunpack.c.h.b16 %v269
  %v273 = vpack.c.b16 %v271, %v271
  %v274 = vpack.c.b16 %v272, %v272
  %s277 = scalar_lea.vmem %s5, 16
  %278 = vst [vmem:[%s277] sm:$0xf] %v273
  %279 = vst [vmem:[%s277 + $0x4] sm:$0xf] %v274
  %s280 = scalar_lea.vmem %s0, 24
  %v281 = vld [vmem:[%s280] sm:$0xf]
  %v282 = vld [vmem:[%s280 + $0x4] sm:$0xf]
  %v283 = vunpack.c.l.bf16 %v281
  %v284 = vunpack.c.l.bf16 %v282
  %285 = vmatprep.subr.bf16.mxu0 0
  %286 = vmatpush1.bf16.msra.mxu0 %v87
  %287 = vmatprep.subr.bf16.mxu0 0
  %288 = vmatpush1.bf16.msra.mxu0 %v88
  %289 = vmatprep.subr.bf16.mxu0 0
  %290 = vmatpush1.bf16.msra.mxu0 %v89
  %291 = vmatprep.subr.bf16.mxu0 0
  %292 = vmatpush1.bf16.msra.mxu0 %v90
  %293 = vmatprep.subr.bf16.mxu0 0
  %294 = vmatpush1.bf16.msra.mxu0 %v91
  %295 = vmatprep.subr.bf16.mxu0 0
  %296 = vmatpush1.bf16.msra.mxu0 %v92
  %297 = vmatprep.subr.bf16.mxu0 0
  %298 = vmatpush1.bf16.msra.mxu0 %v93
  %299 = vmatprep.subr.bf16.mxu0 0
  %300 = vmatpush1.bf16.msra.mxu0 %v94
  %301 = vmatprep.subr.bf16.mxu0 0
  %302 = vmatpush1.bf16.msra.mxu0 0
  %303 = vmatprep.subr.bf16.mxu0 0
  %304 = vmatpush1.bf16.msra.mxu0 0
  %305 = vmatprep.subr.bf16.mxu0 0
  %306 = vmatpush1.bf16.msra.mxu0 0
  %307 = vmatprep.subr.bf16.mxu0 0
  %308 = vmatpush1.bf16.msra.mxu0 0
  %309 = vmatprep.subr.bf16.mxu0 0
  %310 = vmatpush1.bf16.msra.mxu0 0
  %311 = vmatprep.subr.bf16.mxu0 0
  %312 = vmatpush1.bf16.msra.mxu0 0
  %313 = vmatprep.subr.bf16.mxu0 0
  %314 = vmatpush1.bf16.msra.mxu0 0
  %315 = vmatprep.subr.bf16.mxu0 0
  %316 = vmatpush1.bf16.msra.mxu0 0
  %317 = vmatprep.mubr.bf16.mxu0 0
  %318 = vmatmul.mubr.bf16.gmra.mrb[0].mxu0 %v269
  %v319 = vpop.f32.mrb[0].mxu0
  %v320 = vadd.f32 0.0, %v319
  %v321 = vpop.f32.mrb[0].mxu0
  %v322 = vpop.f32.mrb[0].mxu0
  %v323 = vadd.f32 0.0, %v322
  %v324 = vpop.f32.mrb[0].mxu0
  %325 = vdwg.mxu0
  %v326 = vadd.f32 %v283, %v320
  %v327 = vadd.f32 %v284, %v323
  %v328 = vtanh.pop %v326
  %v329 = vtanh.pop %v327
  %v330 = vpack.c.bf16 %v329, %v328
  %v332 = vunpack.c.l.b16 %v330
  %v333 = vunpack.c.h.b16 %v330
  %v334 = vpack.c.b16 %v332, %v332
  %v335 = vpack.c.b16 %v333, %v333
  %s338 = scalar_lea.vmem %s5, 24
  %339 = vst [vmem:[%s338] sm:$0xf] %v334
  %340 = vst [vmem:[%s338 + $0x4] sm:$0xf] %v335
  %s341 = scalar_lea.vmem %s0, 32
  %v342 = vld [vmem:[%s341] sm:$0xf]
  %v343 = vld [vmem:[%s341 + $0x4] sm:$0xf]
  %v344 = vunpack.c.l.bf16 %v342
  %v345 = vunpack.c.l.bf16 %v343
  %346 = vmatprep.subr.bf16.mxu0 0
  %347 = vmatpush1.bf16.msra.mxu0 %v87
  %348 = vmatprep.subr.bf16.mxu0 0
  %349 = vmatpush1.bf16.msra.mxu0 %v88
  %350 = vmatprep.subr.bf16.mxu0 0
  %351 = vmatpush1.bf16.msra.mxu0 %v89
  %352 = vmatprep.subr.bf16.mxu0 0
  %353 = vmatpush1.bf16.msra.mxu0 %v90
  %354 = vmatprep.subr.bf16.mxu0 0
  %355 = vmatpush1.bf16.msra.mxu0 %v91
  %356 = vmatprep.subr.bf16.mxu0 0
  %357 = vmatpush1.bf16.msra.mxu0 %v92
  %358 = vmatprep.subr.bf16.mxu0 0
  %359 = vmatpush1.bf16.msra.mxu0 %v93
  %360 = vmatprep.subr.bf16.mxu0 0
  %361 = vmatpush1.bf16.msra.mxu0 %v94
  %362 = vmatprep.subr.bf16.mxu0 0
  %363 = vmatpush1.bf16.msra.mxu0 0
  %364 = vmatprep.subr.bf16.mxu0 0
  %365 = vmatpush1.bf16.msra.mxu0 0
  %366 = vmatprep.subr.bf16.mxu0 0
  %367 = vmatpush1.bf16.msra.mxu0 0
  %368 = vmatprep.subr.bf16.mxu0 0
  %369 = vmatpush1.bf16.msra.mxu0 0
  %370 = vmatprep.subr.bf16.mxu0 0
  %371 = vmatpush1.bf16.msra.mxu0 0
  %372 = vmatprep.subr.bf16.mxu0 0
  %373 = vmatpush1.bf16.msra.mxu0 0
  %374 = vmatprep.subr.bf16.mxu0 0
  %375 = vmatpush1.bf16.msra.mxu0 0
  %376 = vmatprep.subr.bf16.mxu0 0
  %377 = vmatpush1.bf16.msra.mxu0 0
  %378 = vmatprep.mubr.bf16.mxu0 0
  %379 = vmatmul.mubr.bf16.gmra.mrb[0].mxu0 %v330
  %v380 = vpop.f32.mrb[0].mxu0
  %v381 = vadd.f32 0.0, %v380
  %v382 = vpop.f32.mrb[0].mxu0
  %v383 = vpop.f32.mrb[0].mxu0
  %v384 = vadd.f32 0.0, %v383
  %v385 = vpop.f32.mrb[0].mxu0
  %386 = vdwg.mxu0
  %v387 = vadd.f32 %v344, %v381
  %v388 = vadd.f32 %v345, %v384
  %v389 = vtanh.pop %v387
  %v390 = vtanh.pop %v388
  %v391 = vpack.c.bf16 %v390, %v389
  %v393 = vunpack.c.l.b16 %v391
  %v394 = vunpack.c.h.b16 %v391
  %v395 = vpack.c.b16 %v393, %v393
  %v396 = vpack.c.b16 %v394, %v394
  %s399 = scalar_lea.vmem %s5, 32
  %400 = vst [vmem:[%s399] sm:$0xf] %v395
  %401 = vst [vmem:[%s399 + $0x4] sm:$0xf] %v396
  %s402 = scalar_lea.vmem %s0, 40
  %v403 = vld [vmem:[%s402] sm:$0xf]
  %v404 = vld [vmem:[%s402 + $0x4] sm:$0xf]
  %v405 = vunpack.c.l.bf16 %v403
  %v406 = vunpack.c.l.bf16 %v404
  %407 = vmatprep.subr.bf16.mxu0 0
  %408 = vmatpush1.bf16.msra.mxu0 %v87
  %409 = vmatprep.subr.bf16.mxu0 0
  %410 = vmatpush1.bf16.msra.mxu0 %v88
  %411 = vmatprep.subr.bf16.mxu0 0
  %412 = vmatpush1.bf16.msra.mxu0 %v89
  %413 = vmatprep.subr.bf16.mxu0 0
  %414 = vmatpush1.bf16.msra.mxu0 %v90
  %415 = vmatprep.subr.bf16.mxu0 0
  %416 = vmatpush1.bf16.msra.mxu0 %v91
  %417 = vmatprep.subr.bf16.mxu0 0
  %418 = vmatpush1.bf16.msra.mxu0 %v92
  %419 = vmatprep.subr.bf16.mxu0 0
  %420 = vmatpush1.bf16.msra.mxu0 %v93
  %421 = vmatprep.subr.bf16.mxu0 0
  %422 = vmatpush1.bf16.msra.mxu0 %v94
  %423 = vmatprep.subr.bf16.mxu0 0
  %424 = vmatpush1.bf16.msra.mxu0 0
  %425 = vmatprep.subr.bf16.mxu0 0
  %426 = vmatpush1.bf16.msra.mxu0 0
  %427 = vmatprep.subr.bf16.mxu0 0
  %428 = vmatpush1.bf16.msra.mxu0 0
  %429 = vmatprep.subr.bf16.mxu0 0
  %430 = vmatpush1.bf16.msra.mxu0 0
  %431 = vmatprep.subr.bf16.mxu0 0
  %432 = vmatpush1.bf16.msra.mxu0 0
  %433 = vmatprep.subr.bf16.mxu0 0
  %434 = vmatpush1.bf16.msra.mxu0 0
  %435 = vmatprep.subr.bf16.mxu0 0
  %436 = vmatpush1.bf16.msra.mxu0 0
  %437 = vmatprep.subr.bf16.mxu0 0
  %438 = vmatpush1.bf16.msra.mxu0 0
  %439 = vmatprep.mubr.bf16.mxu0 0
  %440 = vmatmul.mubr.bf16.gmra.mrb[0].mxu0 %v391
  %v441 = vpop.f32.mrb[0].mxu0
  %v442 = vadd.f32 0.0, %v441
  %v443 = vpop.f32.mrb[0].mxu0
  %v444 = vpop.f32.mrb[0].mxu0
  %v445 = vadd.f32 0.0, %v444
  %v446 = vpop.f32.mrb[0].mxu0
  %447 = vdwg.mxu0
  %v448 = vadd.f32 %v405, %v442
  %v449 = vadd.f32 %v406, %v445
  %v450 = vtanh.pop %v448
  %v451 = vtanh.pop %v449
  %v452 = vpack.c.bf16 %v451, %v450
  %v454 = vunpack.c.l.b16 %v452
  %v455 = vunpack.c.h.b16 %v452
  %v456 = vpack.c.b16 %v454, %v454
  %v457 = vpack.c.b16 %v455, %v455
  %s460 = scalar_lea.vmem %s5, 40
  %461 = vst [vmem:[%s460] sm:$0xf] %v456
  %462 = vst [vmem:[%s460 + $0x4] sm:$0xf] %v457
  %s463 = scalar_lea.vmem %s0, 48
  %v464 = vld [vmem:[%s463] sm:$0xf]
  %v465 = vld [vmem:[%s463 + $0x4] sm:$0xf]
  %v466 = vunpack.c.l.bf16 %v464
  %v467 = vunpack.c.l.bf16 %v465
  %468 = vmatprep.subr.bf16.mxu0 0
  %469 = vmatpush1.bf16.msra.mxu0 %v87
  %470 = vmatprep.subr.bf16.mxu0 0
  %471 = vmatpush1.bf16.msra.mxu0 %v88
  %472 = vmatprep.subr.bf16.mxu0 0
  %473 = vmatpush1.bf16.msra.mxu0 %v89
  %474 = vmatprep.subr.bf16.mxu0 0
  %475 = vmatpush1.bf16.msra.mxu0 %v90
  %476 = vmatprep.subr.bf16.mxu0 0
  %477 = vmatpush1.bf16.msra.mxu0 %v91
  %478 = vmatprep.subr.bf16.mxu0 0
  %479 = vmatpush1.bf16.msra.mxu0 %v92
  %480 = vmatprep.subr.bf16.mxu0 0
  %481 = vmatpush1.bf16.msra.mxu0 %v93
  %482 = vmatprep.subr.bf16.mxu0 0
  %483 = vmatpush1.bf16.msra.mxu0 %v94
  %484 = vmatprep.subr.bf16.mxu0 0
  %485 = vmatpush1.bf16.msra.mxu0 0
  %486 = vmatprep.subr.bf16.mxu0 0
  %487 = vmatpush1.bf16.msra.mxu0 0
  %488 = vmatprep.subr.bf16.mxu0 0
  %489 = vmatpush1.bf16.msra.mxu0 0
  %490 = vmatprep.subr.bf16.mxu0 0
  %491 = vmatpush1.bf16.msra.mxu0 0
  %492 = vmatprep.subr.bf16.mxu0 0
  %493 = vmatpush1.bf16.msra.mxu0 0
  %494 = vmatprep.subr.bf16.mxu0 0
  %495 = vmatpush1.bf16.msra.mxu0 0
  %496 = vmatprep.subr.bf16.mxu0 0
  %497 = vmatpush1.bf16.msra.mxu0 0
  %498 = vmatprep.subr.bf16.mxu0 0
  %499 = vmatpush1.bf16.msra.mxu0 0
  %500 = vmatprep.mubr.bf16.mxu0 0
  %501 = vmatmul.mubr.bf16.gmra.mrb[0].mxu0 %v452
  %v502 = vpop.f32.mrb[0].mxu0
  %v503 = vadd.f32 0.0, %v502
  %v504 = vpop.f32.mrb[0].mxu0
  %v505 = vpop.f32.mrb[0].mxu0
  %v506 = vadd.f32 0.0, %v505
  %v507 = vpop.f32.mrb[0].mxu0
  %508 = vdwg.mxu0
  %v509 = vadd.f32 %v466, %v503
  %v510 = vadd.f32 %v467, %v506
  %v511 = vtanh.pop %v509
  %v512 = vtanh.pop %v510
  %v513 = vpack.c.bf16 %v512, %v511
  %v515 = vunpack.c.l.b16 %v513
  %v516 = vunpack.c.h.b16 %v513
  %v517 = vpack.c.b16 %v515, %v515
  %v518 = vpack.c.b16 %v516, %v516
  %s521 = scalar_lea.vmem %s5, 48
  %522 = vst [vmem:[%s521] sm:$0xf] %v517
  %523 = vst [vmem:[%s521 + $0x4] sm:$0xf] %v518
  %s524 = scalar_lea.vmem %s0, 56
  %v525 = vld [vmem:[%s524] sm:$0xf]
  %v526 = vld [vmem:[%s524 + $0x4] sm:$0xf]
  %v527 = vunpack.c.l.bf16 %v525
  %v528 = vunpack.c.l.bf16 %v526
  %529 = vmatprep.subr.bf16.mxu0 0
  %530 = vmatpush1.bf16.msra.mxu0 %v87
  %531 = vmatprep.subr.bf16.mxu0 0
  %532 = vmatpush1.bf16.msra.mxu0 %v88
  %533 = vmatprep.subr.bf16.mxu0 0
  %534 = vmatpush1.bf16.msra.mxu0 %v89
  %535 = vmatprep.subr.bf16.mxu0 0
  %536 = vmatpush1.bf16.msra.mxu0 %v90
  %537 = vmatprep.subr.bf16.mxu0 0
  %538 = vmatpush1.bf16.msra.mxu0 %v91
  %539 = vmatprep.subr.bf16.mxu0 0
  %540 = vmatpush1.bf16.msra.mxu0 %v92
  %541 = vmatprep.subr.bf16.mxu0 0
  %542 = vmatpush1.bf16.msra.mxu0 %v93
  %543 = vmatprep.subr.bf16.mxu0 0
  %544 = vmatpush1.bf16.msra.mxu0 %v94
  %545 = vmatprep.subr.bf16.mxu0 0
  %546 = vmatpush1.bf16.msra.mxu0 0
  %547 = vmatprep.subr.bf16.mxu0 0
  %548 = vmatpush1.bf16.msra.mxu0 0
  %549 = vmatprep.subr.bf16.mxu0 0
  %550 = vmatpush1.bf16.msra.mxu0 0
  %551 = vmatprep.subr.bf16.mxu0 0
  %552 = vmatpush1.bf16.msra.mxu0 0
  %553 = vmatprep.subr.bf16.mxu0 0
  %554 = vmatpush1.bf16.msra.mxu0 0
  %555 = vmatprep.subr.bf16.mxu0 0
  %556 = vmatpush1.bf16.msra.mxu0 0
  %557 = vmatprep.subr.bf16.mxu0 0
  %558 = vmatpush1.bf16.msra.mxu0 0
  %559 = vmatprep.subr.bf16.mxu0 0
  %560 = vmatpush1.bf16.msra.mxu0 0
  %561 = vmatprep.mubr.bf16.mxu0 0
  %562 = vmatmul.mubr.bf16.gmra.mrb[0].mxu0 %v513
  %v563 = vpop.f32.mrb[0].mxu0
  %v564 = vadd.f32 0.0, %v563
  %v565 = vpop.f32.mrb[0].mxu0
  %v566 = vpop.f32.mrb[0].mxu0
  %v567 = vadd.f32 0.0, %v566
  %v568 = vpop.f32.mrb[0].mxu0
  %569 = vdwg.mxu0
  %v570 = vadd.f32 %v527, %v564
  %v571 = vadd.f32 %v528, %v567
  %v572 = vtanh.pop %v570
  %v573 = vtanh.pop %v571
  %v574 = vpack.c.bf16 %v573, %v572
  %v576 = vunpack.c.l.b16 %v574
  %v577 = vunpack.c.h.b16 %v574
  %v578 = vpack.c.b16 %v576, %v576
  %v579 = vpack.c.b16 %v577, %v577
  %s582 = scalar_lea.vmem %s5, 56
  %583 = vst [vmem:[%s582] sm:$0xf] %v578
  %584 = vst [vmem:[%s582 + $0x4] sm:$0xf] %v579
  %585 = vst [vmem:[#allocation2] sm:$0xff] %v574
  %v586 = vld [vmem:[%s5] sm:$0xf]
  %v587 = vld [vmem:[%s5 + $0x4] sm:$0xf]
  %v588 = vld [vmem:[%s5 + $0x8] sm:$0xf]
  %v589 = vld [vmem:[%s5 + $0xc] sm:$0xf]
  %v590 = vld [vmem:[%s5 + $0x10] sm:$0xf]
  %v591 = vld [vmem:[%s5 + $0x14] sm:$0xf]
  %v592 = vld [vmem:[%s5 + $0x18] sm:$0xf]
  %v593 = vld [vmem:[%s5 + $0x1c] sm:$0xf]
  %v594 = vld [vmem:[%s5 + $0x20] sm:$0xf]
  %v595 = vld [vmem:[%s5 + $0x24] sm:$0xf]
  %v596 = vld [vmem:[%s5 + $0x28] sm:$0xf]
  %v597 = vld [vmem:[%s5 + $0x2c] sm:$0xf]
  %v598 = vld [vmem:[%s5 + $0x30] sm:$0xf]
  %v599 = vld [vmem:[%s5 + $0x34] sm:$0xf]
  %v600 = vld [vmem:[%s5 + $0x38] sm:$0xf]
  %v601 = vld [vmem:[%s5 + $0x3c] sm:$0xf]
  %v602 = vld [vmem:[%s3] sm:$0xf]
  %v603 = vld [vmem:[%s3 + $0x4] sm:$0xf]
  %v604 = vld [vmem:[%s3 + $0x8] sm:$0xf]
  %v605 = vld [vmem:[%s3 + $0xc] sm:$0xf]
  %v606 = vld [vmem:[%s3 + $0x10] sm:$0xf]
  %v607 = vld [vmem:[%s3 + $0x14] sm:$0xf]
  %v608 = vld [vmem:[%s3 + $0x18] sm:$0xf]
  %v609 = vld [vmem:[%s3 + $0x1c] sm:$0xf]
  %v610 = vld [vmem:[%s3 + $0x20] sm:$0xf]
  %v611 = vld [vmem:[%s3 + $0x24] sm:$0xf]
  %v612 = vld [vmem:[%s3 + $0x28] sm:$0xf]
  %v613 = vld [vmem:[%s3 + $0x2c] sm:$0xf]
  %v614 = vld [vmem:[%s3 + $0x30] sm:$0xf]
  %v615 = vld [vmem:[%s3 + $0x34] sm:$0xf]
  %v616 = vld [vmem:[%s3 + $0x38] sm:$0xf]
  %v617 = vld [vmem:[%s3 + $0x3c] sm:$0xf]
  %v618 = vld [vmem:[%s4] sm:$0x1]
  %v620 = vlaneseq
  %v621 = vshrl.u32 %v620, 7
  %v622 = vsub.s32 0, %v621
  %v623 = vrot.slane %v618, %v622
  %v641 = vunpack.c.l.b16 %v586
  %v642 = vunpack.c.l.b16 %v587
  %v643 = vunpack.c.l.b16 %v588
  %v644 = vunpack.c.l.b16 %v589
  %v645 = vunpack.c.l.b16 %v590
  %v646 = vunpack.c.l.b16 %v591
  %v647 = vunpack.c.l.b16 %v592
  %v648 = vunpack.c.l.b16 %v593
  %v649 = vunpack.c.l.b16 %v594
  %v650 = vunpack.c.l.b16 %v595
  %v651 = vunpack.c.l.b16 %v596
  %v652 = vunpack.c.l.b16 %v597
  %v653 = vunpack.c.l.b16 %v598
  %v654 = vunpack.c.l.b16 %v599
  %v655 = vunpack.c.l.b16 %v600
  %v656 = vunpack.c.l.b16 %v601
  %v657 = vpack.c.b16 %v642, %v641
  %v658 = vpack.c.b16 %v644, %v643
  %v659 = vpack.c.b16 %v646, %v645
  %v660 = vpack.c.b16 %v648, %v647
  %v661 = vpack.c.b16 %v650, %v649
  %v662 = vpack.c.b16 %v652, %v651
  %v663 = vpack.c.b16 %v654, %v653
  %v664 = vpack.c.b16 %v656, %v655
  %v689 = vunpack.c.l.b16 %v602
  %v690 = vunpack.c.l.b16 %v603
  %v691 = vunpack.c.l.b16 %v604
  %v692 = vunpack.c.l.b16 %v605
  %v693 = vunpack.c.l.b16 %v606
  %v694 = vunpack.c.l.b16 %v607
  %v695 = vunpack.c.l.b16 %v608
  %v696 = vunpack.c.l.b16 %v609
  %v697 = vunpack.c.l.b16 %v610
  %v698 = vunpack.c.l.b16 %v611
  %v699 = vunpack.c.l.b16 %v612
  %v700 = vunpack.c.l.b16 %v613
  %v701 = vunpack.c.l.b16 %v614
  %v702 = vunpack.c.l.b16 %v615
  %v703 = vunpack.c.l.b16 %v616
  %v704 = vunpack.c.l.b16 %v617
  %v705 = vpack.c.b16 %v690, %v689
  %v706 = vpack.c.b16 %v692, %v691
  %v707 = vpack.c.b16 %v694, %v693
  %v708 = vpack.c.b16 %v696, %v695
  %v709 = vpack.c.b16 %v698, %v697
  %v710 = vpack.c.b16 %v700, %v699
  %v711 = vpack.c.b16 %v702, %v701
  %v712 = vpack.c.b16 %v704, %v703
  %721 = vmatprep.subr.bf16.mxu0 0
  %722 = vmatpush1.bf16.msra.mxu0 %v705
  %723 = vmatprep.subr.bf16.mxu0 0
  %724 = vmatpush1.bf16.msra.mxu0 %v706
  %725 = vmatprep.subr.bf16.mxu0 0
  %726 = vmatpush1.bf16.msra.mxu0 %v707
  %727 = vmatprep.subr.bf16.mxu0 0
  %728 = vmatpush1.bf16.msra.mxu0 %v708
  %729 = vmatprep.subr.bf16.mxu0 0
  %730 = vmatpush1.bf16.msra.mxu0 %v709
  %731 = vmatprep.subr.bf16.mxu0 0
  %732 = vmatpush1.bf16.msra.mxu0 %v710
  %733 = vmatprep.subr.bf16.mxu0 0
  %734 = vmatpush1.bf16.msra.mxu0 %v711
  %735 = vmatprep.subr.bf16.mxu0 0
  %736 = vmatpush1.bf16.msra.mxu0 %v712
  %737 = vmatprep.subr.bf16.mxu0 0
  %738 = vmatpush1.bf16.msra.mxu0 0
  %739 = vmatprep.subr.bf16.mxu0 0
  %740 = vmatpush1.bf16.msra.mxu0 0
  %741 = vmatprep.subr.bf16.mxu0 0
  %742 = vmatpush1.bf16.msra.mxu0 0
  %743 = vmatprep.subr.bf16.mxu0 0
  %744 = vmatpush1.bf16.msra.mxu0 0
  %745 = vmatprep.subr.bf16.mxu0 0
  %746 = vmatpush1.bf16.msra.mxu0 0
  %747 = vmatprep.subr.bf16.mxu0 0
  %748 = vmatpush1.bf16.msra.mxu0 0
  %749 = vmatprep.subr.bf16.mxu0 0
  %750 = vmatpush1.bf16.msra.mxu0 0
  %751 = vmatprep.subr.bf16.mxu0 0
  %752 = vmatpush1.bf16.msra.mxu0 0
  %753 = vmatprep.mubr.bf16.mxu0 0
  %754 = vmatmul.mubr.bf16.gmra.mrb[0].mxu0 %v657
  %v755 = vpop.f32.mrb[0].mxu0
  %v756 = vadd.f32 %v623, %v755
  %v757 = vpop.f32.mrb[0].mxu0
  %v758 = vpop.f32.mrb[0].mxu0
  %v759 = vadd.f32 %v623, %v758
  %v760 = vpop.f32.mrb[0].mxu0
  %761 = vmatprep.mubr.bf16.mxu0 0
  %762 = vmatmul.mubr.bf16.gmra.mrb[0].mxu0 %v658
  %v763 = vpop.f32.mrb[0].mxu0
  %v764 = vadd.f32 %v623, %v763
  %v765 = vpop.f32.mrb[0].mxu0
  %v766 = vpop.f32.mrb[0].mxu0
  %v767 = vadd.f32 %v623, %v766
  %v768 = vpop.f32.mrb[0].mxu0
  %769 = vmatprep.mubr.bf16.mxu0 0
  %770 = vmatmul.mubr.bf16.gmra.mrb[0].mxu0 %v659
  %v771 = vpop.f32.mrb[0].mxu0
  %v772 = vadd.f32 %v623, %v771
  %v773 = vpop.f32.mrb[0].mxu0
  %v774 = vpop.f32.mrb[0].mxu0
  %v775 = vadd.f32 %v623, %v774
  %v776 = vpop.f32.mrb[0].mxu0
  %777 = vmatprep.mubr.bf16.mxu0 0
  %778 = vmatmul.mubr.bf16.gmra.mrb[0].mxu0 %v660
  %v779 = vpop.f32.mrb[0].mxu0
  %v780 = vadd.f32 %v623, %v779
  %v781 = vpop.f32.mrb[0].mxu0
  %v782 = vpop.f32.mrb[0].mxu0
  %v783 = vadd.f32 %v623, %v782
  %v784 = vpop.f32.mrb[0].mxu0
  %785 = vmatprep.mubr.bf16.mxu0 0
  %786 = vmatmul.mubr.bf16.gmra.mrb[0].mxu0 %v661
  %v787 = vpop.f32.mrb[0].mxu0
  %v788 = vadd.f32 %v623, %v787
  %v789 = vpop.f32.mrb[0].mxu0
  %v790 = vpop.f32.mrb[0].mxu0
  %v791 = vadd.f32 %v623, %v790
  %v792 = vpop.f32.mrb[0].mxu0
  %793 = vmatprep.mubr.bf16.mxu0 0
  %794 = vmatmul.mubr.bf16.gmra.mrb[0].mxu0 %v662
  %v795 = vpop.f32.mrb[0].mxu0
  %v796 = vadd.f32 %v623, %v795
  %v797 = vpop.f32.mrb[0].mxu0
  %v798 = vpop.f32.mrb[0].mxu0
  %v799 = vadd.f32 %v623, %v798
  %v800 = vpop.f32.mrb[0].mxu0
  %801 = vmatprep.mubr.bf16.mxu0 0
  %802 = vmatmul.mubr.bf16.gmra.mrb[0].mxu0 %v663
  %v803 = vpop.f32.mrb[0].mxu0
  %v804 = vadd.f32 %v623, %v803
  %v805 = vpop.f32.mrb[0].mxu0
  %v806 = vpop.f32.mrb[0].mxu0
  %v807 = vadd.f32 %v623, %v806
  %v808 = vpop.f32.mrb[0].mxu0
  %809 = vmatprep.mubr.bf16.mxu0 0
  %810 = vmatmul.mubr.bf16.gmra.mrb[0].mxu0 %v664
  %v811 = vpop.f32.mrb[0].mxu0
  %v812 = vadd.f32 %v623, %v811
  %v813 = vpop.f32.mrb[0].mxu0
  %v814 = vpop.f32.mrb[0].mxu0
  %v815 = vadd.f32 %v623, %v814
  %v816 = vpop.f32.mrb[0].mxu0
  %817 = vdwg.mxu0
  %v818 = vpack.c.bf16 %v759, %v756
  %v819 = vpack.c.bf16 %v767, %v764
  %v820 = vpack.c.bf16 %v775, %v772
  %v821 = vpack.c.bf16 %v783, %v780
  %v822 = vpack.c.bf16 %v791, %v788
  %v823 = vpack.c.bf16 %v799, %v796
  %v824 = vpack.c.bf16 %v807, %v804
  %v825 = vpack.c.bf16 %v815, %v812
  %v834 = vunpack.c.l.b16 %v818
  %v835 = vunpack.c.h.b16 %v818
  %v836 = vunpack.c.l.b16 %v819
  %v837 = vunpack.c.h.b16 %v819
  %v838 = vunpack.c.l.b16 %v820
  %v839 = vunpack.c.h.b16 %v820
  %v840 = vunpack.c.l.b16 %v821
  %v841 = vunpack.c.h.b16 %v821
  %v842 = vunpack.c.l.b16 %v822
  %v843 = vunpack.c.h.b16 %v822
  %v844 = vunpack.c.l.b16 %v823
  %v845 = vunpack.c.h.b16 %v823
  %v846 = vunpack.c.l.b16 %v824
  %v847 = vunpack.c.h.b16 %v824
  %v848 = vunpack.c.l.b16 %v825
  %v849 = vunpack.c.h.b16 %v825
  %v850 = vpack.c.b16 %v834, %v834
  %v851 = vpack.c.b16 %v835, %v835
  %v852 = vpack.c.b16 %v836, %v836
  %v853 = vpack.c.b16 %v837, %v837
  %v854 = vpack.c.b16 %v838, %v838
  %v855 = vpack.c.b16 %v839, %v839
  %v856 = vpack.c.b16 %v840, %v840
  %v857 = vpack.c.b16 %v841, %v841
  %v858 = vpack.c.b16 %v842, %v842
  %v859 = vpack.c.b16 %v843, %v843
  %v860 = vpack.c.b16 %v844, %v844
  %v861 = vpack.c.b16 %v845, %v845
  %v862 = vpack.c.b16 %v846, %v846
  %v863 = vpack.c.b16 %v847, %v847
  %v864 = vpack.c.b16 %v848, %v848
  %v865 = vpack.c.b16 %v849, %v849
  %882 = vst [vmem:[%s5] sm:$0xf] %v850
  %883 = vst [vmem:[%s5 + $0x4] sm:$0xf] %v851
  %884 = vst [vmem:[%s5 + $0x8] sm:$0xf] %v852
  %885 = vst [vmem:[%s5 + $0xc] sm:$0xf] %v853
  %886 = vst [vmem:[%s5 + $0x10] sm:$0xf] %v854
  %887 = vst [vmem:[%s5 + $0x14] sm:$0xf] %v855
  %888 = vst [vmem:[%s5 + $0x18] sm:$0xf] %v856
  %889 = vst [vmem:[%s5 + $0x1c] sm:$0xf] %v857
  %890 = vst [vmem:[%s5 + $0x20] sm:$0xf] %v858
  %891 = vst [vmem:[%s5 + $0x24] sm:$0xf] %v859
  %892 = vst [vmem:[%s5 + $0x28] sm:$0xf] %v860
  %893 = vst [vmem:[%s5 + $0x2c] sm:$0xf] %v861
  %894 = vst [vmem:[%s5 + $0x30] sm:$0xf] %v862
  %895 = vst [vmem:[%s5 + $0x34] sm:$0xf] %v863
  %896 = vst [vmem:[%s5 + $0x38] sm:$0xf] %v864
  %897 = vst [vmem:[%s5 + $0x3c] sm:$0xf] %v865
  // Predicated region
  $region26: #{_lambda_.5} parent=0 // pred_check
    _
  $region27: #{_lambda_.5} parent=0 // pred_check_branch
    %899 = sbr.rel (0) target = $region29
  $region28: #{_lambda_.5} parent=0 // pred_region
    _
  $region29: #{_lambda_.5} parent=0 // pred_fallthru
    _
  // Predicated region
  $region30: #{_lambda_.5} parent=0 // pred_check
    _
  $region31: #{_lambda_.5} parent=0 // pred_check_branch
    %901 = sbr.rel (0) target = $region33
  $region32: #{_lambda_.5} parent=0 // pred_region
    _
  $region33: #{_lambda_.5} parent=0 // pred_fallthru
    _

</llo_original>
